<compile_context>
chip_gen: v5e
topology: v5e:2x2
jax: 0.10.0
libtpu: 0.0.40
codegen_flags: <defaults>
</compile_context>

<pallas_src>
import functools

import jax
import jax.numpy as jnp
from jax.experimental import pallas as pl
from jax.experimental.pallas import tpu as pltpu


_VMEM = pl.BlockSpec(memory_space=pltpu.MemorySpace.VMEM)


# ----------------------------------------------------------------------------
# Fused Pallas kernel: all layers, both directions, fc(cell) epilogue
# ----------------------------------------------------------------------------
def _make_encoder1_kernel(T, B, E, H, P, L, activation):
    if activation == "relu":
        act = lambda v: jnp.maximum(v, 0.0)
    elif activation == "gelu":
        # PyTorch F.gelu default is the exact erf formulation.
        act = lambda v: 0.5 * v * (1.0 + jax.lax.erf(v * 0.7071067811865476))
    else:
        raise NotImplementedError(
            f"Activation function not supported. Expects 'relu' or 'gelu'. Got {activation}")

    TB = T * B

    def kernel(*refs):
        # ---- unpack refs (inputs, outputs, scratch) -------------------------
        mask_ref = refs[0]                  # (T*B, H) f32  : 1.0 where t < len[b]
        x_ref = refs[1]                     # (T*B, E) bf16 : time-major flattened input
        lyr = refs[2:2 + 5 * L]             # per layer: w_in, b_in, w_rec_f, w_rec_b, w_out
        fc_w_ref = refs[2 + 5 * L]          # (H, P)  bf16
        fc_b_ref = refs[3 + 5 * L]          # (1, P)  f32
        out_ref = refs[4 + 5 * L]           # (T*B, 2P) f32  padded encoder outputs (time-major flat)
        hid_ref = refs[5 + 5 * L]           # (L, B, 2P) f32 final hidden states
        cell_ref = refs[6 + 5 * L]          # (L, B, 2P) f32 fc(cell) states
        xw_ref = refs[7 + 5 * L]            # (T*B, 8H) f32 scratch : hoisted fwd|bwd x-projection
        hst_ref = refs[8 + 5 * L]           # ((T+1)*B, 2H) f32 scratch : per-step hfull (+ finals)
        buf_ref = refs[9 + 5 * L]           # (T*B, 2P) bf16 scratch : inter-layer activations

        fc_w = fc_w_ref[...]
        fc_b = fc_b_ref[...]

        def lstm_step(gates, c_prev):
            # gates columns are reordered to [i, f, o, g] at weight-prep time:
            # one sigmoid over 3H lanes + one tanh over H lanes (EUP trim).
            sig = jax.nn.sigmoid(gates[:, 0:3 * H])
            g_g = jnp.tanh(gates[:, 3 * H:4 * H])
            i_g = sig[:, 0:H]
            f_g = sig[:, H:2 * H]
            o_g = sig[:, 2 * H:3 * H]
            c_new = f_g * c_prev + i_g * g_g           # (B, H)
            h_new = o_g * jnp.tanh(c_new)              # (B, H)  hfull (pre-projection)
            return h_new, c_new

        for l in range(L):
            w_in_ref, b_in_ref, w_rf_ref, w_rb_ref, w_out_ref = lyr[5 * l:5 * (l + 1)]
            src_ref = x_ref if l == 0 else buf_ref
            last = (l == L - 1)

            # --- (1) hoisted, direction-fused input projection ----------------
            # ONE (T*B, D_in) x (D_in, 8H) matmul (256-lane output), bias folded in.
            xw_ref[...] = jnp.dot(src_ref[...], w_in_ref[...],
                                  preferred_element_type=jnp.float32) + b_in_ref[...]

            w_rf = w_rf_ref[...]            # (H, 4H) bf16 : W_hr folded into W_hh (fwd)
            w_rb = w_rb_ref[...]            # (H, 4H) bf16 : W_hr folded into W_hh (bwd)

            h_f = jnp.zeros((B, H), jnp.float32)   # hfull_f = o*tanh(c)  (recurrent carry)
            c_f = jnp.zeros((B, H), jnp.float32)
            h_b = jnp.zeros((B, H), jnp.float32)
            c_b = jnp.zeros((B, H), jnp.float32)

            # --- (2) recurrence: fully unrolled (T static), one matmul per dir per step
            for s in range(T):
                tf = s
                tb = T - 1 - s

                # forward direction, timestep tf
                g_f = xw_ref[tf * B:(tf + 1) * B, 0:4 * H] + jnp.dot(
                    h_f.astype(jnp.bfloat16), w_rf, preferred_element_type=jnp.float32)
                hf_new, cf_new = lstm_step(g_f, c_f)
                m_f = mask_ref[tf * B:(tf + 1) * B, :]          # (B, H) f32, precomputed
                h_f = h_f + m_f * (hf_new - h_f)                # freeze past length
                c_f = c_f + m_f * (cf_new - c_f)
                hst_ref[tf * B:(tf + 1) * B, 0:H] = hf_new      # off-critical-path store

                # backward direction, timestep tb
                g_b = xw_ref[tb * B:(tb + 1) * B, 4 * H:8 * H] + jnp.dot(
                    h_b.astype(jnp.bfloat16), w_rb, preferred_element_type=jnp.float32)
                hb_new, cb_new = lstm_step(g_b, c_b)
                m_b = mask_ref[tb * B:(tb + 1) * B, :]
                h_b = h_b + m_b * (hb_new - h_b)
                c_b = c_b + m_b * (cb_new - c_b)
                hst_ref[tb * B:(tb + 1) * B, H:2 * H] = hb_new

            # frozen final hfull states go into the extra row block so the single
            # batched output projection also produces the decoder-init hidden.
            hst_ref[TB:(T + 1) * B, 0:H] = h_f
            hst_ref[TB:(T + 1) * B, H:2 * H] = h_b

            # --- (3) batched output projection + ONE masked store per layer ---
            proj = jnp.dot(hst_ref[...].astype(jnp.bfloat16), w_out_ref[...],
                           preferred_element_type=jnp.float32)      # ((T+1)*B, 2P)
            out_l = proj[0:TB, :] * mask_ref[:, 0:1]                 # pad positions -> 0

            if last:
                out_ref[...] = out_l
            else:
                buf_ref[...] = out_l.astype(jnp.bfloat16)            # bf16 inter-layer acts

            hid_ref[l] = proj[TB:TB + B, :]                          # [h_f_final | h_b_final]

            # --- (4) fused fc(cell) + activation epilogue ----------------------
            cell_ref[l, :, 0:P] = act(
                jnp.dot(c_f.astype(jnp.bfloat16), fc_w,
                        preferred_element_type=jnp.float32) + fc_b)
            cell_ref[l, :, P:2 * P] = act(
                jnp.dot(c_b.astype(jnp.bfloat16), fc_w,
                        preferred_element_type=jnp.float32) + fc_b)

    return kernel


# ----------------------------------------------------------------------------
# One-time weight preparation (cached; not re-done per forward call)
# ----------------------------------------------------------------------------
def prepare_encoder1_weights(params, *, num_layers):
    """Transpose, gate-reorder (i,f,g,o -> i,f,o,g), fold W_hr into W_hh, fuse
    fwd|bwd input weights to 8H output lanes, build block-diag output projection,
    and cast to bf16 (folds computed in f32 first)."""
    p0 = params["rnn"][(0, "fwd")]
    P, H = p0["w_hr"].shape
    perm = jnp.concatenate([jnp.arange(0, H), jnp.arange(H, 2 * H),
                            jnp.arange(3 * H, 4 * H), jnp.arange(2 * H, 3 * H)])
    layers = []
    for l in range(num_layers):
        per_dir = []
        for d in ("fwd", "bwd"):
            p = params["rnn"][(l, d)]
            wih_t = p["w_ih"].T[:, perm]                       # (D_in, 4H) reordered
            bias = (p["b_ih"] + p["b_hh"])[perm]               # (4H,)
            whr_t = p["w_hr"].T                                # (H, P)
            whh_comb = (whr_t @ p["w_hh"].T)[:, perm]          # (H, 4H) f32 fold
            per_dir.append((wih_t, bias, whh_comb, whr_t))
        (wih_f, b_f, comb_f, whr_f), (wih_b, b_b, comb_b, whr_b) = per_dir
        w_out = jnp.zeros((2 * H, 2 * P), jnp.float32)
        w_out = w_out.at[0:H, 0:P].set(whr_f).at[H:2 * H, P:2 * P].set(whr_b)
        layers.append({
            "w_in": jnp.concatenate([wih_f, wih_b], axis=1).astype(jnp.bfloat16),   # (D_in, 8H)
            "b_in": jnp.concatenate([b_f, b_b]).reshape(1, 8 * H).astype(jnp.float32),
            "w_rec_f": comb_f.astype(jnp.bfloat16),                                  # (H, 4H)
            "w_rec_b": comb_b.astype(jnp.bfloat16),                                  # (H, 4H)
            "w_out": w_out.astype(jnp.bfloat16),                                     # (2H, 2P)
        })
    return {
        "layers": layers,
        "fc_w": params["fc_w"].T.astype(jnp.bfloat16),            # (H, P)
        "fc_b": params["fc_b"].reshape(1, P).astype(jnp.float32),  # (1, P)
    }


# ----------------------------------------------------------------------------
# Encoder1 forward (thin wrapper — a single pallas_call)
# ----------------------------------------------------------------------------
def encoder1_forward(x_bte, lengths, prep, *, num_layers, decoder_hidden_dim,
                     activation="relu"):
    """Equivalent of Encoder1.forward on (padded input, lengths) instead of PackedSequence."""
    B, T, E = x_bte.shape
    P = decoder_hidden_dim // 2                         # proj_size (bidirectional)
    H = prep["layers"][0]["w_rec_f"].shape[0]           # LSTM hidden size
    L = num_layers
    TB = T * B

    # time-major flattened bf16 input: row t*B + b  <->  x[b, t]
    x_flat = jnp.swapaxes(x_bte, 0, 1).reshape(TB, E).astype(jnp.bfloat16)
    # precomputed validity mask (1.0 where t < len[b]), H lanes wide so the kernel
    # never re-broadcasts per step.
    t_idx = jnp.arange(T, dtype=jnp.int32)[:, None]                           # (T, 1)
    valid = (t_idx < lengths.astype(jnp.int32)[None, :]).astype(jnp.float32)  # (T, B)
    mask_flat = jnp.broadcast_to(valid.reshape(TB, 1), (TB, H))               # (T*B, H)

    args = [mask_flat, x_flat]
    for l in range(L):
        lp = prep["layers"][l]
        args += [lp["w_in"], lp["b_in"], lp["w_rec_f"], lp["w_rec_b"], lp["w_out"]]
    args += [prep["fc_w"], prep["fc_b"]]

    kernel = _make_encoder1_kernel(T, B, E, H, P, L, activation)
    out_flat, hidden, cell = pl.pallas_call(
        kernel,
        out_shape=(
            jax.ShapeDtypeStruct((TB, 2 * P), jnp.float32),       # padded outputs (time-major flat)
            jax.ShapeDtypeStruct((L, B, 2 * P), jnp.float32),     # hidden for decoder init
            jax.ShapeDtypeStruct((L, B, 2 * P), jnp.float32),     # fc(cell) for decoder init
        ),
        in_specs=[_VMEM] * len(args),
        out_specs=(_VMEM, _VMEM, _VMEM),
        scratch_shapes=[
            pltpu.VMEM((TB, 8 * H), jnp.float32),          # hoisted fwd|bwd x-projection
            pltpu.VMEM(((T + 1) * B, 2 * H), jnp.float32),  # per-step hfull + frozen finals
            pltpu.VMEM((TB, 2 * P), jnp.bfloat16),          # inter-layer activations (bf16)
        ],
        compiler_params=pltpu.CompilerParams(vmem_limit_bytes=32 * 1024 * 1024),
    )(*args)

    # single cheap layout op back to batch-first (B, T, 2P)
    enc_out = out_flat.reshape(T, B, 2 * P).swapaxes(0, 1)
    return ((enc_out, lengths), (hidden, cell))


# ----------------------------------------------------------------------------
# Deterministic parameter init (PyTorch layout: uniform(-1/sqrt(H), 1/sqrt(H)))
# ----------------------------------------------------------------------------
def init_params(key, embedding_dim, hidden_dim, num_layers, proj_size):
    k = 1.0 / jnp.sqrt(hidden_dim)
    params = {"rnn": {}}
    for l in range(num_layers):
        d_in = embedding_dim if l == 0 else 2 * proj_size
        for direction in ("fwd", "bwd"):
            key, k1, k2, k3, k4, k5 = jax.random.split(key, 6)
            params["rnn"][(l, direction)] = {
                "w_ih": jax.random.uniform(k1, (4 * hidden_dim, d_in), jnp.float32, -k, k),
                "w_hh": jax.random.uniform(k2, (4 * hidden_dim, proj_size), jnp.float32, -k, k),
                "b_ih": jax.random.uniform(k3, (4 * hidden_dim,), jnp.float32, -k, k),
                "b_hh": jax.random.uniform(k4, (4 * hidden_dim,), jnp.float32, -k, k),
                "w_hr": jax.random.uniform(k5, (proj_size, hidden_dim), jnp.float32, -k, k),
            }
    key, kf1, kf2 = jax.random.split(key, 3)
    params["fc_w"] = jax.random.uniform(kf1, (proj_size, hidden_dim), jnp.float32, -k, k)
    params["fc_b"] = jax.random.uniform(kf2, (proj_size,), jnp.float32, -k, k)
    return params


# ----------------------------------------------------------------------------
# Demo
# ----------------------------------------------------------------------------
if __name__ == "__main__":
    B, T = 2, 8
    EMBEDDING_DIM = 32
    HIDDEN_DIM = 32
    NUM_LAYERS = 2
    DECODER_HIDDEN_DIM = 32          # bidirectional -> proj_size = 16
    PROJ = DECODER_HIDDEN_DIM // 2

    key = jax.random.PRNGKey(0)
    key, kx = jax.random.split(key)
    x = jax.random.normal(kx, (B, T, EMBEDDING_DIM), jnp.float32)   # embedded inputs
    lengths = jnp.array([8, 5], dtype=jnp.int32)                    # packed-seq lengths

    params = init_params(key, EMBEDDING_DIM, HIDDEN_DIM, NUM_LAYERS, PROJ)
    prep = prepare_encoder1_weights(params, num_layers=NUM_LAYERS)  # one-time weight prep

    fwd = jax.jit(functools.partial(encoder1_forward,
                                    num_layers=NUM_LAYERS,
                                    decoder_hidden_dim=DECODER_HIDDEN_DIM,
                                    activation="relu"))
    (enc_out, seq_lens), (hidden, cell) = fwd(x, lengths, prep)
    jax.block_until_ready((enc_out, seq_lens, hidden, cell))

    assert enc_out.shape == (B, T, DECODER_HIDDEN_DIM)
    assert hidden.shape == (NUM_LAYERS, B, DECODER_HIDDEN_DIM)
    assert cell.shape == (NUM_LAYERS, B, DECODER_HIDDEN_DIM)
    # packed-sequence padding semantics: positions past each length are exactly 0
    assert bool(jnp.all(enc_out[1, int(lengths[1]):, :] == 0.0))
    assert bool(jnp.all(jnp.isfinite(enc_out)))
    assert bool(jnp.all(jnp.isfinite(hidden)))
    assert bool(jnp.all(jnp.isfinite(cell)))
    print("KERNEL_OK")
</pallas_src>

<mosaic_0001>
module attributes {stable_mosaic.version = 11 : i64} {
  func.func @kernel(%arg0: memref<16x32xf32, #tpu.memory_space<vmem>>, %arg1: memref<16x32xbf16, #tpu.memory_space<vmem>>, %arg2: memref<32x256xbf16, #tpu.memory_space<vmem>>, %arg3: memref<1x256xf32, #tpu.memory_space<vmem>>, %arg4: memref<32x128xbf16, #tpu.memory_space<vmem>>, %arg5: memref<32x128xbf16, #tpu.memory_space<vmem>>, %arg6: memref<64x32xbf16, #tpu.memory_space<vmem>>, %arg7: memref<32x256xbf16, #tpu.memory_space<vmem>>, %arg8: memref<1x256xf32, #tpu.memory_space<vmem>>, %arg9: memref<32x128xbf16, #tpu.memory_space<vmem>>, %arg10: memref<32x128xbf16, #tpu.memory_space<vmem>>, %arg11: memref<64x32xbf16, #tpu.memory_space<vmem>>, %arg12: memref<32x16xbf16, #tpu.memory_space<vmem>>, %arg13: memref<1x16xf32, #tpu.memory_space<vmem>>, %arg14: memref<16x32xf32, #tpu.memory_space<vmem>>, %arg15: memref<2x2x32xf32, #tpu.memory_space<vmem>>, %arg16: memref<2x2x32xf32, #tpu.memory_space<vmem>>, %arg17: memref<16x256xf32, #tpu.memory_space<vmem>>, %arg18: memref<18x64xf32, #tpu.memory_space<vmem>>, %arg19: memref<16x32xbf16, #tpu.memory_space<vmem>>) attributes {dimension_semantics = [], scalar_prefetch = 0 : i64, scratch_operands = 3 : i64, tpu.core_type = #tpu.core_type<tc>} {
    %c0 = arith.constant 0 : index
    %c0_0 = arith.constant 0 : index
    %0 = vector.load %arg12[%c0, %c0_0] : memref<32x16xbf16, #tpu.memory_space<vmem>>, vector<32x16xbf16>
    %c0_1 = arith.constant 0 : index
    %c0_2 = arith.constant 0 : index
    %1 = vector.load %arg13[%c0_1, %c0_2] : memref<1x16xf32, #tpu.memory_space<vmem>>, vector<1x16xf32>
    %c0_3 = arith.constant 0 : index
    %c0_4 = arith.constant 0 : index
    %2 = vector.load %arg1[%c0_3, %c0_4] : memref<16x32xbf16, #tpu.memory_space<vmem>>, vector<16x32xbf16>
    %c0_5 = arith.constant 0 : index
    %c0_6 = arith.constant 0 : index
    %3 = vector.load %arg2[%c0_5, %c0_6] : memref<32x256xbf16, #tpu.memory_space<vmem>>, vector<32x256xbf16>
    %cst = arith.constant dense<0.000000e+00> : vector<16x256xf32>
    %4 = tpu.matmul %2, %3, %cst {dimension_numbers = #tpu.dot_dimension_numbers<[1], [0], [0], [1], [0, 0, 1, 1], [], []>} : vector<16x32xbf16>, vector<32x256xbf16>, vector<16x256xf32> -> vector<16x256xf32>
    %c0_7 = arith.constant 0 : index
    %c0_8 = arith.constant 0 : index
    %5 = vector.load %arg3[%c0_7, %c0_8] : memref<1x256xf32, #tpu.memory_space<vmem>>, vector<1x256xf32>
    %6 = vector.broadcast %5 : vector<1x256xf32> to vector<16x256xf32>
    %7 = arith.addf %4, %6 : vector<16x256xf32>
    %c0_9 = arith.constant 0 : index
    %c0_10 = arith.constant 0 : index
    %8 = vector.load %arg17[%c0_9, %c0_10] : memref<16x256xf32, #tpu.memory_space<vmem>>, vector<16x256xf32>
    tpu.vector_store %arg17[%c0_9, %c0_10], %7 {strides = array<i32>} : memref<16x256xf32, #tpu.memory_space<vmem>>, vector<16x256xf32>,
    %c0_11 = arith.constant 0 : index
    %c0_12 = arith.constant 0 : index
    %9 = vector.load %arg4[%c0_11, %c0_12] : memref<32x128xbf16, #tpu.memory_space<vmem>>, vector<32x128xbf16>
    %c0_13 = arith.constant 0 : index
    %c0_14 = arith.constant 0 : index
    %10 = vector.load %arg5[%c0_13, %c0_14] : memref<32x128xbf16, #tpu.memory_space<vmem>>, vector<32x128xbf16>
    %cst_15 = arith.constant 0.000000e+00 : f32
    %11 = vector.broadcast %cst_15 : f32 to vector<2x32xf32>
    %cst_16 = arith.constant 0.000000e+00 : f32
    %12 = vector.broadcast %cst_16 : f32 to vector<2x32xf32>
    %cst_17 = arith.constant 0.000000e+00 : f32
    %13 = vector.broadcast %cst_17 : f32 to vector<2x32xf32>
    %cst_18 = arith.constant 0.000000e+00 : f32
    %14 = vector.broadcast %cst_18 : f32 to vector<2x32xf32>
    %c0_19 = arith.constant 0 : index
    %c0_20 = arith.constant 0 : index
    %15 = vector.load %arg17[%c0_19, %c0_20] : memref<16x256xf32, #tpu.memory_space<vmem>>, vector<2x128xf32>
    %16 = arith.truncf %11 : vector<2x32xf32> to vector<2x32xbf16>
    %cst_21 = arith.constant dense<0.000000e+00> : vector<2x128xf32>
    %17 = tpu.matmul %16, %9, %cst_21 {dimension_numbers = #tpu.dot_dimension_numbers<[1], [0], [0], [1], [0, 0, 1, 1], [], []>} : vector<2x32xbf16>, vector<32x128xbf16>, vector<2x128xf32> -> vector<2x128xf32>
    %18 = arith.addf %15, %17 : vector<2x128xf32>
    %19 = vector.extract_strided_slice %18 {offsets = [0, 0], sizes = [2, 96], strides = [1, 1]} : vector<2x128xf32> to vector<2x96xf32>
    %20 = arith.negf %19 : vector<2x96xf32>
    %21 = math.exp %20 : vector<2x96xf32>
    %cst_22 = arith.constant 1.000000e+00 : f32
    %22 = vector.broadcast %cst_22 : f32 to vector<2x96xf32>
    %23 = arith.addf %22, %21 : vector<2x96xf32>
    %24 = arith.divf %22, %23 : vector<2x96xf32>
    %25 = vector.extract_strided_slice %18 {offsets = [0, 96], sizes = [2, 32], strides = [1, 1]} : vector<2x128xf32> to vector<2x32xf32>
    %26 = math.tanh %25 : vector<2x32xf32>
    %27 = vector.extract_strided_slice %24 {offsets = [0, 0], sizes = [2, 32], strides = [1, 1]} : vector<2x96xf32> to vector<2x32xf32>
    %28 = vector.extract_strided_slice %24 {offsets = [0, 32], sizes = [2, 32], strides = [1, 1]} : vector<2x96xf32> to vector<2x32xf32>
    %29 = vector.extract_strided_slice %24 {offsets = [0, 64], sizes = [2, 32], strides = [1, 1]} : vector<2x96xf32> to vector<2x32xf32>
    %30 = arith.mulf %28, %12 : vector<2x32xf32>
    %31 = arith.mulf %27, %26 : vector<2x32xf32>
    %32 = arith.addf %30, %31 : vector<2x32xf32>
    %33 = math.tanh %32 : vector<2x32xf32>
    %34 = arith.mulf %29, %33 : vector<2x32xf32>
    %c0_23 = arith.constant 0 : index
    %c0_24 = arith.constant 0 : index
    %35 = vector.load %arg0[%c0_23, %c0_24] : memref<16x32xf32, #tpu.memory_space<vmem>>, vector<2x32xf32>
    %36 = arith.subf %34, %11 : vector<2x32xf32>
    %37 = arith.mulf %35, %36 : vector<2x32xf32>
    %38 = arith.addf %11, %37 : vector<2x32xf32>
    %39 = arith.subf %32, %12 : vector<2x32xf32>
    %40 = arith.mulf %35, %39 : vector<2x32xf32>
    %41 = arith.addf %12, %40 : vector<2x32xf32>
    %c0_25 = arith.constant 0 : index
    %c0_26 = arith.constant 0 : index
    %42 = vector.load %arg18[%c0_25, %c0_26] : memref<18x64xf32, #tpu.memory_space<vmem>>, vector<2x32xf32>
    tpu.vector_store %arg18[%c0_25, %c0_26], %34 {strides = array<i32>} : memref<18x64xf32, #tpu.memory_space<vmem>>, vector<2x32xf32>,
    %c14 = arith.constant 14 : index
    %c128 = arith.constant 128 : index
    %43 = vector.load %arg17[%c14, %c128] : memref<16x256xf32, #tpu.memory_space<vmem>>, vector<2x128xf32>
    %44 = arith.truncf %13 : vector<2x32xf32> to vector<2x32xbf16>
    %cst_27 = arith.constant dense<0.000000e+00> : vector<2x128xf32>
    %45 = tpu.matmul %44, %10, %cst_27 {dimension_numbers = #tpu.dot_dimension_numbers<[1], [0], [0], [1], [0, 0, 1, 1], [], []>} : vector<2x32xbf16>, vector<32x128xbf16>, vector<2x128xf32> -> vector<2x128xf32>
    %46 = arith.addf %43, %45 : vector<2x128xf32>
    %47 = vector.extract_strided_slice %46 {offsets = [0, 0], sizes = [2, 96], strides = [1, 1]} : vector<2x128xf32> to vector<2x96xf32>
    %48 = arith.negf %47 : vector<2x96xf32>
    %49 = math.exp %48 : vector<2x96xf32>
    %cst_28 = arith.constant 1.000000e+00 : f32
    %50 = vector.broadcast %cst_28 : f32 to vector<2x96xf32>
    %51 = arith.addf %50, %49 : vector<2x96xf32>
    %52 = arith.divf %50, %51 : vector<2x96xf32>
    %53 = vector.extract_strided_slice %46 {offsets = [0, 96], sizes = [2, 32], strides = [1, 1]} : vector<2x128xf32> to vector<2x32xf32>
    %54 = math.tanh %53 : vector<2x32xf32>
    %55 = vector.extract_strided_slice %52 {offsets = [0, 0], sizes = [2, 32], strides = [1, 1]} : vector<2x96xf32> to vector<2x32xf32>
    %56 = vector.extract_strided_slice %52 {offsets = [0, 32], sizes = [2, 32], strides = [1, 1]} : vector<2x96xf32> to vector<2x32xf32>
    %57 = vector.extract_strided_slice %52 {offsets = [0, 64], sizes = [2, 32], strides = [1, 1]} : vector<2x96xf32> to vector<2x32xf32>
    %58 = arith.mulf %56, %14 : vector<2x32xf32>
    %59 = arith.mulf %55, %54 : vector<2x32xf32>
    %60 = arith.addf %58, %59 : vector<2x32xf32>
    %61 = math.tanh %60 : vector<2x32xf32>
    %62 = arith.mulf %57, %61 : vector<2x32xf32>
    %c14_29 = arith.constant 14 : index
    %c0_30 = arith.constant 0 : index
    %63 = vector.load %arg0[%c14_29, %c0_30] : memref<16x32xf32, #tpu.memory_space<vmem>>, vector<2x32xf32>
    %64 = arith.subf %62, %13 : vector<2x32xf32>
    %65 = arith.mulf %63, %64 : vector<2x32xf32>
    %66 = arith.addf %13, %65 : vector<2x32xf32>
    %67 = arith.subf %60, %14 : vector<2x32xf32>
    %68 = arith.mulf %63, %67 : vector<2x32xf32>
    %69 = arith.addf %14, %68 : vector<2x32xf32>
    %c14_31 = arith.constant 14 : index
    %c32 = arith.constant 32 : index
    %70 = vector.load %arg18[%c14_31, %c32] : memref<18x64xf32, #tpu.memory_space<vmem>>, vector<2x32xf32>
    tpu.vector_store %arg18[%c14_31, %c32], %62 {strides = array<i32>} : memref<18x64xf32, #tpu.memory_space<vmem>>, vector<2x32xf32>,
    %c2 = arith.constant 2 : index
    %c0_32 = arith.constant 0 : index
    %71 = vector.load %arg17[%c2, %c0_32] : memref<16x256xf32, #tpu.memory_space<vmem>>, vector<2x128xf32>
    %72 = arith.truncf %38 : vector<2x32xf32> to vector<2x32xbf16>
    %cst_33 = arith.constant dense<0.000000e+00> : vector<2x128xf32>
    %73 = tpu.matmul %72, %9, %cst_33 {dimension_numbers = #tpu.dot_dimension_numbers<[1], [0], [0], [1], [0, 0, 1, 1], [], []>} : vector<2x32xbf16>, vector<32x128xbf16>, vector<2x128xf32> -> vector<2x128xf32>
    %74 = arith.addf %71, %73 : vector<2x128xf32>
    %75 = vector.extract_strided_slice %74 {offsets = [0, 0], sizes = [2, 96], strides = [1, 1]} : vector<2x128xf32> to vector<2x96xf32>
    %76 = arith.negf %75 : vector<2x96xf32>
    %77 = math.exp %76 : vector<2x96xf32>
    %cst_34 = arith.constant 1.000000e+00 : f32
    %78 = vector.broadcast %cst_34 : f32 to vector<2x96xf32>
    %79 = arith.addf %78, %77 : vector<2x96xf32>
    %80 = arith.divf %78, %79 : vector<2x96xf32>
    %81 = vector.extract_strided_slice %74 {offsets = [0, 96], sizes = [2, 32], strides = [1, 1]} : vector<2x128xf32> to vector<2x32xf32>
    %82 = math.tanh %81 : vector<2x32xf32>
    %83 = vector.extract_strided_slice %80 {offsets = [0, 0], sizes = [2, 32], strides = [1, 1]} : vector<2x96xf32> to vector<2x32xf32>
    %84 = vector.extract_strided_slice %80 {offsets = [0, 32], sizes = [2, 32], strides = [1, 1]} : vector<2x96xf32> to vector<2x32xf32>
    %85 = vector.extract_strided_slice %80 {offsets = [0, 64], sizes = [2, 32], strides = [1, 1]} : vector<2x96xf32> to vector<2x32xf32>
    %86 = arith.mulf %84, %41 : vector<2x32xf32>
    %87 = arith.mulf %83, %82 : vector<2x32xf32>
    %88 = arith.addf %86, %87 : vector<2x32xf32>
    %89 = math.tanh %88 : vector<2x32xf32>
    %90 = arith.mulf %85, %89 : vector<2x32xf32>
    %c2_35 = arith.constant 2 : index
    %c0_36 = arith.constant 0 : index
    %91 = vector.load %arg0[%c2_35, %c0_36] : memref<16x32xf32, #tpu.memory_space<vmem>>, vector<2x32xf32>
    %92 = arith.subf %90, %38 : vector<2x32xf32>
    %93 = arith.mulf %91, %92 : vector<2x32xf32>
    %94 = arith.addf %38, %93 : vector<2x32xf32>
    %95 = arith.subf %88, %41 : vector<2x32xf32>
    %96 = arith.mulf %91, %95 : vector<2x32xf32>
    %97 = arith.addf %41, %96 : vector<2x32xf32>
    %c2_37 = arith.constant 2 : index
    %c0_38 = arith.constant 0 : index
    %98 = vector.load %arg18[%c2_37, %c0_38] : memref<18x64xf32, #tpu.memory_space<vmem>>, vector<2x32xf32>
    tpu.vector_store %arg18[%c2_37, %c0_38], %90 {strides = array<i32>} : memref<18x64xf32, #tpu.memory_space<vmem>>, vector<2x32xf32>,
    %c12 = arith.constant 12 : index
    %c128_39 = arith.constant 128 : index
    %99 = vector.load %arg17[%c12, %c128_39] : memref<16x256xf32, #tpu.memory_space<vmem>>, vector<2x128xf32>
    %100 = arith.truncf %66 : vector<2x32xf32> to vector<2x32xbf16>
    %cst_40 = arith.constant dense<0.000000e+00> : vector<2x128xf32>
    %101 = tpu.matmul %100, %10, %cst_40 {dimension_numbers = #tpu.dot_dimension_numbers<[1], [0], [0], [1], [0, 0, 1, 1], [], []>} : vector<2x32xbf16>, vector<32x128xbf16>, vector<2x128xf32> -> vector<2x128xf32>
    %102 = arith.addf %99, %101 : vector<2x128xf32>
    %103 = vector.extract_strided_slice %102 {offsets = [0, 0], sizes = [2, 96], strides = [1, 1]} : vector<2x128xf32> to vector<2x96xf32>
    %104 = arith.negf %103 : vector<2x96xf32>
    %105 = math.exp %104 : vector<2x96xf32>
    %cst_41 = arith.constant 1.000000e+00 : f32
    %106 = vector.broadcast %cst_41 : f32 to vector<2x96xf32>
    %107 = arith.addf %106, %105 : vector<2x96xf32>
    %108 = arith.divf %106, %107 : vector<2x96xf32>
    %109 = vector.extract_strided_slice %102 {offsets = [0, 96], sizes = [2, 32], strides = [1, 1]} : vector<2x128xf32> to vector<2x32xf32>
    %110 = math.tanh %109 : vector<2x32xf32>
    %111 = vector.extract_strided_slice %108 {offsets = [0, 0], sizes = [2, 32], strides = [1, 1]} : vector<2x96xf32> to vector<2x32xf32>
    %112 = vector.extract_strided_slice %108 {offsets = [0, 32], sizes = [2, 32], strides = [1, 1]} : vector<2x96xf32> to vector<2x32xf32>
    %113 = vector.extract_strided_slice %108 {offsets = [0, 64], sizes = [2, 32], strides = [1, 1]} : vector<2x96xf32> to vector<2x32xf32>
    %114 = arith.mulf %112, %69 : vector<2x32xf32>
    %115 = arith.mulf %111, %110 : vector<2x32xf32>
    %116 = arith.addf %114, %115 : vector<2x32xf32>
    %117 = math.tanh %116 : vector<2x32xf32>
    %118 = arith.mulf %113, %117 : vector<2x32xf32>
    %c12_42 = arith.constant 12 : index
    %c0_43 = arith.constant 0 : index
    %119 = vector.load %arg0[%c12_42, %c0_43] : memref<16x32xf32, #tpu.memory_space<vmem>>, vector<2x32xf32>
    %120 = arith.subf %118, %66 : vector<2x32xf32>
    %121 = arith.mulf %119, %120 : vector<2x32xf32>
    %122 = arith.addf %66, %121 : vector<2x32xf32>
    %123 = arith.subf %116, %69 : vector<2x32xf32>
    %124 = arith.mulf %119, %123 : vector<2x32xf32>
    %125 = arith.addf %69, %124 : vector<2x32xf32>
    %c12_44 = arith.constant 12 : index
    %c32_45 = arith.constant 32 : index
    %126 = vector.load %arg18[%c12_44, %c32_45] : memref<18x64xf32, #tpu.memory_space<vmem>>, vector<2x32xf32>
    tpu.vector_store %arg18[%c12_44, %c32_45], %118 {strides = array<i32>} : memref<18x64xf32, #tpu.memory_space<vmem>>, vector<2x32xf32>,
    %c4 = arith.constant 4 : index
    %c0_46 = arith.constant 0 : index
    %127 = vector.load %arg17[%c4, %c0_46] : memref<16x256xf32, #tpu.memory_space<vmem>>, vector<2x128xf32>
    %128 = arith.truncf %94 : vector<2x32xf32> to vector<2x32xbf16>
    %cst_47 = arith.constant dense<0.000000e+00> : vector<2x128xf32>
    %129 = tpu.matmul %128, %9, %cst_47 {dimension_numbers = #tpu.dot_dimension_numbers<[1], [0], [0], [1], [0, 0, 1, 1], [], []>} : vector<2x32xbf16>, vector<32x128xbf16>, vector<2x128xf32> -> vector<2x128xf32>
    %130 = arith.addf %127, %129 : vector<2x128xf32>
    %131 = vector.extract_strided_slice %130 {offsets = [0, 0], sizes = [2, 96], strides = [1, 1]} : vector<2x128xf32> to vector<2x96xf32>
    %132 = arith.negf %131 : vector<2x96xf32>
    %133 = math.exp %132 : vector<2x96xf32>
    %cst_48 = arith.constant 1.000000e+00 : f32
    %134 = vector.broadcast %cst_48 : f32 to vector<2x96xf32>
    %135 = arith.addf %134, %133 : vector<2x96xf32>
    %136 = arith.divf %134, %135 : vector<2x96xf32>
    %137 = vector.extract_strided_slice %130 {offsets = [0, 96], sizes = [2, 32], strides = [1, 1]} : vector<2x128xf32> to vector<2x32xf32>
    %138 = math.tanh %137 : vector<2x32xf32>
    %139 = vector.extract_strided_slice %136 {offsets = [0, 0], sizes = [2, 32], strides = [1, 1]} : vector<2x96xf32> to vector<2x32xf32>
    %140 = vector.extract_strided_slice %136 {offsets = [0, 32], sizes = [2, 32], strides = [1, 1]} : vector<2x96xf32> to vector<2x32xf32>
    %141 = vector.extract_strided_slice %136 {offsets = [0, 64], sizes = [2, 32], strides = [1, 1]} : vector<2x96xf32> to vector<2x32xf32>
    %142 = arith.mulf %140, %97 : vector<2x32xf32>
    %143 = arith.mulf %139, %138 : vector<2x32xf32>
    %144 = arith.addf %142, %143 : vector<2x32xf32>
    %145 = math.tanh %144 : vector<2x32xf32>
    %146 = arith.mulf %141, %145 : vector<2x32xf32>
    %c4_49 = arith.constant 4 : index
    %c0_50 = arith.constant 0 : index
    %147 = vector.load %arg0[%c4_49, %c0_50] : memref<16x32xf32, #tpu.memory_space<vmem>>, vector<2x32xf32>
    %148 = arith.subf %146, %94 : vector<2x32xf32>
    %149 = arith.mulf %147, %148 : vector<2x32xf32>
    %150 = arith.addf %94, %149 : vector<2x32xf32>
    %151 = arith.subf %144, %97 : vector<2x32xf32>
    %152 = arith.mulf %147, %151 : vector<2x32xf32>
    %153 = arith.addf %97, %152 : vector<2x32xf32>
    %c4_51 = arith.constant 4 : index
    %c0_52 = arith.constant 0 : index
    %154 = vector.load %arg18[%c4_51, %c0_52] : memref<18x64xf32, #tpu.memory_space<vmem>>, vector<2x32xf32>
    tpu.vector_store %arg18[%c4_51, %c0_52], %146 {strides = array<i32>} : memref<18x64xf32, #tpu.memory_space<vmem>>, vector<2x32xf32>,
    %c10 = arith.constant 10 : index
    %c128_53 = arith.constant 128 : index
    %155 = vector.load %arg17[%c10, %c128_53] : memref<16x256xf32, #tpu.memory_space<vmem>>, vector<2x128xf32>
    %156 = arith.truncf %122 : vector<2x32xf32> to vector<2x32xbf16>
    %cst_54 = arith.constant dense<0.000000e+00> : vector<2x128xf32>
    %157 = tpu.matmul %156, %10, %cst_54 {dimension_numbers = #tpu.dot_dimension_numbers<[1], [0], [0], [1], [0, 0, 1, 1], [], []>} : vector<2x32xbf16>, vector<32x128xbf16>, vector<2x128xf32> -> vector<2x128xf32>
    %158 = arith.addf %155, %157 : vector<2x128xf32>
    %159 = vector.extract_strided_slice %158 {offsets = [0, 0], sizes = [2, 96], strides = [1, 1]} : vector<2x128xf32> to vector<2x96xf32>
    %160 = arith.negf %159 : vector<2x96xf32>
    %161 = math.exp %160 : vector<2x96xf32>
    %cst_55 = arith.constant 1.000000e+00 : f32
    %162 = vector.broadcast %cst_55 : f32 to vector<2x96xf32>
    %163 = arith.addf %162, %161 : vector<2x96xf32>
    %164 = arith.divf %162, %163 : vector<2x96xf32>
    %165 = vector.extract_strided_slice %158 {offsets = [0, 96], sizes = [2, 32], strides = [1, 1]} : vector<2x128xf32> to vector<2x32xf32>
    %166 = math.tanh %165 : vector<2x32xf32>
    %167 = vector.extract_strided_slice %164 {offsets = [0, 0], sizes = [2, 32], strides = [1, 1]} : vector<2x96xf32> to vector<2x32xf32>
    %168 = vector.extract_strided_slice %164 {offsets = [0, 32], sizes = [2, 32], strides = [1, 1]} : vector<2x96xf32> to vector<2x32xf32>
    %169 = vector.extract_strided_slice %164 {offsets = [0, 64], sizes = [2, 32], strides = [1, 1]} : vector<2x96xf32> to vector<2x32xf32>
    %170 = arith.mulf %168, %125 : vector<2x32xf32>
    %171 = arith.mulf %167, %166 : vector<2x32xf32>
    %172 = arith.addf %170, %171 : vector<2x32xf32>
    %173 = math.tanh %172 : vector<2x32xf32>
    %174 = arith.mulf %169, %173 : vector<2x32xf32>
    %c10_56 = arith.constant 10 : index
    %c0_57 = arith.constant 0 : index
    %175 = vector.load %arg0[%c10_56, %c0_57] : memref<16x32xf32, #tpu.memory_space<vmem>>, vector<2x32xf32>
    %176 = arith.subf %174, %122 : vector<2x32xf32>
    %177 = arith.mulf %175, %176 : vector<2x32xf32>
    %178 = arith.addf %122, %177 : vector<2x32xf32>
    %179 = arith.subf %172, %125 : vector<2x32xf32>
    %180 = arith.mulf %175, %179 : vector<2x32xf32>
    %181 = arith.addf %125, %180 : vector<2x32xf32>
    %c10_58 = arith.constant 10 : index
    %c32_59 = arith.constant 32 : index
    %182 = vector.load %arg18[%c10_58, %c32_59] : memref<18x64xf32, #tpu.memory_space<vmem>>, vector<2x32xf32>
    tpu.vector_store %arg18[%c10_58, %c32_59], %174 {strides = array<i32>} : memref<18x64xf32, #tpu.memory_space<vmem>>, vector<2x32xf32>,
    %c6 = arith.constant 6 : index
    %c0_60 = arith.constant 0 : index
    %183 = vector.load %arg17[%c6, %c0_60] : memref<16x256xf32, #tpu.memory_space<vmem>>, vector<2x128xf32>
    %184 = arith.truncf %150 : vector<2x32xf32> to vector<2x32xbf16>
    %cst_61 = arith.constant dense<0.000000e+00> : vector<2x128xf32>
    %185 = tpu.matmul %184, %9, %cst_61 {dimension_numbers = #tpu.dot_dimension_numbers<[1], [0], [0], [1], [0, 0, 1, 1], [], []>} : vector<2x32xbf16>, vector<32x128xbf16>, vector<2x128xf32> -> vector<2x128xf32>
    %186 = arith.addf %183, %185 : vector<2x128xf32>
    %187 = vector.extract_strided_slice %186 {offsets = [0, 0], sizes = [2, 96], strides = [1, 1]} : vector<2x128xf32> to vector<2x96xf32>
    %188 = arith.negf %187 : vector<2x96xf32>
    %189 = math.exp %188 : vector<2x96xf32>
    %cst_62 = arith.constant 1.000000e+00 : f32
    %190 = vector.broadcast %cst_62 : f32 to vector<2x96xf32>
    %191 = arith.addf %190, %189 : vector<2x96xf32>
    %192 = arith.divf %190, %191 : vector<2x96xf32>
    %193 = vector.extract_strided_slice %186 {offsets = [0, 96], sizes = [2, 32], strides = [1, 1]} : vector<2x128xf32> to vector<2x32xf32>
    %194 = math.tanh %193 : vector<2x32xf32>
    %195 = vector.extract_strided_slice %192 {offsets = [0, 0], sizes = [2, 32], strides = [1, 1]} : vector<2x96xf32> to vector<2x32xf32>
    %196 = vector.extract_strided_slice %192 {offsets = [0, 32], sizes = [2, 32], strides = [1, 1]} : vector<2x96xf32> to vector<2x32xf32>
    %197 = vector.extract_strided_slice %192 {offsets = [0, 64], sizes = [2, 32], strides = [1, 1]} : vector<2x96xf32> to vector<2x32xf32>
    %198 = arith.mulf %196, %153 : vector<2x32xf32>
    %199 = arith.mulf %195, %194 : vector<2x32xf32>
    %200 = arith.addf %198, %199 : vector<2x32xf32>
    %201 = math.tanh %200 : vector<2x32xf32>
    %202 = arith.mulf %197, %201 : vector<2x32xf32>
    %c6_63 = arith.constant 6 : index
    %c0_64 = arith.constant 0 : index
    %203 = vector.load %arg0[%c6_63, %c0_64] : memref<16x32xf32, #tpu.memory_space<vmem>>, vector<2x32xf32>
    %204 = arith.subf %202, %150 : vector<2x32xf32>
    %205 = arith.mulf %203, %204 : vector<2x32xf32>
    %206 = arith.addf %150, %205 : vector<2x32xf32>
    %207 = arith.subf %200, %153 : vector<2x32xf32>
    %208 = arith.mulf %203, %207 : vector<2x32xf32>
    %209 = arith.addf %153, %208 : vector<2x32xf32>
    %c6_65 = arith.constant 6 : index
    %c0_66 = arith.constant 0 : index
    %210 = vector.load %arg18[%c6_65, %c0_66] : memref<18x64xf32, #tpu.memory_space<vmem>>, vector<2x32xf32>
    tpu.vector_store %arg18[%c6_65, %c0_66], %202 {strides = array<i32>} : memref<18x64xf32, #tpu.memory_space<vmem>>, vector<2x32xf32>,
    %c8 = arith.constant 8 : index
    %c128_67 = arith.constant 128 : index
    %211 = vector.load %arg17[%c8, %c128_67] : memref<16x256xf32, #tpu.memory_space<vmem>>, vector<2x128xf32>
    %212 = arith.truncf %178 : vector<2x32xf32> to vector<2x32xbf16>
    %cst_68 = arith.constant dense<0.000000e+00> : vector<2x128xf32>
    %213 = tpu.matmul %212, %10, %cst_68 {dimension_numbers = #tpu.dot_dimension_numbers<[1], [0], [0], [1], [0, 0, 1, 1], [], []>} : vector<2x32xbf16>, vector<32x128xbf16>, vector<2x128xf32> -> vector<2x128xf32>
    %214 = arith.addf %211, %213 : vector<2x128xf32>
    %215 = vector.extract_strided_slice %214 {offsets = [0, 0], sizes = [2, 96], strides = [1, 1]} : vector<2x128xf32> to vector<2x96xf32>
    %216 = arith.negf %215 : vector<2x96xf32>
    %217 = math.exp %216 : vector<2x96xf32>
    %cst_69 = arith.constant 1.000000e+00 : f32
    %218 = vector.broadcast %cst_69 : f32 to vector<2x96xf32>
    %219 = arith.addf %218, %217 : vector<2x96xf32>
    %220 = arith.divf %218, %219 : vector<2x96xf32>
    %221 = vector.extract_strided_slice %214 {offsets = [0, 96], sizes = [2, 32], strides = [1, 1]} : vector<2x128xf32> to vector<2x32xf32>
    %222 = math.tanh %221 : vector<2x32xf32>
    %223 = vector.extract_strided_slice %220 {offsets = [0, 0], sizes = [2, 32], strides = [1, 1]} : vector<2x96xf32> to vector<2x32xf32>
    %224 = vector.extract_strided_slice %220 {offsets = [0, 32], sizes = [2, 32], strides = [1, 1]} : vector<2x96xf32> to vector<2x32xf32>
    %225 = vector.extract_strided_slice %220 {offsets = [0, 64], sizes = [2, 32], strides = [1, 1]} : vector<2x96xf32> to vector<2x32xf32>
    %226 = arith.mulf %224, %181 : vector<2x32xf32>
    %227 = arith.mulf %223, %222 : vector<2x32xf32>
    %228 = arith.addf %226, %227 : vector<2x32xf32>
    %229 = math.tanh %228 : vector<2x32xf32>
    %230 = arith.mulf %225, %229 : vector<2x32xf32>
    %c8_70 = arith.constant 8 : index
    %c0_71 = arith.constant 0 : index
    %231 = vector.load %arg0[%c8_70, %c0_71] : memref<16x32xf32, #tpu.memory_space<vmem>>, vector<2x32xf32>
    %232 = arith.subf %230, %178 : vector<2x32xf32>
    %233 = arith.mulf %231, %232 : vector<2x32xf32>
    %234 = arith.addf %178, %233 : vector<2x32xf32>
    %235 = arith.subf %228, %181 : vector<2x32xf32>
    %236 = arith.mulf %231, %235 : vector<2x32xf32>
    %237 = arith.addf %181, %236 : vector<2x32xf32>
    %c8_72 = arith.constant 8 : index
    %c32_73 = arith.constant 32 : index
    %238 = vector.load %arg18[%c8_72, %c32_73] : memref<18x64xf32, #tpu.memory_space<vmem>>, vector<2x32xf32>
    tpu.vector_store %arg18[%c8_72, %c32_73], %230 {strides = array<i32>} : memref<18x64xf32, #tpu.memory_space<vmem>>, vector<2x32xf32>,
    %c8_74 = arith.constant 8 : index
    %c0_75 = arith.constant 0 : index
    %239 = vector.load %arg17[%c8_74, %c0_75] : memref<16x256xf32, #tpu.memory_space<vmem>>, vector<2x128xf32>
    %240 = arith.truncf %206 : vector<2x32xf32> to vector<2x32xbf16>
    %cst_76 = arith.constant dense<0.000000e+00> : vector<2x128xf32>
    %241 = tpu.matmul %240, %9, %cst_76 {dimension_numbers = #tpu.dot_dimension_numbers<[1], [0], [0], [1], [0, 0, 1, 1], [], []>} : vector<2x32xbf16>, vector<32x128xbf16>, vector<2x128xf32> -> vector<2x128xf32>
    %242 = arith.addf %239, %241 : vector<2x128xf32>
    %243 = vector.extract_strided_slice %242 {offsets = [0, 0], sizes = [2, 96], strides = [1, 1]} : vector<2x128xf32> to vector<2x96xf32>
    %244 = arith.negf %243 : vector<2x96xf32>
    %245 = math.exp %244 : vector<2x96xf32>
    %cst_77 = arith.constant 1.000000e+00 : f32
    %246 = vector.broadcast %cst_77 : f32 to vector<2x96xf32>
    %247 = arith.addf %246, %245 : vector<2x96xf32>
    %248 = arith.divf %246, %247 : vector<2x96xf32>
    %249 = vector.extract_strided_slice %242 {offsets = [0, 96], sizes = [2, 32], strides = [1, 1]} : vector<2x128xf32> to vector<2x32xf32>
    %250 = math.tanh %249 : vector<2x32xf32>
    %251 = vector.extract_strided_slice %248 {offsets = [0, 0], sizes = [2, 32], strides = [1, 1]} : vector<2x96xf32> to vector<2x32xf32>
    %252 = vector.extract_strided_slice %248 {offsets = [0, 32], sizes = [2, 32], strides = [1, 1]} : vector<2x96xf32> to vector<2x32xf32>
    %253 = vector.extract_strided_slice %248 {offsets = [0, 64], sizes = [2, 32], strides = [1, 1]} : vector<2x96xf32> to vector<2x32xf32>
    %254 = arith.mulf %252, %209 : vector<2x32xf32>
    %255 = arith.mulf %251, %250 : vector<2x32xf32>
    %256 = arith.addf %254, %255 : vector<2x32xf32>
    %257 = math.tanh %256 : vector<2x32xf32>
    %258 = arith.mulf %253, %257 : vector<2x32xf32>
    %c8_78 = arith.constant 8 : index
    %c0_79 = arith.constant 0 : index
    %259 = vector.load %arg0[%c8_78, %c0_79] : memref<16x32xf32, #tpu.memory_space<vmem>>, vector<2x32xf32>
    %260 = arith.subf %258, %206 : vector<2x32xf32>
    %261 = arith.mulf %259, %260 : vector<2x32xf32>
    %262 = arith.addf %206, %261 : vector<2x32xf32>
    %263 = arith.subf %256, %209 : vector<2x32xf32>
    %264 = arith.mulf %259, %263 : vector<2x32xf32>
    %265 = arith.addf %209, %264 : vector<2x32xf32>
    %c8_80 = arith.constant 8 : index
    %c0_81 = arith.constant 0 : index
    %266 = vector.load %arg18[%c8_80, %c0_81] : memref<18x64xf32, #tpu.memory_space<vmem>>, vector<2x32xf32>
    tpu.vector_store %arg18[%c8_80, %c0_81], %258 {strides = array<i32>} : memref<18x64xf32, #tpu.memory_space<vmem>>, vector<2x32xf32>,
    %c6_82 = arith.constant 6 : index
    %c128_83 = arith.constant 128 : index
    %267 = vector.load %arg17[%c6_82, %c128_83] : memref<16x256xf32, #tpu.memory_space<vmem>>, vector<2x128xf32>
    %268 = arith.truncf %234 : vector<2x32xf32> to vector<2x32xbf16>
    %cst_84 = arith.constant dense<0.000000e+00> : vector<2x128xf32>
    %269 = tpu.matmul %268, %10, %cst_84 {dimension_numbers = #tpu.dot_dimension_numbers<[1], [0], [0], [1], [0, 0, 1, 1], [], []>} : vector<2x32xbf16>, vector<32x128xbf16>, vector<2x128xf32> -> vector<2x128xf32>
    %270 = arith.addf %267, %269 : vector<2x128xf32>
    %271 = vector.extract_strided_slice %270 {offsets = [0, 0], sizes = [2, 96], strides = [1, 1]} : vector<2x128xf32> to vector<2x96xf32>
    %272 = arith.negf %271 : vector<2x96xf32>
    %273 = math.exp %272 : vector<2x96xf32>
    %cst_85 = arith.constant 1.000000e+00 : f32
    %274 = vector.broadcast %cst_85 : f32 to vector<2x96xf32>
    %275 = arith.addf %274, %273 : vector<2x96xf32>
    %276 = arith.divf %274, %275 : vector<2x96xf32>
    %277 = vector.extract_strided_slice %270 {offsets = [0, 96], sizes = [2, 32], strides = [1, 1]} : vector<2x128xf32> to vector<2x32xf32>
    %278 = math.tanh %277 : vector<2x32xf32>
    %279 = vector.extract_strided_slice %276 {offsets = [0, 0], sizes = [2, 32], strides = [1, 1]} : vector<2x96xf32> to vector<2x32xf32>
    %280 = vector.extract_strided_slice %276 {offsets = [0, 32], sizes = [2, 32], strides = [1, 1]} : vector<2x96xf32> to vector<2x32xf32>
    %281 = vector.extract_strided_slice %276 {offsets = [0, 64], sizes = [2, 32], strides = [1, 1]} : vector<2x96xf32> to vector<2x32xf32>
    %282 = arith.mulf %280, %237 : vector<2x32xf32>
    %283 = arith.mulf %279, %278 : vector<2x32xf32>
    %284 = arith.addf %282, %283 : vector<2x32xf32>
    %285 = math.tanh %284 : vector<2x32xf32>
    %286 = arith.mulf %281, %285 : vector<2x32xf32>
    %c6_86 = arith.constant 6 : index
    %c0_87 = arith.constant 0 : index
    %287 = vector.load %arg0[%c6_86, %c0_87] : memref<16x32xf32, #tpu.memory_space<vmem>>, vector<2x32xf32>
    %288 = arith.subf %286, %234 : vector<2x32xf32>
    %289 = arith.mulf %287, %288 : vector<2x32xf32>
    %290 = arith.addf %234, %289 : vector<2x32xf32>
    %291 = arith.subf %284, %237 : vector<2x32xf32>
    %292 = arith.mulf %287, %291 : vector<2x32xf32>
    %293 = arith.addf %237, %292 : vector<2x32xf32>
    %c6_88 = arith.constant 6 : index
    %c32_89 = arith.constant 32 : index
    %294 = vector.load %arg18[%c6_88, %c32_89] : memref<18x64xf32, #tpu.memory_space<vmem>>, vector<2x32xf32>
    tpu.vector_store %arg18[%c6_88, %c32_89], %286 {strides = array<i32>} : memref<18x64xf32, #tpu.memory_space<vmem>>, vector<2x32xf32>,
    %c10_90 = arith.constant 10 : index
    %c0_91 = arith.constant 0 : index
    %295 = vector.load %arg17[%c10_90, %c0_91] : memref<16x256xf32, #tpu.memory_space<vmem>>, vector<2x128xf32>
    %296 = arith.truncf %262 : vector<2x32xf32> to vector<2x32xbf16>
    %cst_92 = arith.constant dense<0.000000e+00> : vector<2x128xf32>
    %297 = tpu.matmul %296, %9, %cst_92 {dimension_numbers = #tpu.dot_dimension_numbers<[1], [0], [0], [1], [0, 0, 1, 1], [], []>} : vector<2x32xbf16>, vector<32x128xbf16>, vector<2x128xf32> -> vector<2x128xf32>
    %298 = arith.addf %295, %297 : vector<2x128xf32>
    %299 = vector.extract_strided_slice %298 {offsets = [0, 0], sizes = [2, 96], strides = [1, 1]} : vector<2x128xf32> to vector<2x96xf32>
    %300 = arith.negf %299 : vector<2x96xf32>
    %301 = math.exp %300 : vector<2x96xf32>
    %cst_93 = arith.constant 1.000000e+00 : f32
    %302 = vector.broadcast %cst_93 : f32 to vector<2x96xf32>
    %303 = arith.addf %302, %301 : vector<2x96xf32>
    %304 = arith.divf %302, %303 : vector<2x96xf32>
    %305 = vector.extract_strided_slice %298 {offsets = [0, 96], sizes = [2, 32], strides = [1, 1]} : vector<2x128xf32> to vector<2x32xf32>
    %306 = math.tanh %305 : vector<2x32xf32>
    %307 = vector.extract_strided_slice %304 {offsets = [0, 0], sizes = [2, 32], strides = [1, 1]} : vector<2x96xf32> to vector<2x32xf32>
    %308 = vector.extract_strided_slice %304 {offsets = [0, 32], sizes = [2, 32], strides = [1, 1]} : vector<2x96xf32> to vector<2x32xf32>
    %309 = vector.extract_strided_slice %304 {offsets = [0, 64], sizes = [2, 32], strides = [1, 1]} : vector<2x96xf32> to vector<2x32xf32>
    %310 = arith.mulf %308, %265 : vector<2x32xf32>
    %311 = arith.mulf %307, %306 : vector<2x32xf32>
    %312 = arith.addf %310, %311 : vector<2x32xf32>
    %313 = math.tanh %312 : vector<2x32xf32>
    %314 = arith.mulf %309, %313 : vector<2x32xf32>
    %c10_94 = arith.constant 10 : index
    %c0_95 = arith.constant 0 : index
    %315 = vector.load %arg0[%c10_94, %c0_95] : memref<16x32xf32, #tpu.memory_space<vmem>>, vector<2x32xf32>
    %316 = arith.subf %314, %262 : vector<2x32xf32>
    %317 = arith.mulf %315, %316 : vector<2x32xf32>
    %318 = arith.addf %262, %317 : vector<2x32xf32>
    %319 = arith.subf %312, %265 : vector<2x32xf32>
    %320 = arith.mulf %315, %319 : vector<2x32xf32>
    %321 = arith.addf %265, %320 : vector<2x32xf32>
    %c10_96 = arith.constant 10 : index
    %c0_97 = arith.constant 0 : index
    %322 = vector.load %arg18[%c10_96, %c0_97] : memref<18x64xf32, #tpu.memory_space<vmem>>, vector<2x32xf32>
    tpu.vector_store %arg18[%c10_96, %c0_97], %314 {strides = array<i32>} : memref<18x64xf32, #tpu.memory_space<vmem>>, vector<2x32xf32>,
    %c4_98 = arith.constant 4 : index
    %c128_99 = arith.constant 128 : index
    %323 = vector.load %arg17[%c4_98, %c128_99] : memref<16x256xf32, #tpu.memory_space<vmem>>, vector<2x128xf32>
    %324 = arith.truncf %290 : vector<2x32xf32> to vector<2x32xbf16>
    %cst_100 = arith.constant dense<0.000000e+00> : vector<2x128xf32>
    %325 = tpu.matmul %324, %10, %cst_100 {dimension_numbers = #tpu.dot_dimension_numbers<[1], [0], [0], [1], [0, 0, 1, 1], [], []>} : vector<2x32xbf16>, vector<32x128xbf16>, vector<2x128xf32> -> vector<2x128xf32>
    %326 = arith.addf %323, %325 : vector<2x128xf32>
    %327 = vector.extract_strided_slice %326 {offsets = [0, 0], sizes = [2, 96], strides = [1, 1]} : vector<2x128xf32> to vector<2x96xf32>
    %328 = arith.negf %327 : vector<2x96xf32>
    %329 = math.exp %328 : vector<2x96xf32>
    %cst_101 = arith.constant 1.000000e+00 : f32
    %330 = vector.broadcast %cst_101 : f32 to vector<2x96xf32>
    %331 = arith.addf %330, %329 : vector<2x96xf32>
    %332 = arith.divf %330, %331 : vector<2x96xf32>
    %333 = vector.extract_strided_slice %326 {offsets = [0, 96], sizes = [2, 32], strides = [1, 1]} : vector<2x128xf32> to vector<2x32xf32>
    %334 = math.tanh %333 : vector<2x32xf32>
    %335 = vector.extract_strided_slice %332 {offsets = [0, 0], sizes = [2, 32], strides = [1, 1]} : vector<2x96xf32> to vector<2x32xf32>
    %336 = vector.extract_strided_slice %332 {offsets = [0, 32], sizes = [2, 32], strides = [1, 1]} : vector<2x96xf32> to vector<2x32xf32>
    %337 = vector.extract_strided_slice %332 {offsets = [0, 64], sizes = [2, 32], strides = [1, 1]} : vector<2x96xf32> to vector<2x32xf32>
    %338 = arith.mulf %336, %293 : vector<2x32xf32>
    %339 = arith.mulf %335, %334 : vector<2x32xf32>
    %340 = arith.addf %338, %339 : vector<2x32xf32>
    %341 = math.tanh %340 : vector<2x32xf32>
    %342 = arith.mulf %337, %341 : vector<2x32xf32>
    %c4_102 = arith.constant 4 : index
    %c0_103 = arith.constant 0 : index
    %343 = vector.load %arg0[%c4_102, %c0_103] : memref<16x32xf32, #tpu.memory_space<vmem>>, vector<2x32xf32>
    %344 = arith.subf %342, %290 : vector<2x32xf32>
    %345 = arith.mulf %343, %344 : vector<2x32xf32>
    %346 = arith.addf %290, %345 : vector<2x32xf32>
    %347 = arith.subf %340, %293 : vector<2x32xf32>
    %348 = arith.mulf %343, %347 : vector<2x32xf32>
    %349 = arith.addf %293, %348 : vector<2x32xf32>
    %c4_104 = arith.constant 4 : index
    %c32_105 = arith.constant 32 : index
    %350 = vector.load %arg18[%c4_104, %c32_105] : memref<18x64xf32, #tpu.memory_space<vmem>>, vector<2x32xf32>
    tpu.vector_store %arg18[%c4_104, %c32_105], %342 {strides = array<i32>} : memref<18x64xf32, #tpu.memory_space<vmem>>, vector<2x32xf32>,
    %c12_106 = arith.constant 12 : index
    %c0_107 = arith.constant 0 : index
    %351 = vector.load %arg17[%c12_106, %c0_107] : memref<16x256xf32, #tpu.memory_space<vmem>>, vector<2x128xf32>
    %352 = arith.truncf %318 : vector<2x32xf32> to vector<2x32xbf16>
    %cst_108 = arith.constant dense<0.000000e+00> : vector<2x128xf32>
    %353 = tpu.matmul %352, %9, %cst_108 {dimension_numbers = #tpu.dot_dimension_numbers<[1], [0], [0], [1], [0, 0, 1, 1], [], []>} : vector<2x32xbf16>, vector<32x128xbf16>, vector<2x128xf32> -> vector<2x128xf32>
    %354 = arith.addf %351, %353 : vector<2x128xf32>
    %355 = vector.extract_strided_slice %354 {offsets = [0, 0], sizes = [2, 96], strides = [1, 1]} : vector<2x128xf32> to vector<2x96xf32>
    %356 = arith.negf %355 : vector<2x96xf32>
    %357 = math.exp %356 : vector<2x96xf32>
    %cst_109 = arith.constant 1.000000e+00 : f32
    %358 = vector.broadcast %cst_109 : f32 to vector<2x96xf32>
    %359 = arith.addf %358, %357 : vector<2x96xf32>
    %360 = arith.divf %358, %359 : vector<2x96xf32>
    %361 = vector.extract_strided_slice %354 {offsets = [0, 96], sizes = [2, 32], strides = [1, 1]} : vector<2x128xf32> to vector<2x32xf32>
    %362 = math.tanh %361 : vector<2x32xf32>
    %363 = vector.extract_strided_slice %360 {offsets = [0, 0], sizes = [2, 32], strides = [1, 1]} : vector<2x96xf32> to vector<2x32xf32>
    %364 = vector.extract_strided_slice %360 {offsets = [0, 32], sizes = [2, 32], strides = [1, 1]} : vector<2x96xf32> to vector<2x32xf32>
    %365 = vector.extract_strided_slice %360 {offsets = [0, 64], sizes = [2, 32], strides = [1, 1]} : vector<2x96xf32> to vector<2x32xf32>
    %366 = arith.mulf %364, %321 : vector<2x32xf32>
    %367 = arith.mulf %363, %362 : vector<2x32xf32>
    %368 = arith.addf %366, %367 : vector<2x32xf32>
    %369 = math.tanh %368 : vector<2x32xf32>
    %370 = arith.mulf %365, %369 : vector<2x32xf32>
    %c12_110 = arith.constant 12 : index
    %c0_111 = arith.constant 0 : index
    %371 = vector.load %arg0[%c12_110, %c0_111] : memref<16x32xf32, #tpu.memory_space<vmem>>, vector<2x32xf32>
    %372 = arith.subf %370, %318 : vector<2x32xf32>
    %373 = arith.mulf %371, %372 : vector<2x32xf32>
    %374 = arith.addf %318, %373 : vector<2x32xf32>
    %375 = arith.subf %368, %321 : vector<2x32xf32>
    %376 = arith.mulf %371, %375 : vector<2x32xf32>
    %377 = arith.addf %321, %376 : vector<2x32xf32>
    %c12_112 = arith.constant 12 : index
    %c0_113 = arith.constant 0 : index
    %378 = vector.load %arg18[%c12_112, %c0_113] : memref<18x64xf32, #tpu.memory_space<vmem>>, vector<2x32xf32>
    tpu.vector_store %arg18[%c12_112, %c0_113], %370 {strides = array<i32>} : memref<18x64xf32, #tpu.memory_space<vmem>>, vector<2x32xf32>,
    %c2_114 = arith.constant 2 : index
    %c128_115 = arith.constant 128 : index
    %379 = vector.load %arg17[%c2_114, %c128_115] : memref<16x256xf32, #tpu.memory_space<vmem>>, vector<2x128xf32>
    %380 = arith.truncf %346 : vector<2x32xf32> to vector<2x32xbf16>
    %cst_116 = arith.constant dense<0.000000e+00> : vector<2x128xf32>
    %381 = tpu.matmul %380, %10, %cst_116 {dimension_numbers = #tpu.dot_dimension_numbers<[1], [0], [0], [1], [0, 0, 1, 1], [], []>} : vector<2x32xbf16>, vector<32x128xbf16>, vector<2x128xf32> -> vector<2x128xf32>
    %382 = arith.addf %379, %381 : vector<2x128xf32>
    %383 = vector.extract_strided_slice %382 {offsets = [0, 0], sizes = [2, 96], strides = [1, 1]} : vector<2x128xf32> to vector<2x96xf32>
    %384 = arith.negf %383 : vector<2x96xf32>
    %385 = math.exp %384 : vector<2x96xf32>
    %cst_117 = arith.constant 1.000000e+00 : f32
    %386 = vector.broadcast %cst_117 : f32 to vector<2x96xf32>
    %387 = arith.addf %386, %385 : vector<2x96xf32>
    %388 = arith.divf %386, %387 : vector<2x96xf32>
    %389 = vector.extract_strided_slice %382 {offsets = [0, 96], sizes = [2, 32], strides = [1, 1]} : vector<2x128xf32> to vector<2x32xf32>
    %390 = math.tanh %389 : vector<2x32xf32>
    %391 = vector.extract_strided_slice %388 {offsets = [0, 0], sizes = [2, 32], strides = [1, 1]} : vector<2x96xf32> to vector<2x32xf32>
    %392 = vector.extract_strided_slice %388 {offsets = [0, 32], sizes = [2, 32], strides = [1, 1]} : vector<2x96xf32> to vector<2x32xf32>
    %393 = vector.extract_strided_slice %388 {offsets = [0, 64], sizes = [2, 32], strides = [1, 1]} : vector<2x96xf32> to vector<2x32xf32>
    %394 = arith.mulf %392, %349 : vector<2x32xf32>
    %395 = arith.mulf %391, %390 : vector<2x32xf32>
    %396 = arith.addf %394, %395 : vector<2x32xf32>
    %397 = math.tanh %396 : vector<2x32xf32>
    %398 = arith.mulf %393, %397 : vector<2x32xf32>
    %c2_118 = arith.constant 2 : index
    %c0_119 = arith.constant 0 : index
    %399 = vector.load %arg0[%c2_118, %c0_119] : memref<16x32xf32, #tpu.memory_space<vmem>>, vector<2x32xf32>
    %400 = arith.subf %398, %346 : vector<2x32xf32>
    %401 = arith.mulf %399, %400 : vector<2x32xf32>
    %402 = arith.addf %346, %401 : vector<2x32xf32>
    %403 = arith.subf %396, %349 : vector<2x32xf32>
    %404 = arith.mulf %399, %403 : vector<2x32xf32>
    %405 = arith.addf %349, %404 : vector<2x32xf32>
    %c2_120 = arith.constant 2 : index
    %c32_121 = arith.constant 32 : index
    %406 = vector.load %arg18[%c2_120, %c32_121] : memref<18x64xf32, #tpu.memory_space<vmem>>, vector<2x32xf32>
    tpu.vector_store %arg18[%c2_120, %c32_121], %398 {strides = array<i32>} : memref<18x64xf32, #tpu.memory_space<vmem>>, vector<2x32xf32>,
    %c14_122 = arith.constant 14 : index
    %c0_123 = arith.constant 0 : index
    %407 = vector.load %arg17[%c14_122, %c0_123] : memref<16x256xf32, #tpu.memory_space<vmem>>, vector<2x128xf32>
    %408 = arith.truncf %374 : vector<2x32xf32> to vector<2x32xbf16>
    %cst_124 = arith.constant dense<0.000000e+00> : vector<2x128xf32>
    %409 = tpu.matmul %408, %9, %cst_124 {dimension_numbers = #tpu.dot_dimension_numbers<[1], [0], [0], [1], [0, 0, 1, 1], [], []>} : vector<2x32xbf16>, vector<32x128xbf16>, vector<2x128xf32> -> vector<2x128xf32>
    %410 = arith.addf %407, %409 : vector<2x128xf32>
    %411 = vector.extract_strided_slice %410 {offsets = [0, 0], sizes = [2, 96], strides = [1, 1]} : vector<2x128xf32> to vector<2x96xf32>
    %412 = arith.negf %411 : vector<2x96xf32>
    %413 = math.exp %412 : vector<2x96xf32>
    %cst_125 = arith.constant 1.000000e+00 : f32
    %414 = vector.broadcast %cst_125 : f32 to vector<2x96xf32>
    %415 = arith.addf %414, %413 : vector<2x96xf32>
    %416 = arith.divf %414, %415 : vector<2x96xf32>
    %417 = vector.extract_strided_slice %410 {offsets = [0, 96], sizes = [2, 32], strides = [1, 1]} : vector<2x128xf32> to vector<2x32xf32>
    %418 = math.tanh %417 : vector<2x32xf32>
    %419 = vector.extract_strided_slice %416 {offsets = [0, 0], sizes = [2, 32], strides = [1, 1]} : vector<2x96xf32> to vector<2x32xf32>
    %420 = vector.extract_strided_slice %416 {offsets = [0, 32], sizes = [2, 32], strides = [1, 1]} : vector<2x96xf32> to vector<2x32xf32>
    %421 = vector.extract_strided_slice %416 {offsets = [0, 64], sizes = [2, 32], strides = [1, 1]} : vector<2x96xf32> to vector<2x32xf32>
    %422 = arith.mulf %420, %377 : vector<2x32xf32>
    %423 = arith.mulf %419, %418 : vector<2x32xf32>
    %424 = arith.addf %422, %423 : vector<2x32xf32>
    %425 = math.tanh %424 : vector<2x32xf32>
    %426 = arith.mulf %421, %425 : vector<2x32xf32>
    %c14_126 = arith.constant 14 : index
    %c0_127 = arith.constant 0 : index
    %427 = vector.load %arg0[%c14_126, %c0_127] : memref<16x32xf32, #tpu.memory_space<vmem>>, vector<2x32xf32>
    %428 = arith.subf %426, %374 : vector<2x32xf32>
    %429 = arith.mulf %427, %428 : vector<2x32xf32>
    %430 = arith.addf %374, %429 : vector<2x32xf32>
    %431 = arith.subf %424, %377 : vector<2x32xf32>
    %432 = arith.mulf %427, %431 : vector<2x32xf32>
    %433 = arith.addf %377, %432 : vector<2x32xf32>
    %c14_128 = arith.constant 14 : index
    %c0_129 = arith.constant 0 : index
    %434 = vector.load %arg18[%c14_128, %c0_129] : memref<18x64xf32, #tpu.memory_space<vmem>>, vector<2x32xf32>
    tpu.vector_store %arg18[%c14_128, %c0_129], %426 {strides = array<i32>} : memref<18x64xf32, #tpu.memory_space<vmem>>, vector<2x32xf32>,
    %c0_130 = arith.constant 0 : index
    %c128_131 = arith.constant 128 : index
    %435 = vector.load %arg17[%c0_130, %c128_131] : memref<16x256xf32, #tpu.memory_space<vmem>>, vector<2x128xf32>
    %436 = arith.truncf %402 : vector<2x32xf32> to vector<2x32xbf16>
    %cst_132 = arith.constant dense<0.000000e+00> : vector<2x128xf32>
    %437 = tpu.matmul %436, %10, %cst_132 {dimension_numbers = #tpu.dot_dimension_numbers<[1], [0], [0], [1], [0, 0, 1, 1], [], []>} : vector<2x32xbf16>, vector<32x128xbf16>, vector<2x128xf32> -> vector<2x128xf32>
    %438 = arith.addf %435, %437 : vector<2x128xf32>
    %439 = vector.extract_strided_slice %438 {offsets = [0, 0], sizes = [2, 96], strides = [1, 1]} : vector<2x128xf32> to vector<2x96xf32>
    %440 = arith.negf %439 : vector<2x96xf32>
    %441 = math.exp %440 : vector<2x96xf32>
    %cst_133 = arith.constant 1.000000e+00 : f32
    %442 = vector.broadcast %cst_133 : f32 to vector<2x96xf32>
    %443 = arith.addf %442, %441 : vector<2x96xf32>
    %444 = arith.divf %442, %443 : vector<2x96xf32>
    %445 = vector.extract_strided_slice %438 {offsets = [0, 96], sizes = [2, 32], strides = [1, 1]} : vector<2x128xf32> to vector<2x32xf32>
    %446 = math.tanh %445 : vector<2x32xf32>
    %447 = vector.extract_strided_slice %444 {offsets = [0, 0], sizes = [2, 32], strides = [1, 1]} : vector<2x96xf32> to vector<2x32xf32>
    %448 = vector.extract_strided_slice %444 {offsets = [0, 32], sizes = [2, 32], strides = [1, 1]} : vector<2x96xf32> to vector<2x32xf32>
    %449 = vector.extract_strided_slice %444 {offsets = [0, 64], sizes = [2, 32], strides = [1, 1]} : vector<2x96xf32> to vector<2x32xf32>
    %450 = arith.mulf %448, %405 : vector<2x32xf32>
    %451 = arith.mulf %447, %446 : vector<2x32xf32>
    %452 = arith.addf %450, %451 : vector<2x32xf32>
    %453 = math.tanh %452 : vector<2x32xf32>
    %454 = arith.mulf %449, %453 : vector<2x32xf32>
    %c0_134 = arith.constant 0 : index
    %c0_135 = arith.constant 0 : index
    %455 = vector.load %arg0[%c0_134, %c0_135] : memref<16x32xf32, #tpu.memory_space<vmem>>, vector<2x32xf32>
    %456 = arith.subf %454, %402 : vector<2x32xf32>
    %457 = arith.mulf %455, %456 : vector<2x32xf32>
    %458 = arith.addf %402, %457 : vector<2x32xf32>
    %459 = arith.subf %452, %405 : vector<2x32xf32>
    %460 = arith.mulf %455, %459 : vector<2x32xf32>
    %461 = arith.addf %405, %460 : vector<2x32xf32>
    %c0_136 = arith.constant 0 : index
    %c32_137 = arith.constant 32 : index
    %462 = vector.load %arg18[%c0_136, %c32_137] : memref<18x64xf32, #tpu.memory_space<vmem>>, vector<2x32xf32>
    tpu.vector_store %arg18[%c0_136, %c32_137], %454 {strides = array<i32>} : memref<18x64xf32, #tpu.memory_space<vmem>>, vector<2x32xf32>,
    %c16 = arith.constant 16 : index
    %c0_138 = arith.constant 0 : index
    %463 = vector.load %arg18[%c16, %c0_138] : memref<18x64xf32, #tpu.memory_space<vmem>>, vector<2x32xf32>
    tpu.vector_store %arg18[%c16, %c0_138], %430 {strides = array<i32>} : memref<18x64xf32, #tpu.memory_space<vmem>>, vector<2x32xf32>,
    %c16_139 = arith.constant 16 : index
    %c32_140 = arith.constant 32 : index
    %464 = vector.load %arg18[%c16_139, %c32_140] : memref<18x64xf32, #tpu.memory_space<vmem>>, vector<2x32xf32>
    tpu.vector_store %arg18[%c16_139, %c32_140], %458 {strides = array<i32>} : memref<18x64xf32, #tpu.memory_space<vmem>>, vector<2x32xf32>,
    %c0_141 = arith.constant 0 : index
    %c0_142 = arith.constant 0 : index
    %465 = vector.load %arg18[%c0_141, %c0_142] : memref<18x64xf32, #tpu.memory_space<vmem>>, vector<18x64xf32>
    %466 = arith.truncf %465 : vector<18x64xf32> to vector<18x64xbf16>
    %c0_143 = arith.constant 0 : index
    %c0_144 = arith.constant 0 : index
    %467 = vector.load %arg6[%c0_143, %c0_144] : memref<64x32xbf16, #tpu.memory_space<vmem>>, vector<64x32xbf16>
    %cst_145 = arith.constant dense<0.000000e+00> : vector<18x32xf32>
    %468 = tpu.matmul %466, %467, %cst_145 {dimension_numbers = #tpu.dot_dimension_numbers<[1], [0], [0], [1], [0, 0, 1, 1], [], []>} : vector<18x64xbf16>, vector<64x32xbf16>, vector<18x32xf32> -> vector<18x32xf32>
    %469 = vector.extract_strided_slice %468 {offsets = [0, 0], sizes = [16, 32], strides = [1, 1]} : vector<18x32xf32> to vector<16x32xf32>
    %c0_146 = arith.constant 0 : index
    %c0_147 = arith.constant 0 : index
    %470 = vector.load %arg0[%c0_146, %c0_147] : memref<16x32xf32, #tpu.memory_space<vmem>>, vector<16x1xf32>
    %471 = vector.broadcast %470 : vector<16x1xf32> to vector<16x32xf32>
    %472 = arith.mulf %469, %471 : vector<16x32xf32>
    %473 = arith.truncf %472 : vector<16x32xf32> to vector<16x32xbf16>
    %c0_148 = arith.constant 0 : index
    %c0_149 = arith.constant 0 : index
    %474 = vector.load %arg19[%c0_148, %c0_149] : memref<16x32xbf16, #tpu.memory_space<vmem>>, vector<16x32xbf16>
    tpu.vector_store %arg19[%c0_148, %c0_149], %473 {strides = array<i32>} : memref<16x32xbf16, #tpu.memory_space<vmem>>, vector<16x32xbf16>,
    %475 = vector.extract_strided_slice %468 {offsets = [16, 0], sizes = [2, 32], strides = [1, 1]} : vector<18x32xf32> to vector<2x32xf32>
    %c0_150 = arith.constant 0 : index
    %c0_151 = arith.constant 0 : index
    %c0_152 = arith.constant 0 : index
    %476 = vector.load %arg15[%c0_150, %c0_151, %c0_152] : memref<2x2x32xf32, #tpu.memory_space<vmem>>, vector<1x2x32xf32>
    %477 = vector.shape_cast %476 : vector<1x2x32xf32> to vector<2x32xf32>
    %478 = vector.shape_cast %475 : vector<2x32xf32> to vector<1x2x32xf32>
    tpu.vector_store %arg15[%c0_150, %c0_151, %c0_152], %478 {strides = array<i32>} : memref<2x2x32xf32, #tpu.memory_space<vmem>>, vector<1x2x32xf32>,
    %479 = arith.truncf %433 : vector<2x32xf32> to vector<2x32xbf16>
    %cst_153 = arith.constant dense<0.000000e+00> : vector<2x16xf32>
    %480 = tpu.matmul %479, %0, %cst_153 {dimension_numbers = #tpu.dot_dimension_numbers<[1], [0], [0], [1], [0, 0, 1, 1], [], []>} : vector<2x32xbf16>, vector<32x16xbf16>, vector<2x16xf32> -> vector<2x16xf32>
    %481 = vector.broadcast %1 : vector<1x16xf32> to vector<2x16xf32>
    %482 = arith.addf %480, %481 : vector<2x16xf32>
    %cst_154 = arith.constant 0.000000e+00 : f32
    %483 = vector.broadcast %cst_154 : f32 to vector<2x16xf32>
    %484 = arith.maximumf %482, %483 : vector<2x16xf32>
    %c0_155 = arith.constant 0 : index
    %c0_156 = arith.constant 0 : index
    %c0_157 = arith.constant 0 : index
    %485 = vector.load %arg16[%c0_155, %c0_156, %c0_157] : memref<2x2x32xf32, #tpu.memory_space<vmem>>, vector<1x2x16xf32>
    %486 = vector.shape_cast %485 : vector<1x2x16xf32> to vector<2x16xf32>
    %487 = vector.shape_cast %484 : vector<2x16xf32> to vector<1x2x16xf32>
    tpu.vector_store %arg16[%c0_155, %c0_156, %c0_157], %487 {strides = array<i32>} : memref<2x2x32xf32, #tpu.memory_space<vmem>>, vector<1x2x16xf32>,
    %488 = arith.truncf %461 : vector<2x32xf32> to vector<2x32xbf16>
    %cst_158 = arith.constant dense<0.000000e+00> : vector<2x16xf32>
    %489 = tpu.matmul %488, %0, %cst_158 {dimension_numbers = #tpu.dot_dimension_numbers<[1], [0], [0], [1], [0, 0, 1, 1], [], []>} : vector<2x32xbf16>, vector<32x16xbf16>, vector<2x16xf32> -> vector<2x16xf32>
    %490 = vector.broadcast %1 : vector<1x16xf32> to vector<2x16xf32>
    %491 = arith.addf %489, %490 : vector<2x16xf32>
    %cst_159 = arith.constant 0.000000e+00 : f32
    %492 = vector.broadcast %cst_159 : f32 to vector<2x16xf32>
    %493 = arith.maximumf %491, %492 : vector<2x16xf32>
    %c0_160 = arith.constant 0 : index
    %c0_161 = arith.constant 0 : index
    %c16_162 = arith.constant 16 : index
    %494 = vector.load %arg16[%c0_160, %c0_161, %c16_162] : memref<2x2x32xf32, #tpu.memory_space<vmem>>, vector<1x2x16xf32>
    %495 = vector.shape_cast %494 : vector<1x2x16xf32> to vector<2x16xf32>
    %496 = vector.shape_cast %493 : vector<2x16xf32> to vector<1x2x16xf32>
    tpu.vector_store %arg16[%c0_160, %c0_161, %c16_162], %496 {strides = array<i32>} : memref<2x2x32xf32, #tpu.memory_space<vmem>>, vector<1x2x16xf32>,
    %c0_163 = arith.constant 0 : index
    %c0_164 = arith.constant 0 : index
    %497 = vector.load %arg19[%c0_163, %c0_164] : memref<16x32xbf16, #tpu.memory_space<vmem>>, vector<16x32xbf16>
    %c0_165 = arith.constant 0 : index
    %c0_166 = arith.constant 0 : index
    %498 = vector.load %arg7[%c0_165, %c0_166] : memref<32x256xbf16, #tpu.memory_space<vmem>>, vector<32x256xbf16>
    %cst_167 = arith.constant dense<0.000000e+00> : vector<16x256xf32>
    %499 = tpu.matmul %497, %498, %cst_167 {dimension_numbers = #tpu.dot_dimension_numbers<[1], [0], [0], [1], [0, 0, 1, 1], [], []>} : vector<16x32xbf16>, vector<32x256xbf16>, vector<16x256xf32> -> vector<16x256xf32>
    %c0_168 = arith.constant 0 : index
    %c0_169 = arith.constant 0 : index
    %500 = vector.load %arg8[%c0_168, %c0_169] : memref<1x256xf32, #tpu.memory_space<vmem>>, vector<1x256xf32>
    %501 = vector.broadcast %500 : vector<1x256xf32> to vector<16x256xf32>
    %502 = arith.addf %499, %501 : vector<16x256xf32>
    %c0_170 = arith.constant 0 : index
    %c0_171 = arith.constant 0 : index
    %503 = vector.load %arg17[%c0_170, %c0_171] : memref<16x256xf32, #tpu.memory_space<vmem>>, vector<16x256xf32>
    tpu.vector_store %arg17[%c0_170, %c0_171], %502 {strides = array<i32>} : memref<16x256xf32, #tpu.memory_space<vmem>>, vector<16x256xf32>,
    %c0_172 = arith.constant 0 : index
    %c0_173 = arith.constant 0 : index
    %504 = vector.load %arg9[%c0_172, %c0_173] : memref<32x128xbf16, #tpu.memory_space<vmem>>, vector<32x128xbf16>
    %c0_174 = arith.constant 0 : index
    %c0_175 = arith.constant 0 : index
    %505 = vector.load %arg10[%c0_174, %c0_175] : memref<32x128xbf16, #tpu.memory_space<vmem>>, vector<32x128xbf16>
    %cst_176 = arith.constant 0.000000e+00 : f32
    %506 = vector.broadcast %cst_176 : f32 to vector<2x32xf32>
    %cst_177 = arith.constant 0.000000e+00 : f32
    %507 = vector.broadcast %cst_177 : f32 to vector<2x32xf32>
    %cst_178 = arith.constant 0.000000e+00 : f32
    %508 = vector.broadcast %cst_178 : f32 to vector<2x32xf32>
    %cst_179 = arith.constant 0.000000e+00 : f32
    %509 = vector.broadcast %cst_179 : f32 to vector<2x32xf32>
    %c0_180 = arith.constant 0 : index
    %c0_181 = arith.constant 0 : index
    %510 = vector.load %arg17[%c0_180, %c0_181] : memref<16x256xf32, #tpu.memory_space<vmem>>, vector<2x128xf32>
    %511 = arith.truncf %506 : vector<2x32xf32> to vector<2x32xbf16>
    %cst_182 = arith.constant dense<0.000000e+00> : vector<2x128xf32>
    %512 = tpu.matmul %511, %504, %cst_182 {dimension_numbers = #tpu.dot_dimension_numbers<[1], [0], [0], [1], [0, 0, 1, 1], [], []>} : vector<2x32xbf16>, vector<32x128xbf16>, vector<2x128xf32> -> vector<2x128xf32>
    %513 = arith.addf %510, %512 : vector<2x128xf32>
    %514 = vector.extract_strided_slice %513 {offsets = [0, 0], sizes = [2, 96], strides = [1, 1]} : vector<2x128xf32> to vector<2x96xf32>
    %515 = arith.negf %514 : vector<2x96xf32>
    %516 = math.exp %515 : vector<2x96xf32>
    %cst_183 = arith.constant 1.000000e+00 : f32
    %517 = vector.broadcast %cst_183 : f32 to vector<2x96xf32>
    %518 = arith.addf %517, %516 : vector<2x96xf32>
    %519 = arith.divf %517, %518 : vector<2x96xf32>
    %520 = vector.extract_strided_slice %513 {offsets = [0, 96], sizes = [2, 32], strides = [1, 1]} : vector<2x128xf32> to vector<2x32xf32>
    %521 = math.tanh %520 : vector<2x32xf32>
    %522 = vector.extract_strided_slice %519 {offsets = [0, 0], sizes = [2, 32], strides = [1, 1]} : vector<2x96xf32> to vector<2x32xf32>
    %523 = vector.extract_strided_slice %519 {offsets = [0, 32], sizes = [2, 32], strides = [1, 1]} : vector<2x96xf32> to vector<2x32xf32>
    %524 = vector.extract_strided_slice %519 {offsets = [0, 64], sizes = [2, 32], strides = [1, 1]} : vector<2x96xf32> to vector<2x32xf32>
    %525 = arith.mulf %523, %507 : vector<2x32xf32>
    %526 = arith.mulf %522, %521 : vector<2x32xf32>
    %527 = arith.addf %525, %526 : vector<2x32xf32>
    %528 = math.tanh %527 : vector<2x32xf32>
    %529 = arith.mulf %524, %528 : vector<2x32xf32>
    %c0_184 = arith.constant 0 : index
    %c0_185 = arith.constant 0 : index
    %530 = vector.load %arg0[%c0_184, %c0_185] : memref<16x32xf32, #tpu.memory_space<vmem>>, vector<2x32xf32>
    %531 = arith.subf %529, %506 : vector<2x32xf32>
    %532 = arith.mulf %530, %531 : vector<2x32xf32>
    %533 = arith.addf %506, %532 : vector<2x32xf32>
    %534 = arith.subf %527, %507 : vector<2x32xf32>
    %535 = arith.mulf %530, %534 : vector<2x32xf32>
    %536 = arith.addf %507, %535 : vector<2x32xf32>
    %c0_186 = arith.constant 0 : index
    %c0_187 = arith.constant 0 : index
    %537 = vector.load %arg18[%c0_186, %c0_187] : memref<18x64xf32, #tpu.memory_space<vmem>>, vector<2x32xf32>
    tpu.vector_store %arg18[%c0_186, %c0_187], %529 {strides = array<i32>} : memref<18x64xf32, #tpu.memory_space<vmem>>, vector<2x32xf32>,
    %c14_188 = arith.constant 14 : index
    %c128_189 = arith.constant 128 : index
    %538 = vector.load %arg17[%c14_188, %c128_189] : memref<16x256xf32, #tpu.memory_space<vmem>>, vector<2x128xf32>
    %539 = arith.truncf %508 : vector<2x32xf32> to vector<2x32xbf16>
    %cst_190 = arith.constant dense<0.000000e+00> : vector<2x128xf32>
    %540 = tpu.matmul %539, %505, %cst_190 {dimension_numbers = #tpu.dot_dimension_numbers<[1], [0], [0], [1], [0, 0, 1, 1], [], []>} : vector<2x32xbf16>, vector<32x128xbf16>, vector<2x128xf32> -> vector<2x128xf32>
    %541 = arith.addf %538, %540 : vector<2x128xf32>
    %542 = vector.extract_strided_slice %541 {offsets = [0, 0], sizes = [2, 96], strides = [1, 1]} : vector<2x128xf32> to vector<2x96xf32>
    %543 = arith.negf %542 : vector<2x96xf32>
    %544 = math.exp %543 : vector<2x96xf32>
    %cst_191 = arith.constant 1.000000e+00 : f32
    %545 = vector.broadcast %cst_191 : f32 to vector<2x96xf32>
    %546 = arith.addf %545, %544 : vector<2x96xf32>
    %547 = arith.divf %545, %546 : vector<2x96xf32>
    %548 = vector.extract_strided_slice %541 {offsets = [0, 96], sizes = [2, 32], strides = [1, 1]} : vector<2x128xf32> to vector<2x32xf32>
    %549 = math.tanh %548 : vector<2x32xf32>
    %550 = vector.extract_strided_slice %547 {offsets = [0, 0], sizes = [2, 32], strides = [1, 1]} : vector<2x96xf32> to vector<2x32xf32>
    %551 = vector.extract_strided_slice %547 {offsets = [0, 32], sizes = [2, 32], strides = [1, 1]} : vector<2x96xf32> to vector<2x32xf32>
    %552 = vector.extract_strided_slice %547 {offsets = [0, 64], sizes = [2, 32], strides = [1, 1]} : vector<2x96xf32> to vector<2x32xf32>
    %553 = arith.mulf %551, %509 : vector<2x32xf32>
    %554 = arith.mulf %550, %549 : vector<2x32xf32>
    %555 = arith.addf %553, %554 : vector<2x32xf32>
    %556 = math.tanh %555 : vector<2x32xf32>
    %557 = arith.mulf %552, %556 : vector<2x32xf32>
    %c14_192 = arith.constant 14 : index
    %c0_193 = arith.constant 0 : index
    %558 = vector.load %arg0[%c14_192, %c0_193] : memref<16x32xf32, #tpu.memory_space<vmem>>, vector<2x32xf32>
    %559 = arith.subf %557, %508 : vector<2x32xf32>
    %560 = arith.mulf %558, %559 : vector<2x32xf32>
    %561 = arith.addf %508, %560 : vector<2x32xf32>
    %562 = arith.subf %555, %509 : vector<2x32xf32>
    %563 = arith.mulf %558, %562 : vector<2x32xf32>
    %564 = arith.addf %509, %563 : vector<2x32xf32>
    %c14_194 = arith.constant 14 : index
    %c32_195 = arith.constant 32 : index
    %565 = vector.load %arg18[%c14_194, %c32_195] : memref<18x64xf32, #tpu.memory_space<vmem>>, vector<2x32xf32>
    tpu.vector_store %arg18[%c14_194, %c32_195], %557 {strides = array<i32>} : memref<18x64xf32, #tpu.memory_space<vmem>>, vector<2x32xf32>,
    %c2_196 = arith.constant 2 : index
    %c0_197 = arith.constant 0 : index
    %566 = vector.load %arg17[%c2_196, %c0_197] : memref<16x256xf32, #tpu.memory_space<vmem>>, vector<2x128xf32>
    %567 = arith.truncf %533 : vector<2x32xf32> to vector<2x32xbf16>
    %cst_198 = arith.constant dense<0.000000e+00> : vector<2x128xf32>
    %568 = tpu.matmul %567, %504, %cst_198 {dimension_numbers = #tpu.dot_dimension_numbers<[1], [0], [0], [1], [0, 0, 1, 1], [], []>} : vector<2x32xbf16>, vector<32x128xbf16>, vector<2x128xf32> -> vector<2x128xf32>
    %569 = arith.addf %566, %568 : vector<2x128xf32>
    %570 = vector.extract_strided_slice %569 {offsets = [0, 0], sizes = [2, 96], strides = [1, 1]} : vector<2x128xf32> to vector<2x96xf32>
    %571 = arith.negf %570 : vector<2x96xf32>
    %572 = math.exp %571 : vector<2x96xf32>
    %cst_199 = arith.constant 1.000000e+00 : f32
    %573 = vector.broadcast %cst_199 : f32 to vector<2x96xf32>
    %574 = arith.addf %573, %572 : vector<2x96xf32>
    %575 = arith.divf %573, %574 : vector<2x96xf32>
    %576 = vector.extract_strided_slice %569 {offsets = [0, 96], sizes = [2, 32], strides = [1, 1]} : vector<2x128xf32> to vector<2x32xf32>
    %577 = math.tanh %576 : vector<2x32xf32>
    %578 = vector.extract_strided_slice %575 {offsets = [0, 0], sizes = [2, 32], strides = [1, 1]} : vector<2x96xf32> to vector<2x32xf32>
    %579 = vector.extract_strided_slice %575 {offsets = [0, 32], sizes = [2, 32], strides = [1, 1]} : vector<2x96xf32> to vector<2x32xf32>
    %580 = vector.extract_strided_slice %575 {offsets = [0, 64], sizes = [2, 32], strides = [1, 1]} : vector<2x96xf32> to vector<2x32xf32>
    %581 = arith.mulf %579, %536 : vector<2x32xf32>
    %582 = arith.mulf %578, %577 : vector<2x32xf32>
    %583 = arith.addf %581, %582 : vector<2x32xf32>
    %584 = math.tanh %583 : vector<2x32xf32>
    %585 = arith.mulf %580, %584 : vector<2x32xf32>
    %c2_200 = arith.constant 2 : index
    %c0_201 = arith.constant 0 : index
    %586 = vector.load %arg0[%c2_200, %c0_201] : memref<16x32xf32, #tpu.memory_space<vmem>>, vector<2x32xf32>
    %587 = arith.subf %585, %533 : vector<2x32xf32>
    %588 = arith.mulf %586, %587 : vector<2x32xf32>
    %589 = arith.addf %533, %588 : vector<2x32xf32>
    %590 = arith.subf %583, %536 : vector<2x32xf32>
    %591 = arith.mulf %586, %590 : vector<2x32xf32>
    %592 = arith.addf %536, %591 : vector<2x32xf32>
    %c2_202 = arith.constant 2 : index
    %c0_203 = arith.constant 0 : index
    %593 = vector.load %arg18[%c2_202, %c0_203] : memref<18x64xf32, #tpu.memory_space<vmem>>, vector<2x32xf32>
    tpu.vector_store %arg18[%c2_202, %c0_203], %585 {strides = array<i32>} : memref<18x64xf32, #tpu.memory_space<vmem>>, vector<2x32xf32>,
    %c12_204 = arith.constant 12 : index
    %c128_205 = arith.constant 128 : index
    %594 = vector.load %arg17[%c12_204, %c128_205] : memref<16x256xf32, #tpu.memory_space<vmem>>, vector<2x128xf32>
    %595 = arith.truncf %561 : vector<2x32xf32> to vector<2x32xbf16>
    %cst_206 = arith.constant dense<0.000000e+00> : vector<2x128xf32>
    %596 = tpu.matmul %595, %505, %cst_206 {dimension_numbers = #tpu.dot_dimension_numbers<[1], [0], [0], [1], [0, 0, 1, 1], [], []>} : vector<2x32xbf16>, vector<32x128xbf16>, vector<2x128xf32> -> vector<2x128xf32>
    %597 = arith.addf %594, %596 : vector<2x128xf32>
    %598 = vector.extract_strided_slice %597 {offsets = [0, 0], sizes = [2, 96], strides = [1, 1]} : vector<2x128xf32> to vector<2x96xf32>
    %599 = arith.negf %598 : vector<2x96xf32>
    %600 = math.exp %599 : vector<2x96xf32>
    %cst_207 = arith.constant 1.000000e+00 : f32
    %601 = vector.broadcast %cst_207 : f32 to vector<2x96xf32>
    %602 = arith.addf %601, %600 : vector<2x96xf32>
    %603 = arith.divf %601, %602 : vector<2x96xf32>
    %604 = vector.extract_strided_slice %597 {offsets = [0, 96], sizes = [2, 32], strides = [1, 1]} : vector<2x128xf32> to vector<2x32xf32>
    %605 = math.tanh %604 : vector<2x32xf32>
    %606 = vector.extract_strided_slice %603 {offsets = [0, 0], sizes = [2, 32], strides = [1, 1]} : vector<2x96xf32> to vector<2x32xf32>
    %607 = vector.extract_strided_slice %603 {offsets = [0, 32], sizes = [2, 32], strides = [1, 1]} : vector<2x96xf32> to vector<2x32xf32>
    %608 = vector.extract_strided_slice %603 {offsets = [0, 64], sizes = [2, 32], strides = [1, 1]} : vector<2x96xf32> to vector<2x32xf32>
    %609 = arith.mulf %607, %564 : vector<2x32xf32>
    %610 = arith.mulf %606, %605 : vector<2x32xf32>
    %611 = arith.addf %609, %610 : vector<2x32xf32>
    %612 = math.tanh %611 : vector<2x32xf32>
    %613 = arith.mulf %608, %612 : vector<2x32xf32>
    %c12_208 = arith.constant 12 : index
    %c0_209 = arith.constant 0 : index
    %614 = vector.load %arg0[%c12_208, %c0_209] : memref<16x32xf32, #tpu.memory_space<vmem>>, vector<2x32xf32>
    %615 = arith.subf %613, %561 : vector<2x32xf32>
    %616 = arith.mulf %614, %615 : vector<2x32xf32>
    %617 = arith.addf %561, %616 : vector<2x32xf32>
    %618 = arith.subf %611, %564 : vector<2x32xf32>
    %619 = arith.mulf %614, %618 : vector<2x32xf32>
    %620 = arith.addf %564, %619 : vector<2x32xf32>
    %c12_210 = arith.constant 12 : index
    %c32_211 = arith.constant 32 : index
    %621 = vector.load %arg18[%c12_210, %c32_211] : memref<18x64xf32, #tpu.memory_space<vmem>>, vector<2x32xf32>
    tpu.vector_store %arg18[%c12_210, %c32_211], %613 {strides = array<i32>} : memref<18x64xf32, #tpu.memory_space<vmem>>, vector<2x32xf32>,
    %c4_212 = arith.constant 4 : index
    %c0_213 = arith.constant 0 : index
    %622 = vector.load %arg17[%c4_212, %c0_213] : memref<16x256xf32, #tpu.memory_space<vmem>>, vector<2x128xf32>
    %623 = arith.truncf %589 : vector<2x32xf32> to vector<2x32xbf16>
    %cst_214 = arith.constant dense<0.000000e+00> : vector<2x128xf32>
    %624 = tpu.matmul %623, %504, %cst_214 {dimension_numbers = #tpu.dot_dimension_numbers<[1], [0], [0], [1], [0, 0, 1, 1], [], []>} : vector<2x32xbf16>, vector<32x128xbf16>, vector<2x128xf32> -> vector<2x128xf32>
    %625 = arith.addf %622, %624 : vector<2x128xf32>
    %626 = vector.extract_strided_slice %625 {offsets = [0, 0], sizes = [2, 96], strides = [1, 1]} : vector<2x128xf32> to vector<2x96xf32>
    %627 = arith.negf %626 : vector<2x96xf32>
    %628 = math.exp %627 : vector<2x96xf32>
    %cst_215 = arith.constant 1.000000e+00 : f32
    %629 = vector.broadcast %cst_215 : f32 to vector<2x96xf32>
    %630 = arith.addf %629, %628 : vector<2x96xf32>
    %631 = arith.divf %629, %630 : vector<2x96xf32>
    %632 = vector.extract_strided_slice %625 {offsets = [0, 96], sizes = [2, 32], strides = [1, 1]} : vector<2x128xf32> to vector<2x32xf32>
    %633 = math.tanh %632 : vector<2x32xf32>
    %634 = vector.extract_strided_slice %631 {offsets = [0, 0], sizes = [2, 32], strides = [1, 1]} : vector<2x96xf32> to vector<2x32xf32>
    %635 = vector.extract_strided_slice %631 {offsets = [0, 32], sizes = [2, 32], strides = [1, 1]} : vector<2x96xf32> to vector<2x32xf32>
    %636 = vector.extract_strided_slice %631 {offsets = [0, 64], sizes = [2, 32], strides = [1, 1]} : vector<2x96xf32> to vector<2x32xf32>
    %637 = arith.mulf %635, %592 : vector<2x32xf32>
    %638 = arith.mulf %634, %633 : vector<2x32xf32>
    %639 = arith.addf %637, %638 : vector<2x32xf32>
    %640 = math.tanh %639 : vector<2x32xf32>
    %641 = arith.mulf %636, %640 : vector<2x32xf32>
    %c4_216 = arith.constant 4 : index
    %c0_217 = arith.constant 0 : index
    %642 = vector.load %arg0[%c4_216, %c0_217] : memref<16x32xf32, #tpu.memory_space<vmem>>, vector<2x32xf32>
    %643 = arith.subf %641, %589 : vector<2x32xf32>
    %644 = arith.mulf %642, %643 : vector<2x32xf32>
    %645 = arith.addf %589, %644 : vector<2x32xf32>
    %646 = arith.subf %639, %592 : vector<2x32xf32>
    %647 = arith.mulf %642, %646 : vector<2x32xf32>
    %648 = arith.addf %592, %647 : vector<2x32xf32>
    %c4_218 = arith.constant 4 : index
    %c0_219 = arith.constant 0 : index
    %649 = vector.load %arg18[%c4_218, %c0_219] : memref<18x64xf32, #tpu.memory_space<vmem>>, vector<2x32xf32>
    tpu.vector_store %arg18[%c4_218, %c0_219], %641 {strides = array<i32>} : memref<18x64xf32, #tpu.memory_space<vmem>>, vector<2x32xf32>,
    %c10_220 = arith.constant 10 : index
    %c128_221 = arith.constant 128 : index
    %650 = vector.load %arg17[%c10_220, %c128_221] : memref<16x256xf32, #tpu.memory_space<vmem>>, vector<2x128xf32>
    %651 = arith.truncf %617 : vector<2x32xf32> to vector<2x32xbf16>
    %cst_222 = arith.constant dense<0.000000e+00> : vector<2x128xf32>
    %652 = tpu.matmul %651, %505, %cst_222 {dimension_numbers = #tpu.dot_dimension_numbers<[1], [0], [0], [1], [0, 0, 1, 1], [], []>} : vector<2x32xbf16>, vector<32x128xbf16>, vector<2x128xf32> -> vector<2x128xf32>
    %653 = arith.addf %650, %652 : vector<2x128xf32>
    %654 = vector.extract_strided_slice %653 {offsets = [0, 0], sizes = [2, 96], strides = [1, 1]} : vector<2x128xf32> to vector<2x96xf32>
    %655 = arith.negf %654 : vector<2x96xf32>
    %656 = math.exp %655 : vector<2x96xf32>
    %cst_223 = arith.constant 1.000000e+00 : f32
    %657 = vector.broadcast %cst_223 : f32 to vector<2x96xf32>
    %658 = arith.addf %657, %656 : vector<2x96xf32>
    %659 = arith.divf %657, %658 : vector<2x96xf32>
    %660 = vector.extract_strided_slice %653 {offsets = [0, 96], sizes = [2, 32], strides = [1, 1]} : vector<2x128xf32> to vector<2x32xf32>
    %661 = math.tanh %660 : vector<2x32xf32>
    %662 = vector.extract_strided_slice %659 {offsets = [0, 0], sizes = [2, 32], strides = [1, 1]} : vector<2x96xf32> to vector<2x32xf32>
    %663 = vector.extract_strided_slice %659 {offsets = [0, 32], sizes = [2, 32], strides = [1, 1]} : vector<2x96xf32> to vector<2x32xf32>
    %664 = vector.extract_strided_slice %659 {offsets = [0, 64], sizes = [2, 32], strides = [1, 1]} : vector<2x96xf32> to vector<2x32xf32>
    %665 = arith.mulf %663, %620 : vector<2x32xf32>
    %666 = arith.mulf %662, %661 : vector<2x32xf32>
    %667 = arith.addf %665, %666 : vector<2x32xf32>
    %668 = math.tanh %667 : vector<2x32xf32>
    %669 = arith.mulf %664, %668 : vector<2x32xf32>
    %c10_224 = arith.constant 10 : index
    %c0_225 = arith.constant 0 : index
    %670 = vector.load %arg0[%c10_224, %c0_225] : memref<16x32xf32, #tpu.memory_space<vmem>>, vector<2x32xf32>
    %671 = arith.subf %669, %617 : vector<2x32xf32>
    %672 = arith.mulf %670, %671 : vector<2x32xf32>
    %673 = arith.addf %617, %672 : vector<2x32xf32>
    %674 = arith.subf %667, %620 : vector<2x32xf32>
    %675 = arith.mulf %670, %674 : vector<2x32xf32>
    %676 = arith.addf %620, %675 : vector<2x32xf32>
    %c10_226 = arith.constant 10 : index
    %c32_227 = arith.constant 32 : index
    %677 = vector.load %arg18[%c10_226, %c32_227] : memref<18x64xf32, #tpu.memory_space<vmem>>, vector<2x32xf32>
    tpu.vector_store %arg18[%c10_226, %c32_227], %669 {strides = array<i32>} : memref<18x64xf32, #tpu.memory_space<vmem>>, vector<2x32xf32>,
    %c6_228 = arith.constant 6 : index
    %c0_229 = arith.constant 0 : index
    %678 = vector.load %arg17[%c6_228, %c0_229] : memref<16x256xf32, #tpu.memory_space<vmem>>, vector<2x128xf32>
    %679 = arith.truncf %645 : vector<2x32xf32> to vector<2x32xbf16>
    %cst_230 = arith.constant dense<0.000000e+00> : vector<2x128xf32>
    %680 = tpu.matmul %679, %504, %cst_230 {dimension_numbers = #tpu.dot_dimension_numbers<[1], [0], [0], [1], [0, 0, 1, 1], [], []>} : vector<2x32xbf16>, vector<32x128xbf16>, vector<2x128xf32> -> vector<2x128xf32>
    %681 = arith.addf %678, %680 : vector<2x128xf32>
    %682 = vector.extract_strided_slice %681 {offsets = [0, 0], sizes = [2, 96], strides = [1, 1]} : vector<2x128xf32> to vector<2x96xf32>
    %683 = arith.negf %682 : vector<2x96xf32>
    %684 = math.exp %683 : vector<2x96xf32>
    %cst_231 = arith.constant 1.000000e+00 : f32
    %685 = vector.broadcast %cst_231 : f32 to vector<2x96xf32>
    %686 = arith.addf %685, %684 : vector<2x96xf32>
    %687 = arith.divf %685, %686 : vector<2x96xf32>
    %688 = vector.extract_strided_slice %681 {offsets = [0, 96], sizes = [2, 32], strides = [1, 1]} : vector<2x128xf32> to vector<2x32xf32>
    %689 = math.tanh %688 : vector<2x32xf32>
    %690 = vector.extract_strided_slice %687 {offsets = [0, 0], sizes = [2, 32], strides = [1, 1]} : vector<2x96xf32> to vector<2x32xf32>
    %691 = vector.extract_strided_slice %687 {offsets = [0, 32], sizes = [2, 32], strides = [1, 1]} : vector<2x96xf32> to vector<2x32xf32>
    %692 = vector.extract_strided_slice %687 {offsets = [0, 64], sizes = [2, 32], strides = [1, 1]} : vector<2x96xf32> to vector<2x32xf32>
    %693 = arith.mulf %691, %648 : vector<2x32xf32>
    %694 = arith.mulf %690, %689 : vector<2x32xf32>
    %695 = arith.addf %693, %694 : vector<2x32xf32>
    %696 = math.tanh %695 : vector<2x32xf32>
    %697 = arith.mulf %692, %696 : vector<2x32xf32>
    %c6_232 = arith.constant 6 : index
    %c0_233 = arith.constant 0 : index
    %698 = vector.load %arg0[%c6_232, %c0_233] : memref<16x32xf32, #tpu.memory_space<vmem>>, vector<2x32xf32>
    %699 = arith.subf %697, %645 : vector<2x32xf32>
    %700 = arith.mulf %698, %699 : vector<2x32xf32>
    %701 = arith.addf %645, %700 : vector<2x32xf32>
    %702 = arith.subf %695, %648 : vector<2x32xf32>
    %703 = arith.mulf %698, %702 : vector<2x32xf32>
    %704 = arith.addf %648, %703 : vector<2x32xf32>
    %c6_234 = arith.constant 6 : index
    %c0_235 = arith.constant 0 : index
    %705 = vector.load %arg18[%c6_234, %c0_235] : memref<18x64xf32, #tpu.memory_space<vmem>>, vector<2x32xf32>
    tpu.vector_store %arg18[%c6_234, %c0_235], %697 {strides = array<i32>} : memref<18x64xf32, #tpu.memory_space<vmem>>, vector<2x32xf32>,
    %c8_236 = arith.constant 8 : index
    %c128_237 = arith.constant 128 : index
    %706 = vector.load %arg17[%c8_236, %c128_237] : memref<16x256xf32, #tpu.memory_space<vmem>>, vector<2x128xf32>
    %707 = arith.truncf %673 : vector<2x32xf32> to vector<2x32xbf16>
    %cst_238 = arith.constant dense<0.000000e+00> : vector<2x128xf32>
    %708 = tpu.matmul %707, %505, %cst_238 {dimension_numbers = #tpu.dot_dimension_numbers<[1], [0], [0], [1], [0, 0, 1, 1], [], []>} : vector<2x32xbf16>, vector<32x128xbf16>, vector<2x128xf32> -> vector<2x128xf32>
    %709 = arith.addf %706, %708 : vector<2x128xf32>
    %710 = vector.extract_strided_slice %709 {offsets = [0, 0], sizes = [2, 96], strides = [1, 1]} : vector<2x128xf32> to vector<2x96xf32>
    %711 = arith.negf %710 : vector<2x96xf32>
    %712 = math.exp %711 : vector<2x96xf32>
    %cst_239 = arith.constant 1.000000e+00 : f32
    %713 = vector.broadcast %cst_239 : f32 to vector<2x96xf32>
    %714 = arith.addf %713, %712 : vector<2x96xf32>
    %715 = arith.divf %713, %714 : vector<2x96xf32>
    %716 = vector.extract_strided_slice %709 {offsets = [0, 96], sizes = [2, 32], strides = [1, 1]} : vector<2x128xf32> to vector<2x32xf32>
    %717 = math.tanh %716 : vector<2x32xf32>
    %718 = vector.extract_strided_slice %715 {offsets = [0, 0], sizes = [2, 32], strides = [1, 1]} : vector<2x96xf32> to vector<2x32xf32>
    %719 = vector.extract_strided_slice %715 {offsets = [0, 32], sizes = [2, 32], strides = [1, 1]} : vector<2x96xf32> to vector<2x32xf32>
    %720 = vector.extract_strided_slice %715 {offsets = [0, 64], sizes = [2, 32], strides = [1, 1]} : vector<2x96xf32> to vector<2x32xf32>
    %721 = arith.mulf %719, %676 : vector<2x32xf32>
    %722 = arith.mulf %718, %717 : vector<2x32xf32>
    %723 = arith.addf %721, %722 : vector<2x32xf32>
    %724 = math.tanh %723 : vector<2x32xf32>
    %725 = arith.mulf %720, %724 : vector<2x32xf32>
    %c8_240 = arith.constant 8 : index
    %c0_241 = arith.constant 0 : index
    %726 = vector.load %arg0[%c8_240, %c0_241] : memref<16x32xf32, #tpu.memory_space<vmem>>, vector<2x32xf32>
    %727 = arith.subf %725, %673 : vector<2x32xf32>
    %728 = arith.mulf %726, %727 : vector<2x32xf32>
    %729 = arith.addf %673, %728 : vector<2x32xf32>
    %730 = arith.subf %723, %676 : vector<2x32xf32>
    %731 = arith.mulf %726, %730 : vector<2x32xf32>
    %732 = arith.addf %676, %731 : vector<2x32xf32>
    %c8_242 = arith.constant 8 : index
    %c32_243 = arith.constant 32 : index
    %733 = vector.load %arg18[%c8_242, %c32_243] : memref<18x64xf32, #tpu.memory_space<vmem>>, vector<2x32xf32>
    tpu.vector_store %arg18[%c8_242, %c32_243], %725 {strides = array<i32>} : memref<18x64xf32, #tpu.memory_space<vmem>>, vector<2x32xf32>,
    %c8_244 = arith.constant 8 : index
    %c0_245 = arith.constant 0 : index
    %734 = vector.load %arg17[%c8_244, %c0_245] : memref<16x256xf32, #tpu.memory_space<vmem>>, vector<2x128xf32>
    %735 = arith.truncf %701 : vector<2x32xf32> to vector<2x32xbf16>
    %cst_246 = arith.constant dense<0.000000e+00> : vector<2x128xf32>
    %736 = tpu.matmul %735, %504, %cst_246 {dimension_numbers = #tpu.dot_dimension_numbers<[1], [0], [0], [1], [0, 0, 1, 1], [], []>} : vector<2x32xbf16>, vector<32x128xbf16>, vector<2x128xf32> -> vector<2x128xf32>
    %737 = arith.addf %734, %736 : vector<2x128xf32>
    %738 = vector.extract_strided_slice %737 {offsets = [0, 0], sizes = [2, 96], strides = [1, 1]} : vector<2x128xf32> to vector<2x96xf32>
    %739 = arith.negf %738 : vector<2x96xf32>
    %740 = math.exp %739 : vector<2x96xf32>
    %cst_247 = arith.constant 1.000000e+00 : f32
    %741 = vector.broadcast %cst_247 : f32 to vector<2x96xf32>
    %742 = arith.addf %741, %740 : vector<2x96xf32>
    %743 = arith.divf %741, %742 : vector<2x96xf32>
    %744 = vector.extract_strided_slice %737 {offsets = [0, 96], sizes = [2, 32], strides = [1, 1]} : vector<2x128xf32> to vector<2x32xf32>
    %745 = math.tanh %744 : vector<2x32xf32>
    %746 = vector.extract_strided_slice %743 {offsets = [0, 0], sizes = [2, 32], strides = [1, 1]} : vector<2x96xf32> to vector<2x32xf32>
    %747 = vector.extract_strided_slice %743 {offsets = [0, 32], sizes = [2, 32], strides = [1, 1]} : vector<2x96xf32> to vector<2x32xf32>
    %748 = vector.extract_strided_slice %743 {offsets = [0, 64], sizes = [2, 32], strides = [1, 1]} : vector<2x96xf32> to vector<2x32xf32>
    %749 = arith.mulf %747, %704 : vector<2x32xf32>
    %750 = arith.mulf %746, %745 : vector<2x32xf32>
    %751 = arith.addf %749, %750 : vector<2x32xf32>
    %752 = math.tanh %751 : vector<2x32xf32>
    %753 = arith.mulf %748, %752 : vector<2x32xf32>
    %c8_248 = arith.constant 8 : index
    %c0_249 = arith.constant 0 : index
    %754 = vector.load %arg0[%c8_248, %c0_249] : memref<16x32xf32, #tpu.memory_space<vmem>>, vector<2x32xf32>
    %755 = arith.subf %753, %701 : vector<2x32xf32>
    %756 = arith.mulf %754, %755 : vector<2x32xf32>
    %757 = arith.addf %701, %756 : vector<2x32xf32>
    %758 = arith.subf %751, %704 : vector<2x32xf32>
    %759 = arith.mulf %754, %758 : vector<2x32xf32>
    %760 = arith.addf %704, %759 : vector<2x32xf32>
    %c8_250 = arith.constant 8 : index
    %c0_251 = arith.constant 0 : index
    %761 = vector.load %arg18[%c8_250, %c0_251] : memref<18x64xf32, #tpu.memory_space<vmem>>, vector<2x32xf32>
    tpu.vector_store %arg18[%c8_250, %c0_251], %753 {strides = array<i32>} : memref<18x64xf32, #tpu.memory_space<vmem>>, vector<2x32xf32>,
    %c6_252 = arith.constant 6 : index
    %c128_253 = arith.constant 128 : index
    %762 = vector.load %arg17[%c6_252, %c128_253] : memref<16x256xf32, #tpu.memory_space<vmem>>, vector<2x128xf32>
    %763 = arith.truncf %729 : vector<2x32xf32> to vector<2x32xbf16>
    %cst_254 = arith.constant dense<0.000000e+00> : vector<2x128xf32>
    %764 = tpu.matmul %763, %505, %cst_254 {dimension_numbers = #tpu.dot_dimension_numbers<[1], [0], [0], [1], [0, 0, 1, 1], [], []>} : vector<2x32xbf16>, vector<32x128xbf16>, vector<2x128xf32> -> vector<2x128xf32>
    %765 = arith.addf %762, %764 : vector<2x128xf32>
    %766 = vector.extract_strided_slice %765 {offsets = [0, 0], sizes = [2, 96], strides = [1, 1]} : vector<2x128xf32> to vector<2x96xf32>
    %767 = arith.negf %766 : vector<2x96xf32>
    %768 = math.exp %767 : vector<2x96xf32>
    %cst_255 = arith.constant 1.000000e+00 : f32
    %769 = vector.broadcast %cst_255 : f32 to vector<2x96xf32>
    %770 = arith.addf %769, %768 : vector<2x96xf32>
    %771 = arith.divf %769, %770 : vector<2x96xf32>
    %772 = vector.extract_strided_slice %765 {offsets = [0, 96], sizes = [2, 32], strides = [1, 1]} : vector<2x128xf32> to vector<2x32xf32>
    %773 = math.tanh %772 : vector<2x32xf32>
    %774 = vector.extract_strided_slice %771 {offsets = [0, 0], sizes = [2, 32], strides = [1, 1]} : vector<2x96xf32> to vector<2x32xf32>
    %775 = vector.extract_strided_slice %771 {offsets = [0, 32], sizes = [2, 32], strides = [1, 1]} : vector<2x96xf32> to vector<2x32xf32>
    %776 = vector.extract_strided_slice %771 {offsets = [0, 64], sizes = [2, 32], strides = [1, 1]} : vector<2x96xf32> to vector<2x32xf32>
    %777 = arith.mulf %775, %732 : vector<2x32xf32>
    %778 = arith.mulf %774, %773 : vector<2x32xf32>
    %779 = arith.addf %777, %778 : vector<2x32xf32>
    %780 = math.tanh %779 : vector<2x32xf32>
    %781 = arith.mulf %776, %780 : vector<2x32xf32>
    %c6_256 = arith.constant 6 : index
    %c0_257 = arith.constant 0 : index
    %782 = vector.load %arg0[%c6_256, %c0_257] : memref<16x32xf32, #tpu.memory_space<vmem>>, vector<2x32xf32>
    %783 = arith.subf %781, %729 : vector<2x32xf32>
    %784 = arith.mulf %782, %783 : vector<2x32xf32>
    %785 = arith.addf %729, %784 : vector<2x32xf32>
    %786 = arith.subf %779, %732 : vector<2x32xf32>
    %787 = arith.mulf %782, %786 : vector<2x32xf32>
    %788 = arith.addf %732, %787 : vector<2x32xf32>
    %c6_258 = arith.constant 6 : index
    %c32_259 = arith.constant 32 : index
    %789 = vector.load %arg18[%c6_258, %c32_259] : memref<18x64xf32, #tpu.memory_space<vmem>>, vector<2x32xf32>
    tpu.vector_store %arg18[%c6_258, %c32_259], %781 {strides = array<i32>} : memref<18x64xf32, #tpu.memory_space<vmem>>, vector<2x32xf32>,
    %c10_260 = arith.constant 10 : index
    %c0_261 = arith.constant 0 : index
    %790 = vector.load %arg17[%c10_260, %c0_261] : memref<16x256xf32, #tpu.memory_space<vmem>>, vector<2x128xf32>
    %791 = arith.truncf %757 : vector<2x32xf32> to vector<2x32xbf16>
    %cst_262 = arith.constant dense<0.000000e+00> : vector<2x128xf32>
    %792 = tpu.matmul %791, %504, %cst_262 {dimension_numbers = #tpu.dot_dimension_numbers<[1], [0], [0], [1], [0, 0, 1, 1], [], []>} : vector<2x32xbf16>, vector<32x128xbf16>, vector<2x128xf32> -> vector<2x128xf32>
    %793 = arith.addf %790, %792 : vector<2x128xf32>
    %794 = vector.extract_strided_slice %793 {offsets = [0, 0], sizes = [2, 96], strides = [1, 1]} : vector<2x128xf32> to vector<2x96xf32>
    %795 = arith.negf %794 : vector<2x96xf32>
    %796 = math.exp %795 : vector<2x96xf32>
    %cst_263 = arith.constant 1.000000e+00 : f32
    %797 = vector.broadcast %cst_263 : f32 to vector<2x96xf32>
    %798 = arith.addf %797, %796 : vector<2x96xf32>
    %799 = arith.divf %797, %798 : vector<2x96xf32>
    %800 = vector.extract_strided_slice %793 {offsets = [0, 96], sizes = [2, 32], strides = [1, 1]} : vector<2x128xf32> to vector<2x32xf32>
    %801 = math.tanh %800 : vector<2x32xf32>
    %802 = vector.extract_strided_slice %799 {offsets = [0, 0], sizes = [2, 32], strides = [1, 1]} : vector<2x96xf32> to vector<2x32xf32>
    %803 = vector.extract_strided_slice %799 {offsets = [0, 32], sizes = [2, 32], strides = [1, 1]} : vector<2x96xf32> to vector<2x32xf32>
    %804 = vector.extract_strided_slice %799 {offsets = [0, 64], sizes = [2, 32], strides = [1, 1]} : vector<2x96xf32> to vector<2x32xf32>
    %805 = arith.mulf %803, %760 : vector<2x32xf32>
    %806 = arith.mulf %802, %801 : vector<2x32xf32>
    %807 = arith.addf %805, %806 : vector<2x32xf32>
    %808 = math.tanh %807 : vector<2x32xf32>
    %809 = arith.mulf %804, %808 : vector<2x32xf32>
    %c10_264 = arith.constant 10 : index
    %c0_265 = arith.constant 0 : index
    %810 = vector.load %arg0[%c10_264, %c0_265] : memref<16x32xf32, #tpu.memory_space<vmem>>, vector<2x32xf32>
    %811 = arith.subf %809, %757 : vector<2x32xf32>
    %812 = arith.mulf %810, %811 : vector<2x32xf32>
    %813 = arith.addf %757, %812 : vector<2x32xf32>
    %814 = arith.subf %807, %760 : vector<2x32xf32>
    %815 = arith.mulf %810, %814 : vector<2x32xf32>
    %816 = arith.addf %760, %815 : vector<2x32xf32>
    %c10_266 = arith.constant 10 : index
    %c0_267 = arith.constant 0 : index
    %817 = vector.load %arg18[%c10_266, %c0_267] : memref<18x64xf32, #tpu.memory_space<vmem>>, vector<2x32xf32>
    tpu.vector_store %arg18[%c10_266, %c0_267], %809 {strides = array<i32>} : memref<18x64xf32, #tpu.memory_space<vmem>>, vector<2x32xf32>,
    %c4_268 = arith.constant 4 : index
    %c128_269 = arith.constant 128 : index
    %818 = vector.load %arg17[%c4_268, %c128_269] : memref<16x256xf32, #tpu.memory_space<vmem>>, vector<2x128xf32>
    %819 = arith.truncf %785 : vector<2x32xf32> to vector<2x32xbf16>
    %cst_270 = arith.constant dense<0.000000e+00> : vector<2x128xf32>
    %820 = tpu.matmul %819, %505, %cst_270 {dimension_numbers = #tpu.dot_dimension_numbers<[1], [0], [0], [1], [0, 0, 1, 1], [], []>} : vector<2x32xbf16>, vector<32x128xbf16>, vector<2x128xf32> -> vector<2x128xf32>
    %821 = arith.addf %818, %820 : vector<2x128xf32>
    %822 = vector.extract_strided_slice %821 {offsets = [0, 0], sizes = [2, 96], strides = [1, 1]} : vector<2x128xf32> to vector<2x96xf32>
    %823 = arith.negf %822 : vector<2x96xf32>
    %824 = math.exp %823 : vector<2x96xf32>
    %cst_271 = arith.constant 1.000000e+00 : f32
    %825 = vector.broadcast %cst_271 : f32 to vector<2x96xf32>
    %826 = arith.addf %825, %824 : vector<2x96xf32>
    %827 = arith.divf %825, %826 : vector<2x96xf32>
    %828 = vector.extract_strided_slice %821 {offsets = [0, 96], sizes = [2, 32], strides = [1, 1]} : vector<2x128xf32> to vector<2x32xf32>
    %829 = math.tanh %828 : vector<2x32xf32>
    %830 = vector.extract_strided_slice %827 {offsets = [0, 0], sizes = [2, 32], strides = [1, 1]} : vector<2x96xf32> to vector<2x32xf32>
    %831 = vector.extract_strided_slice %827 {offsets = [0, 32], sizes = [2, 32], strides = [1, 1]} : vector<2x96xf32> to vector<2x32xf32>
    %832 = vector.extract_strided_slice %827 {offsets = [0, 64], sizes = [2, 32], strides = [1, 1]} : vector<2x96xf32> to vector<2x32xf32>
    %833 = arith.mulf %831, %788 : vector<2x32xf32>
    %834 = arith.mulf %830, %829 : vector<2x32xf32>
    %835 = arith.addf %833, %834 : vector<2x32xf32>
    %836 = math.tanh %835 : vector<2x32xf32>
    %837 = arith.mulf %832, %836 : vector<2x32xf32>
    %c4_272 = arith.constant 4 : index
    %c0_273 = arith.constant 0 : index
    %838 = vector.load %arg0[%c4_272, %c0_273] : memref<16x32xf32, #tpu.memory_space<vmem>>, vector<2x32xf32>
    %839 = arith.subf %837, %785 : vector<2x32xf32>
    %840 = arith.mulf %838, %839 : vector<2x32xf32>
    %841 = arith.addf %785, %840 : vector<2x32xf32>
    %842 = arith.subf %835, %788 : vector<2x32xf32>
    %843 = arith.mulf %838, %842 : vector<2x32xf32>
    %844 = arith.addf %788, %843 : vector<2x32xf32>
    %c4_274 = arith.constant 4 : index
    %c32_275 = arith.constant 32 : index
    %845 = vector.load %arg18[%c4_274, %c32_275] : memref<18x64xf32, #tpu.memory_space<vmem>>, vector<2x32xf32>
    tpu.vector_store %arg18[%c4_274, %c32_275], %837 {strides = array<i32>} : memref<18x64xf32, #tpu.memory_space<vmem>>, vector<2x32xf32>,
    %c12_276 = arith.constant 12 : index
    %c0_277 = arith.constant 0 : index
    %846 = vector.load %arg17[%c12_276, %c0_277] : memref<16x256xf32, #tpu.memory_space<vmem>>, vector<2x128xf32>
    %847 = arith.truncf %813 : vector<2x32xf32> to vector<2x32xbf16>
    %cst_278 = arith.constant dense<0.000000e+00> : vector<2x128xf32>
    %848 = tpu.matmul %847, %504, %cst_278 {dimension_numbers = #tpu.dot_dimension_numbers<[1], [0], [0], [1], [0, 0, 1, 1], [], []>} : vector<2x32xbf16>, vector<32x128xbf16>, vector<2x128xf32> -> vector<2x128xf32>
    %849 = arith.addf %846, %848 : vector<2x128xf32>
    %850 = vector.extract_strided_slice %849 {offsets = [0, 0], sizes = [2, 96], strides = [1, 1]} : vector<2x128xf32> to vector<2x96xf32>
    %851 = arith.negf %850 : vector<2x96xf32>
    %852 = math.exp %851 : vector<2x96xf32>
    %cst_279 = arith.constant 1.000000e+00 : f32
    %853 = vector.broadcast %cst_279 : f32 to vector<2x96xf32>
    %854 = arith.addf %853, %852 : vector<2x96xf32>
    %855 = arith.divf %853, %854 : vector<2x96xf32>
    %856 = vector.extract_strided_slice %849 {offsets = [0, 96], sizes = [2, 32], strides = [1, 1]} : vector<2x128xf32> to vector<2x32xf32>
    %857 = math.tanh %856 : vector<2x32xf32>
    %858 = vector.extract_strided_slice %855 {offsets = [0, 0], sizes = [2, 32], strides = [1, 1]} : vector<2x96xf32> to vector<2x32xf32>
    %859 = vector.extract_strided_slice %855 {offsets = [0, 32], sizes = [2, 32], strides = [1, 1]} : vector<2x96xf32> to vector<2x32xf32>
    %860 = vector.extract_strided_slice %855 {offsets = [0, 64], sizes = [2, 32], strides = [1, 1]} : vector<2x96xf32> to vector<2x32xf32>
    %861 = arith.mulf %859, %816 : vector<2x32xf32>
    %862 = arith.mulf %858, %857 : vector<2x32xf32>
    %863 = arith.addf %861, %862 : vector<2x32xf32>
    %864 = math.tanh %863 : vector<2x32xf32>
    %865 = arith.mulf %860, %864 : vector<2x32xf32>
    %c12_280 = arith.constant 12 : index
    %c0_281 = arith.constant 0 : index
    %866 = vector.load %arg0[%c12_280, %c0_281] : memref<16x32xf32, #tpu.memory_space<vmem>>, vector<2x32xf32>
    %867 = arith.subf %865, %813 : vector<2x32xf32>
    %868 = arith.mulf %866, %867 : vector<2x32xf32>
    %869 = arith.addf %813, %868 : vector<2x32xf32>
    %870 = arith.subf %863, %816 : vector<2x32xf32>
    %871 = arith.mulf %866, %870 : vector<2x32xf32>
    %872 = arith.addf %816, %871 : vector<2x32xf32>
    %c12_282 = arith.constant 12 : index
    %c0_283 = arith.constant 0 : index
    %873 = vector.load %arg18[%c12_282, %c0_283] : memref<18x64xf32, #tpu.memory_space<vmem>>, vector<2x32xf32>
    tpu.vector_store %arg18[%c12_282, %c0_283], %865 {strides = array<i32>} : memref<18x64xf32, #tpu.memory_space<vmem>>, vector<2x32xf32>,
    %c2_284 = arith.constant 2 : index
    %c128_285 = arith.constant 128 : index
    %874 = vector.load %arg17[%c2_284, %c128_285] : memref<16x256xf32, #tpu.memory_space<vmem>>, vector<2x128xf32>
    %875 = arith.truncf %841 : vector<2x32xf32> to vector<2x32xbf16>
    %cst_286 = arith.constant dense<0.000000e+00> : vector<2x128xf32>
    %876 = tpu.matmul %875, %505, %cst_286 {dimension_numbers = #tpu.dot_dimension_numbers<[1], [0], [0], [1], [0, 0, 1, 1], [], []>} : vector<2x32xbf16>, vector<32x128xbf16>, vector<2x128xf32> -> vector<2x128xf32>
    %877 = arith.addf %874, %876 : vector<2x128xf32>
    %878 = vector.extract_strided_slice %877 {offsets = [0, 0], sizes = [2, 96], strides = [1, 1]} : vector<2x128xf32> to vector<2x96xf32>
    %879 = arith.negf %878 : vector<2x96xf32>
    %880 = math.exp %879 : vector<2x96xf32>
    %cst_287 = arith.constant 1.000000e+00 : f32
    %881 = vector.broadcast %cst_287 : f32 to vector<2x96xf32>
    %882 = arith.addf %881, %880 : vector<2x96xf32>
    %883 = arith.divf %881, %882 : vector<2x96xf32>
    %884 = vector.extract_strided_slice %877 {offsets = [0, 96], sizes = [2, 32], strides = [1, 1]} : vector<2x128xf32> to vector<2x32xf32>
    %885 = math.tanh %884 : vector<2x32xf32>
    %886 = vector.extract_strided_slice %883 {offsets = [0, 0], sizes = [2, 32], strides = [1, 1]} : vector<2x96xf32> to vector<2x32xf32>
    %887 = vector.extract_strided_slice %883 {offsets = [0, 32], sizes = [2, 32], strides = [1, 1]} : vector<2x96xf32> to vector<2x32xf32>
    %888 = vector.extract_strided_slice %883 {offsets = [0, 64], sizes = [2, 32], strides = [1, 1]} : vector<2x96xf32> to vector<2x32xf32>
    %889 = arith.mulf %887, %844 : vector<2x32xf32>
    %890 = arith.mulf %886, %885 : vector<2x32xf32>
    %891 = arith.addf %889, %890 : vector<2x32xf32>
    %892 = math.tanh %891 : vector<2x32xf32>
    %893 = arith.mulf %888, %892 : vector<2x32xf32>
    %c2_288 = arith.constant 2 : index
    %c0_289 = arith.constant 0 : index
    %894 = vector.load %arg0[%c2_288, %c0_289] : memref<16x32xf32, #tpu.memory_space<vmem>>, vector<2x32xf32>
    %895 = arith.subf %893, %841 : vector<2x32xf32>
    %896 = arith.mulf %894, %895 : vector<2x32xf32>
    %897 = arith.addf %841, %896 : vector<2x32xf32>
    %898 = arith.subf %891, %844 : vector<2x32xf32>
    %899 = arith.mulf %894, %898 : vector<2x32xf32>
    %900 = arith.addf %844, %899 : vector<2x32xf32>
    %c2_290 = arith.constant 2 : index
    %c32_291 = arith.constant 32 : index
    %901 = vector.load %arg18[%c2_290, %c32_291] : memref<18x64xf32, #tpu.memory_space<vmem>>, vector<2x32xf32>
    tpu.vector_store %arg18[%c2_290, %c32_291], %893 {strides = array<i32>} : memref<18x64xf32, #tpu.memory_space<vmem>>, vector<2x32xf32>,
    %c14_292 = arith.constant 14 : index
    %c0_293 = arith.constant 0 : index
    %902 = vector.load %arg17[%c14_292, %c0_293] : memref<16x256xf32, #tpu.memory_space<vmem>>, vector<2x128xf32>
    %903 = arith.truncf %869 : vector<2x32xf32> to vector<2x32xbf16>
    %cst_294 = arith.constant dense<0.000000e+00> : vector<2x128xf32>
    %904 = tpu.matmul %903, %504, %cst_294 {dimension_numbers = #tpu.dot_dimension_numbers<[1], [0], [0], [1], [0, 0, 1, 1], [], []>} : vector<2x32xbf16>, vector<32x128xbf16>, vector<2x128xf32> -> vector<2x128xf32>
    %905 = arith.addf %902, %904 : vector<2x128xf32>
    %906 = vector.extract_strided_slice %905 {offsets = [0, 0], sizes = [2, 96], strides = [1, 1]} : vector<2x128xf32> to vector<2x96xf32>
    %907 = arith.negf %906 : vector<2x96xf32>
    %908 = math.exp %907 : vector<2x96xf32>
    %cst_295 = arith.constant 1.000000e+00 : f32
    %909 = vector.broadcast %cst_295 : f32 to vector<2x96xf32>
    %910 = arith.addf %909, %908 : vector<2x96xf32>
    %911 = arith.divf %909, %910 : vector<2x96xf32>
    %912 = vector.extract_strided_slice %905 {offsets = [0, 96], sizes = [2, 32], strides = [1, 1]} : vector<2x128xf32> to vector<2x32xf32>
    %913 = math.tanh %912 : vector<2x32xf32>
    %914 = vector.extract_strided_slice %911 {offsets = [0, 0], sizes = [2, 32], strides = [1, 1]} : vector<2x96xf32> to vector<2x32xf32>
    %915 = vector.extract_strided_slice %911 {offsets = [0, 32], sizes = [2, 32], strides = [1, 1]} : vector<2x96xf32> to vector<2x32xf32>
    %916 = vector.extract_strided_slice %911 {offsets = [0, 64], sizes = [2, 32], strides = [1, 1]} : vector<2x96xf32> to vector<2x32xf32>
    %917 = arith.mulf %915, %872 : vector<2x32xf32>
    %918 = arith.mulf %914, %913 : vector<2x32xf32>
    %919 = arith.addf %917, %918 : vector<2x32xf32>
    %920 = math.tanh %919 : vector<2x32xf32>
    %921 = arith.mulf %916, %920 : vector<2x32xf32>
    %c14_296 = arith.constant 14 : index
    %c0_297 = arith.constant 0 : index
    %922 = vector.load %arg0[%c14_296, %c0_297] : memref<16x32xf32, #tpu.memory_space<vmem>>, vector<2x32xf32>
    %923 = arith.subf %921, %869 : vector<2x32xf32>
    %924 = arith.mulf %922, %923 : vector<2x32xf32>
    %925 = arith.addf %869, %924 : vector<2x32xf32>
    %926 = arith.subf %919, %872 : vector<2x32xf32>
    %927 = arith.mulf %922, %926 : vector<2x32xf32>
    %928 = arith.addf %872, %927 : vector<2x32xf32>
    %c14_298 = arith.constant 14 : index
    %c0_299 = arith.constant 0 : index
    %929 = vector.load %arg18[%c14_298, %c0_299] : memref<18x64xf32, #tpu.memory_space<vmem>>, vector<2x32xf32>
    tpu.vector_store %arg18[%c14_298, %c0_299], %921 {strides = array<i32>} : memref<18x64xf32, #tpu.memory_space<vmem>>, vector<2x32xf32>,
    %c0_300 = arith.constant 0 : index
    %c128_301 = arith.constant 128 : index
    %930 = vector.load %arg17[%c0_300, %c128_301] : memref<16x256xf32, #tpu.memory_space<vmem>>, vector<2x128xf32>
    %931 = arith.truncf %897 : vector<2x32xf32> to vector<2x32xbf16>
    %cst_302 = arith.constant dense<0.000000e+00> : vector<2x128xf32>
    %932 = tpu.matmul %931, %505, %cst_302 {dimension_numbers = #tpu.dot_dimension_numbers<[1], [0], [0], [1], [0, 0, 1, 1], [], []>} : vector<2x32xbf16>, vector<32x128xbf16>, vector<2x128xf32> -> vector<2x128xf32>
    %933 = arith.addf %930, %932 : vector<2x128xf32>
    %934 = vector.extract_strided_slice %933 {offsets = [0, 0], sizes = [2, 96], strides = [1, 1]} : vector<2x128xf32> to vector<2x96xf32>
    %935 = arith.negf %934 : vector<2x96xf32>
    %936 = math.exp %935 : vector<2x96xf32>
    %cst_303 = arith.constant 1.000000e+00 : f32
    %937 = vector.broadcast %cst_303 : f32 to vector<2x96xf32>
    %938 = arith.addf %937, %936 : vector<2x96xf32>
    %939 = arith.divf %937, %938 : vector<2x96xf32>
    %940 = vector.extract_strided_slice %933 {offsets = [0, 96], sizes = [2, 32], strides = [1, 1]} : vector<2x128xf32> to vector<2x32xf32>
    %941 = math.tanh %940 : vector<2x32xf32>
    %942 = vector.extract_strided_slice %939 {offsets = [0, 0], sizes = [2, 32], strides = [1, 1]} : vector<2x96xf32> to vector<2x32xf32>
    %943 = vector.extract_strided_slice %939 {offsets = [0, 32], sizes = [2, 32], strides = [1, 1]} : vector<2x96xf32> to vector<2x32xf32>
    %944 = vector.extract_strided_slice %939 {offsets = [0, 64], sizes = [2, 32], strides = [1, 1]} : vector<2x96xf32> to vector<2x32xf32>
    %945 = arith.mulf %943, %900 : vector<2x32xf32>
    %946 = arith.mulf %942, %941 : vector<2x32xf32>
    %947 = arith.addf %945, %946 : vector<2x32xf32>
    %948 = math.tanh %947 : vector<2x32xf32>
    %949 = arith.mulf %944, %948 : vector<2x32xf32>
    %c0_304 = arith.constant 0 : index
    %c0_305 = arith.constant 0 : index
    %950 = vector.load %arg0[%c0_304, %c0_305] : memref<16x32xf32, #tpu.memory_space<vmem>>, vector<2x32xf32>
    %951 = arith.subf %949, %897 : vector<2x32xf32>
    %952 = arith.mulf %950, %951 : vector<2x32xf32>
    %953 = arith.addf %897, %952 : vector<2x32xf32>
    %954 = arith.subf %947, %900 : vector<2x32xf32>
    %955 = arith.mulf %950, %954 : vector<2x32xf32>
    %956 = arith.addf %900, %955 : vector<2x32xf32>
    %c0_306 = arith.constant 0 : index
    %c32_307 = arith.constant 32 : index
    %957 = vector.load %arg18[%c0_306, %c32_307] : memref<18x64xf32, #tpu.memory_space<vmem>>, vector<2x32xf32>
    tpu.vector_store %arg18[%c0_306, %c32_307], %949 {strides = array<i32>} : memref<18x64xf32, #tpu.memory_space<vmem>>, vector<2x32xf32>,
    %c16_308 = arith.constant 16 : index
    %c0_309 = arith.constant 0 : index
    %958 = vector.load %arg18[%c16_308, %c0_309] : memref<18x64xf32, #tpu.memory_space<vmem>>, vector<2x32xf32>
    tpu.vector_store %arg18[%c16_308, %c0_309], %925 {strides = array<i32>} : memref<18x64xf32, #tpu.memory_space<vmem>>, vector<2x32xf32>,
    %c16_310 = arith.constant 16 : index
    %c32_311 = arith.constant 32 : index
    %959 = vector.load %arg18[%c16_310, %c32_311] : memref<18x64xf32, #tpu.memory_space<vmem>>, vector<2x32xf32>
    tpu.vector_store %arg18[%c16_310, %c32_311], %953 {strides = array<i32>} : memref<18x64xf32, #tpu.memory_space<vmem>>, vector<2x32xf32>,
    %c0_312 = arith.constant 0 : index
    %c0_313 = arith.constant 0 : index
    %960 = vector.load %arg18[%c0_312, %c0_313] : memref<18x64xf32, #tpu.memory_space<vmem>>, vector<18x64xf32>
    %961 = arith.truncf %960 : vector<18x64xf32> to vector<18x64xbf16>
    %c0_314 = arith.constant 0 : index
    %c0_315 = arith.constant 0 : index
    %962 = vector.load %arg11[%c0_314, %c0_315] : memref<64x32xbf16, #tpu.memory_space<vmem>>, vector<64x32xbf16>
    %cst_316 = arith.constant dense<0.000000e+00> : vector<18x32xf32>
    %963 = tpu.matmul %961, %962, %cst_316 {dimension_numbers = #tpu.dot_dimension_numbers<[1], [0], [0], [1], [0, 0, 1, 1], [], []>} : vector<18x64xbf16>, vector<64x32xbf16>, vector<18x32xf32> -> vector<18x32xf32>
    %964 = vector.extract_strided_slice %963 {offsets = [0, 0], sizes = [16, 32], strides = [1, 1]} : vector<18x32xf32> to vector<16x32xf32>
    %c0_317 = arith.constant 0 : index
    %c0_318 = arith.constant 0 : index
    %965 = vector.load %arg0[%c0_317, %c0_318] : memref<16x32xf32, #tpu.memory_space<vmem>>, vector<16x1xf32>
    %966 = vector.broadcast %965 : vector<16x1xf32> to vector<16x32xf32>
    %967 = arith.mulf %964, %966 : vector<16x32xf32>
    %c0_319 = arith.constant 0 : index
    %c0_320 = arith.constant 0 : index
    %968 = vector.load %arg14[%c0_319, %c0_320] : memref<16x32xf32, #tpu.memory_space<vmem>>, vector<16x32xf32>
    tpu.vector_store %arg14[%c0_319, %c0_320], %967 {strides = array<i32>} : memref<16x32xf32, #tpu.memory_space<vmem>>, vector<16x32xf32>,
    %969 = vector.extract_strided_slice %963 {offsets = [16, 0], sizes = [2, 32], strides = [1, 1]} : vector<18x32xf32> to vector<2x32xf32>
    %c1 = arith.constant 1 : index
    %c0_321 = arith.constant 0 : index
    %c0_322 = arith.constant 0 : index
    %970 = vector.load %arg15[%c1, %c0_321, %c0_322] : memref<2x2x32xf32, #tpu.memory_space<vmem>>, vector<1x2x32xf32>
    %971 = vector.shape_cast %970 : vector<1x2x32xf32> to vector<2x32xf32>
    %972 = vector.shape_cast %969 : vector<2x32xf32> to vector<1x2x32xf32>
    tpu.vector_store %arg15[%c1, %c0_321, %c0_322], %972 {strides = array<i32>} : memref<2x2x32xf32, #tpu.memory_space<vmem>>, vector<1x2x32xf32>,
    %973 = arith.truncf %928 : vector<2x32xf32> to vector<2x32xbf16>
    %cst_323 = arith.constant dense<0.000000e+00> : vector<2x16xf32>
    %974 = tpu.matmul %973, %0, %cst_323 {dimension_numbers = #tpu.dot_dimension_numbers<[1], [0], [0], [1], [0, 0, 1, 1], [], []>} : vector<2x32xbf16>, vector<32x16xbf16>, vector<2x16xf32> -> vector<2x16xf32>
    %975 = vector.broadcast %1 : vector<1x16xf32> to vector<2x16xf32>
    %976 = arith.addf %974, %975 : vector<2x16xf32>
    %cst_324 = arith.constant 0.000000e+00 : f32
    %977 = vector.broadcast %cst_324 : f32 to vector<2x16xf32>
    %978 = arith.maximumf %976, %977 : vector<2x16xf32>
    %c1_325 = arith.constant 1 : index
    %c0_326 = arith.constant 0 : index
    %c0_327 = arith.constant 0 : index
    %979 = vector.load %arg16[%c1_325, %c0_326, %c0_327] : memref<2x2x32xf32, #tpu.memory_space<vmem>>, vector<1x2x16xf32>
    %980 = vector.shape_cast %979 : vector<1x2x16xf32> to vector<2x16xf32>
    %981 = vector.shape_cast %978 : vector<2x16xf32> to vector<1x2x16xf32>
    tpu.vector_store %arg16[%c1_325, %c0_326, %c0_327], %981 {strides = array<i32>} : memref<2x2x32xf32, #tpu.memory_space<vmem>>, vector<1x2x16xf32>,
    %982 = arith.truncf %956 : vector<2x32xf32> to vector<2x32xbf16>
    %cst_328 = arith.constant dense<0.000000e+00> : vector<2x16xf32>
    %983 = tpu.matmul %982, %0, %cst_328 {dimension_numbers = #tpu.dot_dimension_numbers<[1], [0], [0], [1], [0, 0, 1, 1], [], []>} : vector<2x32xbf16>, vector<32x16xbf16>, vector<2x16xf32> -> vector<2x16xf32>
    %984 = vector.broadcast %1 : vector<1x16xf32> to vector<2x16xf32>
    %985 = arith.addf %983, %984 : vector<2x16xf32>
    %cst_329 = arith.constant 0.000000e+00 : f32
    %986 = vector.broadcast %cst_329 : f32 to vector<2x16xf32>
    %987 = arith.maximumf %985, %986 : vector<2x16xf32>
    %c1_330 = arith.constant 1 : index
    %c0_331 = arith.constant 0 : index
    %c16_332 = arith.constant 16 : index
    %988 = vector.load %arg16[%c1_330, %c0_331, %c16_332] : memref<2x2x32xf32, #tpu.memory_space<vmem>>, vector<1x2x16xf32>
    %989 = vector.shape_cast %988 : vector<1x2x16xf32> to vector<2x16xf32>
    %990 = vector.shape_cast %987 : vector<2x16xf32> to vector<1x2x16xf32>
    tpu.vector_store %arg16[%c1_330, %c0_331, %c16_332], %990 {strides = array<i32>} : memref<2x2x32xf32, #tpu.memory_space<vmem>>, vector<1x2x16xf32>,
    return
  }
}

</mosaic_0001>

<llo_original>
// kernel: encoder1_forward.1
$region0: #{encoder1_forward.1}
  #allocation0 [shape = 'u32[]', space=smem, size = 0x4, offset = 0x4, fixed_abs, tag = 'smem constant byte address 0x4 - core index']
  #allocation1 [shape = 'u32[72,128]{1,0:T(1,128)}', space=vmem, size = 0x9000, scoped, tag = 'internal scratch']
  #allocation2 [shape = 'f32[16,256]{1,0:T(8,128)}', space=vmem, size = 0x4000, scoped, tag = 'scratch operand']
  #allocation3 [shape = 'f32[18,64]{1,0:T(8,128)}', space=vmem, size = 0x3000, scoped, tag = 'scratch operand']
  #allocation4 [shape = 'bf16[16,32]{1,0:T(8,128)(2,1)}', space=vmem, size = 0x1000, scoped, tag = 'scratch operand']
  %s0 = inlined_call_operand.vmem [shape: f32[16,32], index: 0, kind: input, shape index: {}]
  %s1 = inlined_call_operand.vmem [shape: bf16[16,32], index: 1, kind: input, shape index: {}]
  %s2 = inlined_call_operand.vmem [shape: bf16[32,256], index: 2, kind: input, shape index: {}]
  %s3 = inlined_call_operand.vmem [shape: f32[1,256], index: 3, kind: input, shape index: {}]
  %s4 = inlined_call_operand.vmem [shape: bf16[32,128], index: 4, kind: input, shape index: {}]
  %s5 = inlined_call_operand.vmem [shape: bf16[32,128], index: 5, kind: input, shape index: {}]
  %s6 = inlined_call_operand.vmem [shape: bf16[64,32], index: 6, kind: input, shape index: {}]
  %s7 = inlined_call_operand.vmem [shape: bf16[32,256], index: 7, kind: input, shape index: {}]
  %s8 = inlined_call_operand.vmem [shape: f32[1,256], index: 8, kind: input, shape index: {}]
  %s9 = inlined_call_operand.vmem [shape: bf16[32,128], index: 9, kind: input, shape index: {}]
  %s10 = inlined_call_operand.vmem [shape: bf16[32,128], index: 10, kind: input, shape index: {}]
  %s11 = inlined_call_operand.vmem [shape: bf16[64,32], index: 11, kind: input, shape index: {}]
  %s12 = inlined_call_operand.vmem [shape: bf16[32,16], index: 12, kind: input, shape index: {}]
  %s13 = inlined_call_operand.vmem [shape: f32[1,16], index: 13, kind: input, shape index: {}]
  %s14 = inlined_call_operand.vmem [shape: f32[16,32], index: 14, kind: output, shape index: {0}]
  %s15 = inlined_call_operand.hbm [shape: f32[2,2,32], index: 15, kind: output, shape index: {1}]
  %s16 = inlined_call_operand.hbm [shape: f32[2,2,32], index: 16, kind: output, shape index: {2}]
  %17 = xla_tuple %s14, %s15, %s16
  %s18 = sld [smem:[#allocation0]]
  $region82: #{encoder1_forward.1} parent=0
    _
  %s20 = ssub.s32 1, %s18
  %s21 = scalar_select 0, %s20, %s18
  $region1: #{encoder1_forward.1} parent=0
    #allocation5 [shape = 'u8[2048]{0}', space=vmem, size = 0x800, scoped, tag = 'output window, operand 1, single buffered']
    #allocation6 [shape = 's32[1]{0}', space=sflag, size = 0x4, scoped, tag = 'scoped memory for encoder1_forward.1']
    #allocation7 [shape = 'u8[2048]{0}', space=vmem, size = 0x800, scoped, tag = 'output window, operand 2, single buffered']
    #allocation8 [shape = 's32[1]{0}', space=sflag, size = 0x4, scoped, tag = 'scoped memory for encoder1_forward.1']
    %22 = vsyncpa [#allocation6], 0
    %23 = vsyncpa [#allocation8], 0
    // Predicated region
    $region2: #{encoder1_forward.1} parent=1 // pred_check
      _
    $region3: #{encoder1_forward.1} parent=1 // pred_check_branch
      %25 = sbr.rel (0) target = $region5
    $region4: #{encoder1_forward.1} parent=1 // pred_region
      _
    $region5: #{encoder1_forward.1} parent=1 // pred_fallthru
      _
    // Predicated region
    $region6: #{encoder1_forward.1} parent=1 // pred_check
      _
    $region7: #{encoder1_forward.1} parent=1 // pred_check_branch
      %27 = sbr.rel (0) target = $region9
    $region8: #{encoder1_forward.1} parent=1 // pred_region
      _
    $region9: #{encoder1_forward.1} parent=1 // pred_fallthru
      _
    // Predicated region
    $region10: #{encoder1_forward.1} parent=1 // pred_check
      _
    $region11: #{encoder1_forward.1} parent=1 // pred_check_branch
      %29 = sbr.rel (0) target = $region13
    $region12: #{encoder1_forward.1} parent=1 // pred_region
      _
    $region13: #{encoder1_forward.1} parent=1 // pred_fallthru
      _
    // Predicated region
    $region14: #{encoder1_forward.1} parent=1 // pred_check
      _
    $region15: #{encoder1_forward.1} parent=1 // pred_check_branch
      %31 = sbr.rel (0) target = $region17
    $region16: #{encoder1_forward.1} parent=1 // pred_region
      _
    $region17: #{encoder1_forward.1} parent=1 // pred_fallthru
      _
    // Predicated region
    $region18: #{encoder1_forward.1} parent=1 // pred_check
      _
    $region19: #{encoder1_forward.1} parent=1 // pred_check_branch
      %33 = sbr.rel (0) target = $region21
    $region20: #{encoder1_forward.1} parent=1 // pred_region
      _
    $region21: #{encoder1_forward.1} parent=1 // pred_fallthru
      _
    // Predicated region
    $region22: #{encoder1_forward.1} parent=1 // pred_check
      _
    $region23: #{encoder1_forward.1} parent=1 // pred_check_branch
      %35 = sbr.rel (0) target = $region25
    $region24: #{encoder1_forward.1} parent=1 // pred_region
      _
    $region25: #{encoder1_forward.1} parent=1 // pred_fallthru
      _
    // Predicated region
    $region26: #{encoder1_forward.1} parent=1 // pred_check
      _
    $region27: #{encoder1_forward.1} parent=1 // pred_check_branch
      %37 = sbr.rel (0) target = $region29
    $region28: #{encoder1_forward.1} parent=1 // pred_region
      _
    $region29: #{encoder1_forward.1} parent=1 // pred_fallthru
      _
    // Predicated region
    $region30: #{encoder1_forward.1} parent=1 // pred_check
      _
    $region31: #{encoder1_forward.1} parent=1 // pred_check_branch
      %39 = sbr.rel (0) target = $region33
    $region32: #{encoder1_forward.1} parent=1 // pred_region
      _
    $region33: #{encoder1_forward.1} parent=1 // pred_fallthru
      _
    // Predicated region
    $region34: #{encoder1_forward.1} parent=1 // pred_check
      _
    $region35: #{encoder1_forward.1} parent=1 // pred_check_branch
      %41 = sbr.rel (0) target = $region37
    $region36: #{encoder1_forward.1} parent=1 // pred_region
      _
    $region37: #{encoder1_forward.1} parent=1 // pred_fallthru
      _
    // Predicated region
    $region38: #{encoder1_forward.1} parent=1 // pred_check
      _
    $region39: #{encoder1_forward.1} parent=1 // pred_check_branch
      %43 = sbr.rel (0) target = $region41
    $region40: #{encoder1_forward.1} parent=1 // pred_region
      _
    $region41: #{encoder1_forward.1} parent=1 // pred_fallthru
      _
    // Predicated region
    $region42: #{encoder1_forward.1} parent=1 // pred_check
      _
    $region43: #{encoder1_forward.1} parent=1 // pred_check_branch
      %45 = sbr.rel (0) target = $region45
    $region44: #{encoder1_forward.1} parent=1 // pred_region
      _
    $region45: #{encoder1_forward.1} parent=1 // pred_fallthru
      _
    // Predicated region
    $region46: #{encoder1_forward.1} parent=1 // pred_check
      _
    $region47: #{encoder1_forward.1} parent=1 // pred_check_branch
      %47 = sbr.rel (0) target = $region49
    $region48: #{encoder1_forward.1} parent=1 // pred_region
      _
    $region49: #{encoder1_forward.1} parent=1 // pred_fallthru
      _
    // Predicated region
    $region50: #{encoder1_forward.1} parent=1 // pred_check
      _
    $region51: #{encoder1_forward.1} parent=1 // pred_check_branch
      %49 = sbr.rel (0) target = $region53
    $region52: #{encoder1_forward.1} parent=1 // pred_region
      _
    $region53: #{encoder1_forward.1} parent=1 // pred_fallthru
      _
    // Predicated region
    $region54: #{encoder1_forward.1} parent=1 // pred_check
      _
    $region55: #{encoder1_forward.1} parent=1 // pred_check_branch
      %51 = sbr.rel (0) target = $region57
    $region56: #{encoder1_forward.1} parent=1 // pred_region
      _
    $region57: #{encoder1_forward.1} parent=1 // pred_fallthru
      _
    %v53 = vld [vmem:[%s12] sm:$0xf]
    %v54 = vld [vmem:[%s12 + $0x4] sm:$0xf]
    %v55 = vld [vmem:[%s12 + $0x8] sm:$0xf]
    %v56 = vld [vmem:[%s12 + $0xc] sm:$0xf]
    %v57 = vld [vmem:[%s13] sm:$0x1]
    %v58 = vld [vmem:[%s1] sm:$0xf]
    %v59 = vld [vmem:[%s1 + $0x4] sm:$0xf]
    %v60 = vld [vmem:[%s2] sm:$0xff]
    %v61 = vld [vmem:[%s2 + $0x8] sm:$0xff]
    %v62 = vld [vmem:[%s2 + $0x10] sm:$0xff]
    %v63 = vld [vmem:[%s2 + $0x18] sm:$0xff]
    %v64 = vld [vmem:[%s3] sm:$0x3]
    %v66 = vperm.slane %v64, 0
    %v67 = vperm.slane %v64, 1
    %v72 = vunpack.c.l.b16 %v58
    %v73 = vunpack.c.l.b16 %v59
    %v74 = vpack.c.b16 %v73, %v72
    %v79 = vunpack.c.l.b16 %v60
    %v80 = vunpack.c.h.b16 %v60
    %v81 = vunpack.c.l.b16 %v61
    %v82 = vunpack.c.h.b16 %v61
    %v83 = vunpack.c.l.b16 %v62
    %v84 = vunpack.c.h.b16 %v62
    %v85 = vunpack.c.l.b16 %v63
    %v86 = vunpack.c.h.b16 %v63
    %v87 = vpack.c.b16 %v81, %v79
    %v88 = vpack.c.b16 %v82, %v80
    %v89 = vpack.c.b16 %v85, %v83
    %v90 = vpack.c.b16 %v86, %v84
    %vm95 = vcmask 261120
    %v97 = vsel %vm95, %v74, 0
    %99 = vmatpush.bf16.msra.mxu0 0
    %100 = vmatpush.bf16.msra.mxu0 0
    %101 = vmatpush.bf16.msra.mxu0 0
    %102 = vmatpush.bf16.msra.mxu0 0
    %103 = vmatpush.bf16.msra.mxu0 0
    %104 = vmatpush.bf16.msra.mxu0 0
    %105 = vmatpush.bf16.msra.mxu0 %v89
    %106 = vmatpush.bf16.msra.mxu0 %v87
    %107 = vmatmul.bf16.gmra.mxu0 %v97
    %v108 = vpop.f32.mrf.mxu0
    %v109 = vadd.f32 %v66, %v108
    %v110 = vpop.f32.mrf.mxu0
    %v111 = vadd.f32 %v66, %v110
    %112 = vdwg.mxu0
    %113 = vmatpush.bf16.msra.mxu0 0
    %114 = vmatpush.bf16.msra.mxu0 0
    %115 = vmatpush.bf16.msra.mxu0 0
    %116 = vmatpush.bf16.msra.mxu0 0
    %117 = vmatpush.bf16.msra.mxu0 0
    %118 = vmatpush.bf16.msra.mxu0 0
    %119 = vmatpush.bf16.msra.mxu0 %v90
    %120 = vmatpush.bf16.msra.mxu0 %v88
    %121 = vmatmul.bf16.gmra.mxu0 %v97
    %v122 = vpop.f32.mrf.mxu0
    %v123 = vadd.f32 %v67, %v122
    %v124 = vpop.f32.mrf.mxu0
    %v125 = vadd.f32 %v67, %v124
    %126 = vdwg.mxu0
    %127 = vst [vmem:[#allocation2] sm:$0xff] %v109
    %128 = vst [vmem:[#allocation2 + $0x8] sm:$0xff] %v123
    %129 = vst [vmem:[#allocation2 + $0x10] sm:$0xff] %v111
    %130 = vst [vmem:[#allocation2 + $0x18] sm:$0xff] %v125
    %v131 = vld [vmem:[%s4] sm:$0xf]
    %v132 = vld [vmem:[%s4 + $0x4] sm:$0xf]
    %v133 = vld [vmem:[%s4 + $0x8] sm:$0xf]
    %v134 = vld [vmem:[%s4 + $0xc] sm:$0xf]
    %v135 = vld [vmem:[%s5] sm:$0xf]
    %v136 = vld [vmem:[%s5 + $0x4] sm:$0xf]
    %v137 = vld [vmem:[%s5 + $0x8] sm:$0xf]
    %v138 = vld [vmem:[%s5 + $0xc] sm:$0xf]
    %v139 = vld [vmem:[#allocation2] sm:$0x3]
    %v144 = vunpack.c.l.b16 %v131
    %v145 = vunpack.c.l.b16 %v132
    %v146 = vunpack.c.l.b16 %v133
    %v147 = vunpack.c.l.b16 %v134
    %v148 = vpack.c.b16 %v145, %v144
    %v149 = vpack.c.b16 %v147, %v146
    %v153 = vsel %vm95, 0, 0
    %155 = vmatpush.bf16.msra.mxu0 0
    %156 = vmatpush.bf16.msra.mxu0 0
    %157 = vmatpush.bf16.msra.mxu0 0
    %158 = vmatpush.bf16.msra.mxu0 0
    %159 = vmatpush.bf16.msra.mxu0 0
    %160 = vmatpush.bf16.msra.mxu0 0
    %161 = vmatpush.bf16.msra.mxu0 %v149
    %162 = vmatpush.bf16.msra.mxu0 %v148
    %163 = vmatmul.bf16.gmra.mxu0 %v153
    %v164 = vpop.f32.mrf.mxu0
    %v165 = vadd.f32 0.0, %v164
    %v166 = vpop.f32.mrf.mxu0
    %167 = vdwg.mxu0
    %v168 = vadd.f32 %v139, %v165
    %v169 = vxor.u32 %v168, 2147483648
    %v170 = vmul.f32 %v169, 1.442695
    %v171 = vpow.pop %v170
    %v172 = vadd.f32 %v171, 1.0
    %v173 = vrcp.pop %v172
    %v174 = vmul.f32 %v172, %v173
    %v175 = vsub.f32 1.0, %v174
    %v176 = vmul.f32 %v173, %v175
    %v177 = vadd.f32 %v173, %v176
    %vm178 = vweird.f32 %v172
    %vm179 = vweird.f32 %v173
    %vm180 = vmor %vm178, %vm179
    %v181 = vsel %vm180, %v173, %v177
    %v182 = vand.u32 2147483647, %v172
    %vm183 = vcmp.eq.f32.partialorder %v182, 8.507059e+37
    %v184 = vand.u32 %v172, 2147483648
    %v185 = vor.u32 1.1754944e-38, %v184
    %v186 = vsel %vm183, %v185, %v181
    %v187 = vmul.f32 1.0, %v186
    %v188 = vtanh.pop %v168
    %v189 = vmul.f32 %v187, 0.0
    %191 = vrot.lane.b32.xlu0 %v188, 32
    %v192 = vpop.permute.xlu0 %191
    %v194 = vmul.f32 %v187, %v192
    %196 = vrot.lane.b32.xlu0 %v194, 32
    %v197 = vpop.permute.xlu0 %196
    %v199 = vadd.f32 %v189, %v197
    %v200 = vtanh.pop %v199
    %202 = vrot.lane.b32.xlu0 %v200, 32
    %v203 = vpop.permute.xlu0 %202
    %v205 = vmul.f32 %v187, %v203
    %v206 = vld [vmem:[%s0] sm:$0x3]
    %208 = vrot.lane.b32.xlu0 %v205, 64
    %v209 = vpop.permute.xlu0 %208
    %v211 = vmul.f32 %v206, %v209
    %v212 = vadd.f32 %v211, 0.0
    %214 = vrot.lane.b32.xlu0 %v199, 96
    %v215 = vpop.permute.xlu0 %214
    %v217 = vmul.f32 %v206, %v215
    %v218 = vadd.f32 %v217, 0.0
    %vm219 = vcmask 254976
    %220 = vst.msk [vmem:[#allocation3] sm:$0x3] %vm219, %v209
    %v221 = vld [vmem:[#allocation2 + $0x18] sm:$0xc0]
    %v226 = vunpack.c.l.b16 %v135
    %v227 = vunpack.c.l.b16 %v136
    %v228 = vunpack.c.l.b16 %v137
    %v229 = vunpack.c.l.b16 %v138
    %v230 = vpack.c.b16 %v227, %v226
    %v231 = vpack.c.b16 %v229, %v228
    %234 = vmatpush.bf16.msra.mxu0 0
    %235 = vmatpush.bf16.msra.mxu0 0
    %236 = vmatpush.bf16.msra.mxu0 0
    %237 = vmatpush.bf16.msra.mxu0 0
    %238 = vmatpush.bf16.msra.mxu0 0
    %239 = vmatpush.bf16.msra.mxu0 0
    %240 = vmatpush.bf16.msra.mxu0 %v231
    %241 = vmatpush.bf16.msra.mxu0 %v230
    %242 = vmatmul.bf16.gmra.mxu0 %v153
    %v243 = vpop.f32.mrf.mxu0
    %v244 = vadd.f32 0.0, %v243
    %v245 = vpop.f32.mrf.mxu0
    %246 = vdwg.mxu0
    %v248 = vrot.slane %v244, 2
    %v250 = vadd.f32 %v221, %v248
    %v251 = vxor.u32 %v250, 2147483648
    %v252 = vmul.f32 %v251, 1.442695
    %v253 = vpow.pop %v252
    %v254 = vadd.f32 %v253, 1.0
    %v255 = vrcp.pop %v254
    %v256 = vmul.f32 %v254, %v255
    %v257 = vsub.f32 1.0, %v256
    %v258 = vmul.f32 %v255, %v257
    %v259 = vadd.f32 %v255, %v258
    %vm260 = vweird.f32 %v254
    %vm261 = vweird.f32 %v255
    %vm262 = vmor %vm260, %vm261
    %v263 = vsel %vm262, %v255, %v259
    %v264 = vand.u32 2147483647, %v254
    %vm265 = vcmp.eq.f32.partialorder %v264, 8.507059e+37
    %v266 = vand.u32 %v254, 2147483648
    %v267 = vor.u32 1.1754944e-38, %v266
    %v268 = vsel %vm265, %v267, %v263
    %v269 = vmul.f32 1.0, %v268
    %v270 = vtanh.pop %v250
    %v271 = vmul.f32 %v269, 0.0
    %273 = vrot.lane.b32.xlu0 %v270, 32
    %v274 = vpop.permute.xlu0 %273
    %v276 = vmul.f32 %v269, %v274
    %278 = vrot.lane.b32.xlu0 %v276, 32
    %v279 = vpop.permute.xlu0 %278
    %v281 = vadd.f32 %v271, %v279
    %v282 = vtanh.pop %v281
    %284 = vrot.lane.b32.xlu0 %v282, 32
    %v285 = vpop.permute.xlu0 %284
    %v287 = vmul.f32 %v269, %v285
    %v288 = vld [vmem:[%s0 + $0xe] sm:$0x3]
    %v290 = vrot.slane %v287, 6
    %291 = vrot.lane.b32.xlu0 %v290, 64
    %v292 = vpop.permute.xlu0 %291
    %v294 = vmul.f32 %v288, %v292
    %v295 = vadd.f32 %v294, 0.0
    %v297 = vrot.slane %v281, 6
    %298 = vrot.lane.b32.xlu0 %v297, 96
    %v299 = vpop.permute.xlu0 %298
    %v301 = vmul.f32 %v288, %v299
    %v302 = vadd.f32 %v301, 0.0
    %303 = vrot.lane.b32.xlu0 %v287, 96
    %v304 = vpop.permute.xlu0 %303
    %vm306 = vcmask 523526
    %307 = vst.msk [vmem:[#allocation3 + $0x8] sm:$0xc0] %vm306, %v304
    %v308 = vld [vmem:[#allocation2] sm:$0xc]
    %v309 = vpack.c.bf16 %v212, %v212
    %v311 = vsel %vm95, %v309, 0
    %313 = vmatpush.bf16.msra.mxu0 0
    %314 = vmatpush.bf16.msra.mxu0 0
    %315 = vmatpush.bf16.msra.mxu0 0
    %316 = vmatpush.bf16.msra.mxu0 0
    %317 = vmatpush.bf16.msra.mxu0 0
    %318 = vmatpush.bf16.msra.mxu0 0
    %319 = vmatpush.bf16.msra.mxu0 %v149
    %320 = vmatpush.bf16.msra.mxu0 %v148
    %321 = vmatmul.bf16.gmra.mxu0 %v311
    %v322 = vpop.f32.mrf.mxu0
    %v323 = vadd.f32 0.0, %v322
    %v324 = vpop.f32.mrf.mxu0
    %325 = vdwg.mxu0
    %v327 = vrot.slane %v323, 6
    %v329 = vadd.f32 %v308, %v327
    %v330 = vxor.u32 %v329, 2147483648
    %v331 = vmul.f32 %v330, 1.442695
    %v332 = vpow.pop %v331
    %v333 = vadd.f32 %v332, 1.0
    %v334 = vrcp.pop %v333
    %v335 = vmul.f32 %v333, %v334
    %v336 = vsub.f32 1.0, %v335
    %v337 = vmul.f32 %v334, %v336
    %v338 = vadd.f32 %v334, %v337
    %vm339 = vweird.f32 %v333
    %vm340 = vweird.f32 %v334
    %vm341 = vmor %vm339, %vm340
    %v342 = vsel %vm341, %v334, %v338
    %v343 = vand.u32 2147483647, %v333
    %vm344 = vcmp.eq.f32.partialorder %v343, 8.507059e+37
    %v345 = vand.u32 %v333, 2147483648
    %v346 = vor.u32 1.1754944e-38, %v345
    %v347 = vsel %vm344, %v346, %v342
    %v348 = vmul.f32 1.0, %v347
    %v349 = vtanh.pop %v329
    %v351 = vrot.slane %v218, 6
    %352 = vrot.lane.b32.xlu0 %v351, 32
    %v353 = vpop.permute.xlu0 %352
    %v355 = vmul.f32 %v348, %v353
    %357 = vrot.lane.b32.xlu0 %v349, 32
    %v358 = vpop.permute.xlu0 %357
    %v360 = vmul.f32 %v348, %v358
    %362 = vrot.lane.b32.xlu0 %v360, 32
    %v363 = vpop.permute.xlu0 %362
    %v365 = vadd.f32 %v355, %v363
    %v366 = vtanh.pop %v365
    %368 = vrot.lane.b32.xlu0 %v366, 32
    %v369 = vpop.permute.xlu0 %368
    %v371 = vmul.f32 %v348, %v369
    %v372 = vld [vmem:[%s0 + $0x2] sm:$0x3]
    %v374 = vrot.slane %v212, 6
    %375 = vrot.lane.b32.xlu0 %v374, 64
    %v376 = vpop.permute.xlu0 %375
    %v378 = vsub.f32 %v371, %v376
    %v380 = vrot.slane %v378, 2
    %381 = vrot.lane.b32.xlu0 %v380, 64
    %v382 = vpop.permute.xlu0 %381
    %v384 = vmul.f32 %v372, %v382
    %v385 = vadd.f32 %v212, %v384
    %v386 = vsub.f32 %v365, %v353
    %v388 = vrot.slane %v386, 2
    %389 = vrot.lane.b32.xlu0 %v388, 96
    %v390 = vpop.permute.xlu0 %389
    %v392 = vmul.f32 %v372, %v390
    %v393 = vadd.f32 %v218, %v392
    %395 = vrot.lane.b32.xlu0 %v371, 64
    %v396 = vpop.permute.xlu0 %395
    %vm398 = vcmask 257026
    %399 = vst.msk [vmem:[#allocation3] sm:$0xc] %vm398, %v396
    %v400 = vld [vmem:[#allocation2 + $0x18] sm:$0x30]
    %v401 = vpack.c.bf16 %v295, %v295
    %v403 = vsel %vm95, %v401, 0
    %405 = vmatpush.bf16.msra.mxu0 0
    %406 = vmatpush.bf16.msra.mxu0 0
    %407 = vmatpush.bf16.msra.mxu0 0
    %408 = vmatpush.bf16.msra.mxu0 0
    %409 = vmatpush.bf16.msra.mxu0 0
    %410 = vmatpush.bf16.msra.mxu0 0
    %411 = vmatpush.bf16.msra.mxu0 %v231
    %412 = vmatpush.bf16.msra.mxu0 %v230
    %413 = vmatmul.bf16.gmra.mxu0 %v403
    %v414 = vpop.f32.mrf.mxu0
    %v415 = vadd.f32 0.0, %v414
    %v416 = vpop.f32.mrf.mxu0
    %417 = vdwg.mxu0
    %v419 = vrot.slane %v415, 4
    %v421 = vadd.f32 %v400, %v419
    %v422 = vxor.u32 %v421, 2147483648
    %v423 = vmul.f32 %v422, 1.442695
    %v424 = vpow.pop %v423
    %v425 = vadd.f32 %v424, 1.0
    %v426 = vrcp.pop %v425
    %v427 = vmul.f32 %v425, %v426
    %v428 = vsub.f32 1.0, %v427
    %v429 = vmul.f32 %v426, %v428
    %v430 = vadd.f32 %v426, %v429
    %vm431 = vweird.f32 %v425
    %vm432 = vweird.f32 %v426
    %vm433 = vmor %vm431, %vm432
    %v434 = vsel %vm433, %v426, %v430
    %v435 = vand.u32 2147483647, %v425
    %vm436 = vcmp.eq.f32.partialorder %v435, 8.507059e+37
    %v437 = vand.u32 %v425, 2147483648
    %v438 = vor.u32 1.1754944e-38, %v437
    %v439 = vsel %vm436, %v438, %v434
    %v440 = vmul.f32 1.0, %v439
    %v441 = vtanh.pop %v421
    %v443 = vrot.slane %v302, 4
    %444 = vrot.lane.b32.xlu0 %v443, 32
    %v445 = vpop.permute.xlu0 %444
    %v447 = vmul.f32 %v440, %v445
    %449 = vrot.lane.b32.xlu0 %v441, 32
    %v450 = vpop.permute.xlu0 %449
    %v452 = vmul.f32 %v440, %v450
    %454 = vrot.lane.b32.xlu0 %v452, 32
    %v455 = vpop.permute.xlu0 %454
    %v457 = vadd.f32 %v447, %v455
    %v458 = vtanh.pop %v457
    %460 = vrot.lane.b32.xlu0 %v458, 32
    %v461 = vpop.permute.xlu0 %460
    %v463 = vmul.f32 %v440, %v461
    %v464 = vld [vmem:[%s0 + $0xc] sm:$0x3]
    %v466 = vrot.slane %v295, 4
    %467 = vrot.lane.b32.xlu0 %v466, 64
    %v468 = vpop.permute.xlu0 %467
    %v470 = vsub.f32 %v463, %v468
    %v472 = vrot.slane %v470, 4
    %473 = vrot.lane.b32.xlu0 %v472, 64
    %v474 = vpop.permute.xlu0 %473
    %v476 = vmul.f32 %v464, %v474
    %v477 = vadd.f32 %v295, %v476
    %v478 = vsub.f32 %v457, %v445
    %v480 = vrot.slane %v478, 4
    %481 = vrot.lane.b32.xlu0 %v480, 96
    %v482 = vpop.permute.xlu0 %481
    %v484 = vmul.f32 %v464, %v482
    %v485 = vadd.f32 %v302, %v484
    %487 = vrot.lane.b32.xlu0 %v463, 96
    %v488 = vpop.permute.xlu0 %487
    %vm490 = vcmask 521476
    %491 = vst.msk [vmem:[#allocation3 + $0x8] sm:$0x30] %vm490, %v488
    %v492 = vld [vmem:[#allocation2] sm:$0x30]
    %v493 = vpack.c.bf16 %v385, %v385
    %v495 = vsel %vm95, %v493, 0
    %497 = vmatpush.bf16.msra.mxu0 0
    %498 = vmatpush.bf16.msra.mxu0 0
    %499 = vmatpush.bf16.msra.mxu0 0
    %500 = vmatpush.bf16.msra.mxu0 0
    %501 = vmatpush.bf16.msra.mxu0 0
    %502 = vmatpush.bf16.msra.mxu0 0
    %503 = vmatpush.bf16.msra.mxu0 %v149
    %504 = vmatpush.bf16.msra.mxu0 %v148
    %505 = vmatmul.bf16.gmra.mxu0 %v495
    %v506 = vpop.f32.mrf.mxu0
    %v507 = vadd.f32 0.0, %v506
    %v508 = vpop.f32.mrf.mxu0
    %509 = vdwg.mxu0
    %v511 = vrot.slane %v507, 4
    %v513 = vadd.f32 %v492, %v511
    %v514 = vxor.u32 %v513, 2147483648
    %v515 = vmul.f32 %v514, 1.442695
    %v516 = vpow.pop %v515
    %v517 = vadd.f32 %v516, 1.0
    %v518 = vrcp.pop %v517
    %v519 = vmul.f32 %v517, %v518
    %v520 = vsub.f32 1.0, %v519
    %v521 = vmul.f32 %v518, %v520
    %v522 = vadd.f32 %v518, %v521
    %vm523 = vweird.f32 %v517
    %vm524 = vweird.f32 %v518
    %vm525 = vmor %vm523, %vm524
    %v526 = vsel %vm525, %v518, %v522
    %v527 = vand.u32 2147483647, %v517
    %vm528 = vcmp.eq.f32.partialorder %v527, 8.507059e+37
    %v529 = vand.u32 %v517, 2147483648
    %v530 = vor.u32 1.1754944e-38, %v529
    %v531 = vsel %vm528, %v530, %v526
    %v532 = vmul.f32 1.0, %v531
    %v533 = vtanh.pop %v513
    %v535 = vrot.slane %v393, 4
    %536 = vrot.lane.b32.xlu0 %v535, 32
    %v537 = vpop.permute.xlu0 %536
    %v539 = vmul.f32 %v532, %v537
    %541 = vrot.lane.b32.xlu0 %v533, 32
    %v542 = vpop.permute.xlu0 %541
    %v544 = vmul.f32 %v532, %v542
    %546 = vrot.lane.b32.xlu0 %v544, 32
    %v547 = vpop.permute.xlu0 %546
    %v549 = vadd.f32 %v539, %v547
    %v550 = vtanh.pop %v549
    %552 = vrot.lane.b32.xlu0 %v550, 32
    %v553 = vpop.permute.xlu0 %552
    %v555 = vmul.f32 %v532, %v553
    %v556 = vld [vmem:[%s0 + $0x4] sm:$0x3]
    %v558 = vrot.slane %v385, 4
    %559 = vrot.lane.b32.xlu0 %v558, 64
    %v560 = vpop.permute.xlu0 %559
    %v562 = vsub.f32 %v555, %v560
    %v564 = vrot.slane %v562, 4
    %565 = vrot.lane.b32.xlu0 %v564, 64
    %v566 = vpop.permute.xlu0 %565
    %v568 = vmul.f32 %v556, %v566
    %v569 = vadd.f32 %v385, %v568
    %v570 = vsub.f32 %v549, %v537
    %v572 = vrot.slane %v570, 4
    %573 = vrot.lane.b32.xlu0 %v572, 96
    %v574 = vpop.permute.xlu0 %573
    %v576 = vmul.f32 %v556, %v574
    %v577 = vadd.f32 %v393, %v576
    %579 = vrot.lane.b32.xlu0 %v555, 64
    %v580 = vpop.permute.xlu0 %579
    %vm582 = vcmask 259076
    %583 = vst.msk [vmem:[#allocation3] sm:$0x30] %vm582, %v580
    %v584 = vld [vmem:[#allocation2 + $0x18] sm:$0xc]
    %v585 = vpack.c.bf16 %v477, %v477
    %v587 = vsel %vm95, %v585, 0
    %589 = vmatpush.bf16.msra.mxu0 0
    %590 = vmatpush.bf16.msra.mxu0 0
    %591 = vmatpush.bf16.msra.mxu0 0
    %592 = vmatpush.bf16.msra.mxu0 0
    %593 = vmatpush.bf16.msra.mxu0 0
    %594 = vmatpush.bf16.msra.mxu0 0
    %595 = vmatpush.bf16.msra.mxu0 %v231
    %596 = vmatpush.bf16.msra.mxu0 %v230
    %597 = vmatmul.bf16.gmra.mxu0 %v587
    %v598 = vpop.f32.mrf.mxu0
    %v599 = vadd.f32 0.0, %v598
    %v600 = vpop.f32.mrf.mxu0
    %601 = vdwg.mxu0
    %v603 = vrot.slane %v599, 6
    %v605 = vadd.f32 %v584, %v603
    %v606 = vxor.u32 %v605, 2147483648
    %v607 = vmul.f32 %v606, 1.442695
    %v608 = vpow.pop %v607
    %v609 = vadd.f32 %v608, 1.0
    %v610 = vrcp.pop %v609
    %v611 = vmul.f32 %v609, %v610
    %v612 = vsub.f32 1.0, %v611
    %v613 = vmul.f32 %v610, %v612
    %v614 = vadd.f32 %v610, %v613
    %vm615 = vweird.f32 %v609
    %vm616 = vweird.f32 %v610
    %vm617 = vmor %vm615, %vm616
    %v618 = vsel %vm617, %v610, %v614
    %v619 = vand.u32 2147483647, %v609
    %vm620 = vcmp.eq.f32.partialorder %v619, 8.507059e+37
    %v621 = vand.u32 %v609, 2147483648
    %v622 = vor.u32 1.1754944e-38, %v621
    %v623 = vsel %vm620, %v622, %v618
    %v624 = vmul.f32 1.0, %v623
    %v625 = vtanh.pop %v605
    %v627 = vrot.slane %v485, 6
    %628 = vrot.lane.b32.xlu0 %v627, 32
    %v629 = vpop.permute.xlu0 %628
    %v631 = vmul.f32 %v624, %v629
    %633 = vrot.lane.b32.xlu0 %v625, 32
    %v634 = vpop.permute.xlu0 %633
    %v636 = vmul.f32 %v624, %v634
    %638 = vrot.lane.b32.xlu0 %v636, 32
    %v639 = vpop.permute.xlu0 %638
    %v641 = vadd.f32 %v631, %v639
    %v642 = vtanh.pop %v641
    %644 = vrot.lane.b32.xlu0 %v642, 32
    %v645 = vpop.permute.xlu0 %644
    %v647 = vmul.f32 %v624, %v645
    %v648 = vld [vmem:[%s0 + $0xa] sm:$0x3]
    %v650 = vrot.slane %v477, 6
    %651 = vrot.lane.b32.xlu0 %v650, 64
    %v652 = vpop.permute.xlu0 %651
    %v654 = vsub.f32 %v647, %v652
    %v656 = vrot.slane %v654, 2
    %657 = vrot.lane.b32.xlu0 %v656, 64
    %v658 = vpop.permute.xlu0 %657
    %v660 = vmul.f32 %v648, %v658
    %v661 = vadd.f32 %v477, %v660
    %v662 = vsub.f32 %v641, %v629
    %v664 = vrot.slane %v662, 2
    %665 = vrot.lane.b32.xlu0 %v664, 96
    %v666 = vpop.permute.xlu0 %665
    %v668 = vmul.f32 %v648, %v666
    %v669 = vadd.f32 %v485, %v668
    %671 = vrot.lane.b32.xlu0 %v647, 96
    %v672 = vpop.permute.xlu0 %671
    %vm674 = vcmask 519426
    %675 = vst.msk [vmem:[#allocation3 + $0x8] sm:$0xc] %vm674, %v672
    %v676 = vld [vmem:[#allocation2] sm:$0xc0]
    %v677 = vpack.c.bf16 %v569, %v569
    %v679 = vsel %vm95, %v677, 0
    %681 = vmatpush.bf16.msra.mxu0 0
    %682 = vmatpush.bf16.msra.mxu0 0
    %683 = vmatpush.bf16.msra.mxu0 0
    %684 = vmatpush.bf16.msra.mxu0 0
    %685 = vmatpush.bf16.msra.mxu0 0
    %686 = vmatpush.bf16.msra.mxu0 0
    %687 = vmatpush.bf16.msra.mxu0 %v149
    %688 = vmatpush.bf16.msra.mxu0 %v148
    %689 = vmatmul.bf16.gmra.mxu0 %v679
    %v690 = vpop.f32.mrf.mxu0
    %v691 = vadd.f32 0.0, %v690
    %v692 = vpop.f32.mrf.mxu0
    %693 = vdwg.mxu0
    %v695 = vrot.slane %v691, 2
    %v697 = vadd.f32 %v676, %v695
    %v698 = vxor.u32 %v697, 2147483648
    %v699 = vmul.f32 %v698, 1.442695
    %v700 = vpow.pop %v699
    %v701 = vadd.f32 %v700, 1.0
    %v702 = vrcp.pop %v701
    %v703 = vmul.f32 %v701, %v702
    %v704 = vsub.f32 1.0, %v703
    %v705 = vmul.f32 %v702, %v704
    %v706 = vadd.f32 %v702, %v705
    %vm707 = vweird.f32 %v701
    %vm708 = vweird.f32 %v702
    %vm709 = vmor %vm707, %vm708
    %v710 = vsel %vm709, %v702, %v706
    %v711 = vand.u32 2147483647, %v701
    %vm712 = vcmp.eq.f32.partialorder %v711, 8.507059e+37
    %v713 = vand.u32 %v701, 2147483648
    %v714 = vor.u32 1.1754944e-38, %v713
    %v715 = vsel %vm712, %v714, %v710
    %v716 = vmul.f32 1.0, %v715
    %v717 = vtanh.pop %v697
    %v719 = vrot.slane %v577, 2
    %720 = vrot.lane.b32.xlu0 %v719, 32
    %v721 = vpop.permute.xlu0 %720
    %v723 = vmul.f32 %v716, %v721
    %725 = vrot.lane.b32.xlu0 %v717, 32
    %v726 = vpop.permute.xlu0 %725
    %v728 = vmul.f32 %v716, %v726
    %730 = vrot.lane.b32.xlu0 %v728, 32
    %v731 = vpop.permute.xlu0 %730
    %v733 = vadd.f32 %v723, %v731
    %v734 = vtanh.pop %v733
    %736 = vrot.lane.b32.xlu0 %v734, 32
    %v737 = vpop.permute.xlu0 %736
    %v739 = vmul.f32 %v716, %v737
    %v740 = vld [vmem:[%s0 + $0x6] sm:$0x3]
    %v742 = vrot.slane %v569, 2
    %743 = vrot.lane.b32.xlu0 %v742, 64
    %v744 = vpop.permute.xlu0 %743
    %v746 = vsub.f32 %v739, %v744
    %v748 = vrot.slane %v746, 6
    %749 = vrot.lane.b32.xlu0 %v748, 64
    %v750 = vpop.permute.xlu0 %749
    %v752 = vmul.f32 %v740, %v750
    %v753 = vadd.f32 %v569, %v752
    %v754 = vsub.f32 %v733, %v721
    %v756 = vrot.slane %v754, 6
    %757 = vrot.lane.b32.xlu0 %v756, 96
    %v758 = vpop.permute.xlu0 %757
    %v760 = vmul.f32 %v740, %v758
    %v761 = vadd.f32 %v577, %v760
    %763 = vrot.lane.b32.xlu0 %v739, 64
    %v764 = vpop.permute.xlu0 %763
    %vm766 = vcmask 261126
    %767 = vst.msk [vmem:[#allocation3] sm:$0xc0] %vm766, %v764
    %v768 = vld [vmem:[#allocation2 + $0x18] sm:$0x3]
    %v769 = vpack.c.bf16 %v661, %v661
    %v771 = vsel %vm95, %v769, 0
    %773 = vmatpush.bf16.msra.mxu0 0
    %774 = vmatpush.bf16.msra.mxu0 0
    %775 = vmatpush.bf16.msra.mxu0 0
    %776 = vmatpush.bf16.msra.mxu0 0
    %777 = vmatpush.bf16.msra.mxu0 0
    %778 = vmatpush.bf16.msra.mxu0 0
    %779 = vmatpush.bf16.msra.mxu0 %v231
    %780 = vmatpush.bf16.msra.mxu0 %v230
    %781 = vmatmul.bf16.gmra.mxu0 %v771
    %v782 = vpop.f32.mrf.mxu0
    %v783 = vadd.f32 0.0, %v782
    %v784 = vpop.f32.mrf.mxu0
    %785 = vdwg.mxu0
    %v786 = vadd.f32 %v768, %v783
    %v787 = vxor.u32 %v786, 2147483648
    %v788 = vmul.f32 %v787, 1.442695
    %v789 = vpow.pop %v788
    %v790 = vadd.f32 %v789, 1.0
    %v791 = vrcp.pop %v790
    %v792 = vmul.f32 %v790, %v791
    %v793 = vsub.f32 1.0, %v792
    %v794 = vmul.f32 %v791, %v793
    %v795 = vadd.f32 %v791, %v794
    %vm796 = vweird.f32 %v790
    %vm797 = vweird.f32 %v791
    %vm798 = vmor %vm796, %vm797
    %v799 = vsel %vm798, %v791, %v795
    %v800 = vand.u32 2147483647, %v790
    %vm801 = vcmp.eq.f32.partialorder %v800, 8.507059e+37
    %v802 = vand.u32 %v790, 2147483648
    %v803 = vor.u32 1.1754944e-38, %v802
    %v804 = vsel %vm801, %v803, %v799
    %v805 = vmul.f32 1.0, %v804
    %v806 = vtanh.pop %v786
    %808 = vrot.lane.b32.xlu0 %v669, 32
    %v809 = vpop.permute.xlu0 %808
    %v811 = vmul.f32 %v805, %v809
    %813 = vrot.lane.b32.xlu0 %v806, 32
    %v814 = vpop.permute.xlu0 %813
    %v816 = vmul.f32 %v805, %v814
    %818 = vrot.lane.b32.xlu0 %v816, 32
    %v819 = vpop.permute.xlu0 %818
    %v821 = vadd.f32 %v811, %v819
    %v822 = vtanh.pop %v821
    %824 = vrot.lane.b32.xlu0 %v822, 32
    %v825 = vpop.permute.xlu0 %824
    %v827 = vmul.f32 %v805, %v825
    %v828 = vld [vmem:[%s0 + $0x8] sm:$0x3]
    %830 = vrot.lane.b32.xlu0 %v661, 64
    %v831 = vpop.permute.xlu0 %830
    %v833 = vsub.f32 %v827, %v831
    %835 = vrot.lane.b32.xlu0 %v833, 64
    %v836 = vpop.permute.xlu0 %835
    %v838 = vmul.f32 %v828, %v836
    %v839 = vadd.f32 %v661, %v838
    %v840 = vsub.f32 %v821, %v809
    %842 = vrot.lane.b32.xlu0 %v840, 96
    %v843 = vpop.permute.xlu0 %842
    %v845 = vmul.f32 %v828, %v843
    %v846 = vadd.f32 %v669, %v845
    %848 = vrot.lane.b32.xlu0 %v827, 96
    %v849 = vpop.permute.xlu0 %848
    %vm851 = vcmask 517376
    %852 = vst.msk [vmem:[#allocation3 + $0x8] sm:$0x3] %vm851, %v849
    %v853 = vld [vmem:[#allocation2 + $0x10] sm:$0x3]
    %v854 = vpack.c.bf16 %v753, %v753
    %v856 = vsel %vm95, %v854, 0
    %858 = vmatpush.bf16.msra.mxu0 0
    %859 = vmatpush.bf16.msra.mxu0 0
    %860 = vmatpush.bf16.msra.mxu0 0
    %861 = vmatpush.bf16.msra.mxu0 0
    %862 = vmatpush.bf16.msra.mxu0 0
    %863 = vmatpush.bf16.msra.mxu0 0
    %864 = vmatpush.bf16.msra.mxu0 %v149
    %865 = vmatpush.bf16.msra.mxu0 %v148
    %866 = vmatmul.bf16.gmra.mxu0 %v856
    %v867 = vpop.f32.mrf.mxu0
    %v868 = vadd.f32 0.0, %v867
    %v869 = vpop.f32.mrf.mxu0
    %870 = vdwg.mxu0
    %v871 = vadd.f32 %v853, %v868
    %v872 = vxor.u32 %v871, 2147483648
    %v873 = vmul.f32 %v872, 1.442695
    %v874 = vpow.pop %v873
    %v875 = vadd.f32 %v874, 1.0
    %v876 = vrcp.pop %v875
    %v877 = vmul.f32 %v875, %v876
    %v878 = vsub.f32 1.0, %v877
    %v879 = vmul.f32 %v876, %v878
    %v880 = vadd.f32 %v876, %v879
    %vm881 = vweird.f32 %v875
    %vm882 = vweird.f32 %v876
    %vm883 = vmor %vm881, %vm882
    %v884 = vsel %vm883, %v876, %v880
    %v885 = vand.u32 2147483647, %v875
    %vm886 = vcmp.eq.f32.partialorder %v885, 8.507059e+37
    %v887 = vand.u32 %v875, 2147483648
    %v888 = vor.u32 1.1754944e-38, %v887
    %v889 = vsel %vm886, %v888, %v884
    %v890 = vmul.f32 1.0, %v889
    %v891 = vtanh.pop %v871
    %893 = vrot.lane.b32.xlu0 %v761, 32
    %v894 = vpop.permute.xlu0 %893
    %v896 = vmul.f32 %v890, %v894
    %898 = vrot.lane.b32.xlu0 %v891, 32
    %v899 = vpop.permute.xlu0 %898
    %v901 = vmul.f32 %v890, %v899
    %903 = vrot.lane.b32.xlu0 %v901, 32
    %v904 = vpop.permute.xlu0 %903
    %v906 = vadd.f32 %v896, %v904
    %v907 = vtanh.pop %v906
    %909 = vrot.lane.b32.xlu0 %v907, 32
    %v910 = vpop.permute.xlu0 %909
    %v912 = vmul.f32 %v890, %v910
    %v913 = vld [vmem:[%s0 + $0x8] sm:$0x3]
    %915 = vrot.lane.b32.xlu0 %v753, 64
    %v916 = vpop.permute.xlu0 %915
    %v918 = vsub.f32 %v912, %v916
    %920 = vrot.lane.b32.xlu0 %v918, 64
    %v921 = vpop.permute.xlu0 %920
    %v923 = vmul.f32 %v913, %v921
    %v924 = vadd.f32 %v753, %v923
    %v925 = vsub.f32 %v906, %v894
    %927 = vrot.lane.b32.xlu0 %v925, 96
    %v928 = vpop.permute.xlu0 %927
    %v930 = vmul.f32 %v913, %v928
    %v931 = vadd.f32 %v761, %v930
    %933 = vrot.lane.b32.xlu0 %v912, 64
    %v934 = vpop.permute.xlu0 %933
    %936 = vst.msk [vmem:[#allocation3 + $0x8] sm:$0x3] %vm219, %v934
    %v937 = vld [vmem:[#allocation2 + $0x8] sm:$0xc0]
    %v938 = vpack.c.bf16 %v839, %v839
    %v940 = vsel %vm95, %v938, 0
    %942 = vmatpush.bf16.msra.mxu0 0
    %943 = vmatpush.bf16.msra.mxu0 0
    %944 = vmatpush.bf16.msra.mxu0 0
    %945 = vmatpush.bf16.msra.mxu0 0
    %946 = vmatpush.bf16.msra.mxu0 0
    %947 = vmatpush.bf16.msra.mxu0 0
    %948 = vmatpush.bf16.msra.mxu0 %v231
    %949 = vmatpush.bf16.msra.mxu0 %v230
    %950 = vmatmul.bf16.gmra.mxu0 %v940
    %v951 = vpop.f32.mrf.mxu0
    %v952 = vadd.f32 0.0, %v951
    %v953 = vpop.f32.mrf.mxu0
    %954 = vdwg.mxu0
    %v956 = vrot.slane %v952, 2
    %v958 = vadd.f32 %v937, %v956
    %v959 = vxor.u32 %v958, 2147483648
    %v960 = vmul.f32 %v959, 1.442695
    %v961 = vpow.pop %v960
    %v962 = vadd.f32 %v961, 1.0
    %v963 = vrcp.pop %v962
    %v964 = vmul.f32 %v962, %v963
    %v965 = vsub.f32 1.0, %v964
    %v966 = vmul.f32 %v963, %v965
    %v967 = vadd.f32 %v963, %v966
    %vm968 = vweird.f32 %v962
    %vm969 = vweird.f32 %v963
    %vm970 = vmor %vm968, %vm969
    %v971 = vsel %vm970, %v963, %v967
    %v972 = vand.u32 2147483647, %v962
    %vm973 = vcmp.eq.f32.partialorder %v972, 8.507059e+37
    %v974 = vand.u32 %v962, 2147483648
    %v975 = vor.u32 1.1754944e-38, %v974
    %v976 = vsel %vm973, %v975, %v971
    %v977 = vmul.f32 1.0, %v976
    %v978 = vtanh.pop %v958
    %v980 = vrot.slane %v846, 2
    %981 = vrot.lane.b32.xlu0 %v980, 32
    %v982 = vpop.permute.xlu0 %981
    %v984 = vmul.f32 %v977, %v982
    %986 = vrot.lane.b32.xlu0 %v978, 32
    %v987 = vpop.permute.xlu0 %986
    %v989 = vmul.f32 %v977, %v987
    %991 = vrot.lane.b32.xlu0 %v989, 32
    %v992 = vpop.permute.xlu0 %991
    %v994 = vadd.f32 %v984, %v992
    %v995 = vtanh.pop %v994
    %997 = vrot.lane.b32.xlu0 %v995, 32
    %v998 = vpop.permute.xlu0 %997
    %v1000 = vmul.f32 %v977, %v998
    %v1001 = vld [vmem:[%s0 + $0x6] sm:$0x3]
    %v1003 = vrot.slane %v839, 2
    %1004 = vrot.lane.b32.xlu0 %v1003, 64
    %v1005 = vpop.permute.xlu0 %1004
    %v1007 = vsub.f32 %v1000, %v1005
    %v1009 = vrot.slane %v1007, 6
    %1010 = vrot.lane.b32.xlu0 %v1009, 64
    %v1011 = vpop.permute.xlu0 %1010
    %v1013 = vmul.f32 %v1001, %v1011
    %v1014 = vadd.f32 %v839, %v1013
    %v1015 = vsub.f32 %v994, %v982
    %v1017 = vrot.slane %v1015, 6
    %1018 = vrot.lane.b32.xlu0 %v1017, 96
    %v1019 = vpop.permute.xlu0 %1018
    %v1021 = vmul.f32 %v1001, %v1019
    %v1022 = vadd.f32 %v846, %v1021
    %1024 = vrot.lane.b32.xlu0 %v1000, 96
    %v1025 = vpop.permute.xlu0 %1024
    %1027 = vst.msk [vmem:[#allocation3] sm:$0xc0] %vm306, %v1025
    %v1028 = vld [vmem:[#allocation2 + $0x10] sm:$0xc]
    %v1029 = vpack.c.bf16 %v924, %v924
    %v1031 = vsel %vm95, %v1029, 0
    %1033 = vmatpush.bf16.msra.mxu0 0
    %1034 = vmatpush.bf16.msra.mxu0 0
    %1035 = vmatpush.bf16.msra.mxu0 0
    %1036 = vmatpush.bf16.msra.mxu0 0
    %1037 = vmatpush.bf16.msra.mxu0 0
    %1038 = vmatpush.bf16.msra.mxu0 0
    %1039 = vmatpush.bf16.msra.mxu0 %v149
    %1040 = vmatpush.bf16.msra.mxu0 %v148
    %1041 = vmatmul.bf16.gmra.mxu0 %v1031
    %v1042 = vpop.f32.mrf.mxu0
    %v1043 = vadd.f32 0.0, %v1042
    %v1044 = vpop.f32.mrf.mxu0
    %1045 = vdwg.mxu0
    %v1047 = vrot.slane %v1043, 6
    %v1049 = vadd.f32 %v1028, %v1047
    %v1050 = vxor.u32 %v1049, 2147483648
    %v1051 = vmul.f32 %v1050, 1.442695
    %v1052 = vpow.pop %v1051
    %v1053 = vadd.f32 %v1052, 1.0
    %v1054 = vrcp.pop %v1053
    %v1055 = vmul.f32 %v1053, %v1054
    %v1056 = vsub.f32 1.0, %v1055
    %v1057 = vmul.f32 %v1054, %v1056
    %v1058 = vadd.f32 %v1054, %v1057
    %vm1059 = vweird.f32 %v1053
    %vm1060 = vweird.f32 %v1054
    %vm1061 = vmor %vm1059, %vm1060
    %v1062 = vsel %vm1061, %v1054, %v1058
    %v1063 = vand.u32 2147483647, %v1053
    %vm1064 = vcmp.eq.f32.partialorder %v1063, 8.507059e+37
    %v1065 = vand.u32 %v1053, 2147483648
    %v1066 = vor.u32 1.1754944e-38, %v1065
    %v1067 = vsel %vm1064, %v1066, %v1062
    %v1068 = vmul.f32 1.0, %v1067
    %v1069 = vtanh.pop %v1049
    %v1071 = vrot.slane %v931, 6
    %1072 = vrot.lane.b32.xlu0 %v1071, 32
    %v1073 = vpop.permute.xlu0 %1072
    %v1075 = vmul.f32 %v1068, %v1073
    %1077 = vrot.lane.b32.xlu0 %v1069, 32
    %v1078 = vpop.permute.xlu0 %1077
    %v1080 = vmul.f32 %v1068, %v1078
    %1082 = vrot.lane.b32.xlu0 %v1080, 32
    %v1083 = vpop.permute.xlu0 %1082
    %v1085 = vadd.f32 %v1075, %v1083
    %v1086 = vtanh.pop %v1085
    %1088 = vrot.lane.b32.xlu0 %v1086, 32
    %v1089 = vpop.permute.xlu0 %1088
    %v1091 = vmul.f32 %v1068, %v1089
    %v1092 = vld [vmem:[%s0 + $0xa] sm:$0x3]
    %v1094 = vrot.slane %v924, 6
    %1095 = vrot.lane.b32.xlu0 %v1094, 64
    %v1096 = vpop.permute.xlu0 %1095
    %v1098 = vsub.f32 %v1091, %v1096
    %v1100 = vrot.slane %v1098, 2
    %1101 = vrot.lane.b32.xlu0 %v1100, 64
    %v1102 = vpop.permute.xlu0 %1101
    %v1104 = vmul.f32 %v1092, %v1102
    %v1105 = vadd.f32 %v924, %v1104
    %v1106 = vsub.f32 %v1085, %v1073
    %v1108 = vrot.slane %v1106, 2
    %1109 = vrot.lane.b32.xlu0 %v1108, 96
    %v1110 = vpop.permute.xlu0 %1109
    %v1112 = vmul.f32 %v1092, %v1110
    %v1113 = vadd.f32 %v931, %v1112
    %1115 = vrot.lane.b32.xlu0 %v1091, 64
    %v1116 = vpop.permute.xlu0 %1115
    %1118 = vst.msk [vmem:[#allocation3 + $0x8] sm:$0xc] %vm398, %v1116
    %v1119 = vld [vmem:[#allocation2 + $0x8] sm:$0x30]
    %v1120 = vpack.c.bf16 %v1014, %v1014
    %v1122 = vsel %vm95, %v1120, 0
    %1124 = vmatpush.bf16.msra.mxu0 0
    %1125 = vmatpush.bf16.msra.mxu0 0
    %1126 = vmatpush.bf16.msra.mxu0 0
    %1127 = vmatpush.bf16.msra.mxu0 0
    %1128 = vmatpush.bf16.msra.mxu0 0
    %1129 = vmatpush.bf16.msra.mxu0 0
    %1130 = vmatpush.bf16.msra.mxu0 %v231
    %1131 = vmatpush.bf16.msra.mxu0 %v230
    %1132 = vmatmul.bf16.gmra.mxu0 %v1122
    %v1133 = vpop.f32.mrf.mxu0
    %v1134 = vadd.f32 0.0, %v1133
    %v1135 = vpop.f32.mrf.mxu0
    %1136 = vdwg.mxu0
    %v1138 = vrot.slane %v1134, 4
    %v1140 = vadd.f32 %v1119, %v1138
    %v1141 = vxor.u32 %v1140, 2147483648
    %v1142 = vmul.f32 %v1141, 1.442695
    %v1143 = vpow.pop %v1142
    %v1144 = vadd.f32 %v1143, 1.0
    %v1145 = vrcp.pop %v1144
    %v1146 = vmul.f32 %v1144, %v1145
    %v1147 = vsub.f32 1.0, %v1146
    %v1148 = vmul.f32 %v1145, %v1147
    %v1149 = vadd.f32 %v1145, %v1148
    %vm1150 = vweird.f32 %v1144
    %vm1151 = vweird.f32 %v1145
    %vm1152 = vmor %vm1150, %vm1151
    %v1153 = vsel %vm1152, %v1145, %v1149
    %v1154 = vand.u32 2147483647, %v1144
    %vm1155 = vcmp.eq.f32.partialorder %v1154, 8.507059e+37
    %v1156 = vand.u32 %v1144, 2147483648
    %v1157 = vor.u32 1.1754944e-38, %v1156
    %v1158 = vsel %vm1155, %v1157, %v1153
    %v1159 = vmul.f32 1.0, %v1158
    %v1160 = vtanh.pop %v1140
    %v1162 = vrot.slane %v1022, 4
    %1163 = vrot.lane.b32.xlu0 %v1162, 32
    %v1164 = vpop.permute.xlu0 %1163
    %v1166 = vmul.f32 %v1159, %v1164
    %1168 = vrot.lane.b32.xlu0 %v1160, 32
    %v1169 = vpop.permute.xlu0 %1168
    %v1171 = vmul.f32 %v1159, %v1169
    %1173 = vrot.lane.b32.xlu0 %v1171, 32
    %v1174 = vpop.permute.xlu0 %1173
    %v1176 = vadd.f32 %v1166, %v1174
    %v1177 = vtanh.pop %v1176
    %1179 = vrot.lane.b32.xlu0 %v1177, 32
    %v1180 = vpop.permute.xlu0 %1179
    %v1182 = vmul.f32 %v1159, %v1180
    %v1183 = vld [vmem:[%s0 + $0x4] sm:$0x3]
    %v1185 = vrot.slane %v1014, 4
    %1186 = vrot.lane.b32.xlu0 %v1185, 64
    %v1187 = vpop.permute.xlu0 %1186
    %v1189 = vsub.f32 %v1182, %v1187
    %v1191 = vrot.slane %v1189, 4
    %1192 = vrot.lane.b32.xlu0 %v1191, 64
    %v1193 = vpop.permute.xlu0 %1192
    %v1195 = vmul.f32 %v1183, %v1193
    %v1196 = vadd.f32 %v1014, %v1195
    %v1197 = vsub.f32 %v1176, %v1164
    %v1199 = vrot.slane %v1197, 4
    %1200 = vrot.lane.b32.xlu0 %v1199, 96
    %v1201 = vpop.permute.xlu0 %1200
    %v1203 = vmul.f32 %v1183, %v1201
    %v1204 = vadd.f32 %v1022, %v1203
    %1206 = vrot.lane.b32.xlu0 %v1182, 96
    %v1207 = vpop.permute.xlu0 %1206
    %1209 = vst.msk [vmem:[#allocation3] sm:$0x30] %vm490, %v1207
    %v1210 = vld [vmem:[#allocation2 + $0x10] sm:$0x30]
    %v1211 = vpack.c.bf16 %v1105, %v1105
    %v1213 = vsel %vm95, %v1211, 0
    %1215 = vmatpush.bf16.msra.mxu0 0
    %1216 = vmatpush.bf16.msra.mxu0 0
    %1217 = vmatpush.bf16.msra.mxu0 0
    %1218 = vmatpush.bf16.msra.mxu0 0
    %1219 = vmatpush.bf16.msra.mxu0 0
    %1220 = vmatpush.bf16.msra.mxu0 0
    %1221 = vmatpush.bf16.msra.mxu0 %v149
    %1222 = vmatpush.bf16.msra.mxu0 %v148
    %1223 = vmatmul.bf16.gmra.mxu0 %v1213
    %v1224 = vpop.f32.mrf.mxu0
    %v1225 = vadd.f32 0.0, %v1224
    %v1226 = vpop.f32.mrf.mxu0
    %1227 = vdwg.mxu0
    %v1229 = vrot.slane %v1225, 4
    %v1231 = vadd.f32 %v1210, %v1229
    %v1232 = vxor.u32 %v1231, 2147483648
    %v1233 = vmul.f32 %v1232, 1.442695
    %v1234 = vpow.pop %v1233
    %v1235 = vadd.f32 %v1234, 1.0
    %v1236 = vrcp.pop %v1235
    %v1237 = vmul.f32 %v1235, %v1236
    %v1238 = vsub.f32 1.0, %v1237
    %v1239 = vmul.f32 %v1236, %v1238
    %v1240 = vadd.f32 %v1236, %v1239
    %vm1241 = vweird.f32 %v1235
    %vm1242 = vweird.f32 %v1236
    %vm1243 = vmor %vm1241, %vm1242
    %v1244 = vsel %vm1243, %v1236, %v1240
    %v1245 = vand.u32 2147483647, %v1235
    %vm1246 = vcmp.eq.f32.partialorder %v1245, 8.507059e+37
    %v1247 = vand.u32 %v1235, 2147483648
    %v1248 = vor.u32 1.1754944e-38, %v1247
    %v1249 = vsel %vm1246, %v1248, %v1244
    %v1250 = vmul.f32 1.0, %v1249
    %v1251 = vtanh.pop %v1231
    %v1253 = vrot.slane %v1113, 4
    %1254 = vrot.lane.b32.xlu0 %v1253, 32
    %v1255 = vpop.permute.xlu0 %1254
    %v1257 = vmul.f32 %v1250, %v1255
    %1259 = vrot.lane.b32.xlu0 %v1251, 32
    %v1260 = vpop.permute.xlu0 %1259
    %v1262 = vmul.f32 %v1250, %v1260
    %1264 = vrot.lane.b32.xlu0 %v1262, 32
    %v1265 = vpop.permute.xlu0 %1264
    %v1267 = vadd.f32 %v1257, %v1265
    %v1268 = vtanh.pop %v1267
    %1270 = vrot.lane.b32.xlu0 %v1268, 32
    %v1271 = vpop.permute.xlu0 %1270
    %v1273 = vmul.f32 %v1250, %v1271
    %v1274 = vld [vmem:[%s0 + $0xc] sm:$0x3]
    %v1276 = vrot.slane %v1105, 4
    %1277 = vrot.lane.b32.xlu0 %v1276, 64
    %v1278 = vpop.permute.xlu0 %1277
    %v1280 = vsub.f32 %v1273, %v1278
    %v1282 = vrot.slane %v1280, 4
    %1283 = vrot.lane.b32.xlu0 %v1282, 64
    %v1284 = vpop.permute.xlu0 %1283
    %v1286 = vmul.f32 %v1274, %v1284
    %v1287 = vadd.f32 %v1105, %v1286
    %v1288 = vsub.f32 %v1267, %v1255
    %v1290 = vrot.slane %v1288, 4
    %1291 = vrot.lane.b32.xlu0 %v1290, 96
    %v1292 = vpop.permute.xlu0 %1291
    %v1294 = vmul.f32 %v1274, %v1292
    %v1295 = vadd.f32 %v1113, %v1294
    %1297 = vrot.lane.b32.xlu0 %v1273, 64
    %v1298 = vpop.permute.xlu0 %1297
    %1300 = vst.msk [vmem:[#allocation3 + $0x8] sm:$0x30] %vm582, %v1298
    %v1301 = vld [vmem:[#allocation2 + $0x8] sm:$0xc]
    %v1302 = vpack.c.bf16 %v1196, %v1196
    %v1304 = vsel %vm95, %v1302, 0
    %1306 = vmatpush.bf16.msra.mxu0 0
    %1307 = vmatpush.bf16.msra.mxu0 0
    %1308 = vmatpush.bf16.msra.mxu0 0
    %1309 = vmatpush.bf16.msra.mxu0 0
    %1310 = vmatpush.bf16.msra.mxu0 0
    %1311 = vmatpush.bf16.msra.mxu0 0
    %1312 = vmatpush.bf16.msra.mxu0 %v231
    %1313 = vmatpush.bf16.msra.mxu0 %v230
    %1314 = vmatmul.bf16.gmra.mxu0 %v1304
    %v1315 = vpop.f32.mrf.mxu0
    %v1316 = vadd.f32 0.0, %v1315
    %v1317 = vpop.f32.mrf.mxu0
    %1318 = vdwg.mxu0
    %v1320 = vrot.slane %v1316, 6
    %v1322 = vadd.f32 %v1301, %v1320
    %v1323 = vxor.u32 %v1322, 2147483648
    %v1324 = vmul.f32 %v1323, 1.442695
    %v1325 = vpow.pop %v1324
    %v1326 = vadd.f32 %v1325, 1.0
    %v1327 = vrcp.pop %v1326
    %v1328 = vmul.f32 %v1326, %v1327
    %v1329 = vsub.f32 1.0, %v1328
    %v1330 = vmul.f32 %v1327, %v1329
    %v1331 = vadd.f32 %v1327, %v1330
    %vm1332 = vweird.f32 %v1326
    %vm1333 = vweird.f32 %v1327
    %vm1334 = vmor %vm1332, %vm1333
    %v1335 = vsel %vm1334, %v1327, %v1331
    %v1336 = vand.u32 2147483647, %v1326
    %vm1337 = vcmp.eq.f32.partialorder %v1336, 8.507059e+37
    %v1338 = vand.u32 %v1326, 2147483648
    %v1339 = vor.u32 1.1754944e-38, %v1338
    %v1340 = vsel %vm1337, %v1339, %v1335
    %v1341 = vmul.f32 1.0, %v1340
    %v1342 = vtanh.pop %v1322
    %v1344 = vrot.slane %v1204, 6
    %1345 = vrot.lane.b32.xlu0 %v1344, 32
    %v1346 = vpop.permute.xlu0 %1345
    %v1348 = vmul.f32 %v1341, %v1346
    %1350 = vrot.lane.b32.xlu0 %v1342, 32
    %v1351 = vpop.permute.xlu0 %1350
    %v1353 = vmul.f32 %v1341, %v1351
    %1355 = vrot.lane.b32.xlu0 %v1353, 32
    %v1356 = vpop.permute.xlu0 %1355
    %v1358 = vadd.f32 %v1348, %v1356
    %v1359 = vtanh.pop %v1358
    %1361 = vrot.lane.b32.xlu0 %v1359, 32
    %v1362 = vpop.permute.xlu0 %1361
    %v1364 = vmul.f32 %v1341, %v1362
    %v1365 = vld [vmem:[%s0 + $0x2] sm:$0x3]
    %v1367 = vrot.slane %v1196, 6
    %1368 = vrot.lane.b32.xlu0 %v1367, 64
    %v1369 = vpop.permute.xlu0 %1368
    %v1371 = vsub.f32 %v1364, %v1369
    %v1373 = vrot.slane %v1371, 2
    %1374 = vrot.lane.b32.xlu0 %v1373, 64
    %v1375 = vpop.permute.xlu0 %1374
    %v1377 = vmul.f32 %v1365, %v1375
    %v1378 = vadd.f32 %v1196, %v1377
    %v1379 = vsub.f32 %v1358, %v1346
    %v1381 = vrot.slane %v1379, 2
    %1382 = vrot.lane.b32.xlu0 %v1381, 96
    %v1383 = vpop.permute.xlu0 %1382
    %v1385 = vmul.f32 %v1365, %v1383
    %v1386 = vadd.f32 %v1204, %v1385
    %1388 = vrot.lane.b32.xlu0 %v1364, 96
    %v1389 = vpop.permute.xlu0 %1388
    %1391 = vst.msk [vmem:[#allocation3] sm:$0xc] %vm674, %v1389
    %v1392 = vld [vmem:[#allocation2 + $0x10] sm:$0xc0]
    %v1393 = vpack.c.bf16 %v1287, %v1287
    %v1395 = vsel %vm95, %v1393, 0
    %1397 = vmatpush.bf16.msra.mxu0 0
    %1398 = vmatpush.bf16.msra.mxu0 0
    %1399 = vmatpush.bf16.msra.mxu0 0
    %1400 = vmatpush.bf16.msra.mxu0 0
    %1401 = vmatpush.bf16.msra.mxu0 0
    %1402 = vmatpush.bf16.msra.mxu0 0
    %1403 = vmatpush.bf16.msra.mxu0 %v149
    %1404 = vmatpush.bf16.msra.mxu0 %v148
    %1405 = vmatmul.bf16.gmra.mxu0 %v1395
    %v1406 = vpop.f32.mrf.mxu0
    %v1407 = vadd.f32 0.0, %v1406
    %v1408 = vpop.f32.mrf.mxu0
    %1409 = vdwg.mxu0
    %v1411 = vrot.slane %v1407, 2
    %v1413 = vadd.f32 %v1392, %v1411
    %v1414 = vxor.u32 %v1413, 2147483648
    %v1415 = vmul.f32 %v1414, 1.442695
    %v1416 = vpow.pop %v1415
    %v1417 = vadd.f32 %v1416, 1.0
    %v1418 = vrcp.pop %v1417
    %v1419 = vmul.f32 %v1417, %v1418
    %v1420 = vsub.f32 1.0, %v1419
    %v1421 = vmul.f32 %v1418, %v1420
    %v1422 = vadd.f32 %v1418, %v1421
    %vm1423 = vweird.f32 %v1417
    %vm1424 = vweird.f32 %v1418
    %vm1425 = vmor %vm1423, %vm1424
    %v1426 = vsel %vm1425, %v1418, %v1422
    %v1427 = vand.u32 2147483647, %v1417
    %vm1428 = vcmp.eq.f32.partialorder %v1427, 8.507059e+37
    %v1429 = vand.u32 %v1417, 2147483648
    %v1430 = vor.u32 1.1754944e-38, %v1429
    %v1431 = vsel %vm1428, %v1430, %v1426
    %v1432 = vmul.f32 1.0, %v1431
    %v1433 = vtanh.pop %v1413
    %v1435 = vrot.slane %v1295, 2
    %1436 = vrot.lane.b32.xlu0 %v1435, 32
    %v1437 = vpop.permute.xlu0 %1436
    %v1439 = vmul.f32 %v1432, %v1437
    %1441 = vrot.lane.b32.xlu0 %v1433, 32
    %v1442 = vpop.permute.xlu0 %1441
    %v1444 = vmul.f32 %v1432, %v1442
    %1446 = vrot.lane.b32.xlu0 %v1444, 32
    %v1447 = vpop.permute.xlu0 %1446
    %v1449 = vadd.f32 %v1439, %v1447
    %v1450 = vtanh.pop %v1449
    %1452 = vrot.lane.b32.xlu0 %v1450, 32
    %v1453 = vpop.permute.xlu0 %1452
    %v1455 = vmul.f32 %v1432, %v1453
    %v1456 = vld [vmem:[%s0 + $0xe] sm:$0x3]
    %v1458 = vrot.slane %v1287, 2
    %1459 = vrot.lane.b32.xlu0 %v1458, 64
    %v1460 = vpop.permute.xlu0 %1459
    %v1462 = vsub.f32 %v1455, %v1460
    %v1464 = vrot.slane %v1462, 6
    %1465 = vrot.lane.b32.xlu0 %v1464, 64
    %v1466 = vpop.permute.xlu0 %1465
    %v1468 = vmul.f32 %v1456, %v1466
    %v1469 = vadd.f32 %v1287, %v1468
    %v1470 = vsub.f32 %v1449, %v1437
    %v1472 = vrot.slane %v1470, 6
    %1473 = vrot.lane.b32.xlu0 %v1472, 96
    %v1474 = vpop.permute.xlu0 %1473
    %v1476 = vmul.f32 %v1456, %v1474
    %v1477 = vadd.f32 %v1295, %v1476
    %1479 = vrot.lane.b32.xlu0 %v1455, 64
    %v1480 = vpop.permute.xlu0 %1479
    %1482 = vst.msk [vmem:[#allocation3 + $0x8] sm:$0xc0] %vm766, %v1480
    %v1483 = vld [vmem:[#allocation2 + $0x8] sm:$0x3]
    %v1484 = vpack.c.bf16 %v1378, %v1378
    %v1486 = vsel %vm95, %v1484, 0
    %1488 = vmatpush.bf16.msra.mxu0 0
    %1489 = vmatpush.bf16.msra.mxu0 0
    %1490 = vmatpush.bf16.msra.mxu0 0
    %1491 = vmatpush.bf16.msra.mxu0 0
    %1492 = vmatpush.bf16.msra.mxu0 0
    %1493 = vmatpush.bf16.msra.mxu0 0
    %1494 = vmatpush.bf16.msra.mxu0 %v231
    %1495 = vmatpush.bf16.msra.mxu0 %v230
    %1496 = vmatmul.bf16.gmra.mxu0 %v1486
    %v1497 = vpop.f32.mrf.mxu0
    %v1498 = vadd.f32 0.0, %v1497
    %v1499 = vpop.f32.mrf.mxu0
    %1500 = vdwg.mxu0
    %v1501 = vadd.f32 %v1483, %v1498
    %v1502 = vxor.u32 %v1501, 2147483648
    %v1503 = vmul.f32 %v1502, 1.442695
    %v1504 = vpow.pop %v1503
    %v1505 = vadd.f32 %v1504, 1.0
    %v1506 = vrcp.pop %v1505
    %v1507 = vmul.f32 %v1505, %v1506
    %v1508 = vsub.f32 1.0, %v1507
    %v1509 = vmul.f32 %v1506, %v1508
    %v1510 = vadd.f32 %v1506, %v1509
    %vm1511 = vweird.f32 %v1505
    %vm1512 = vweird.f32 %v1506
    %vm1513 = vmor %vm1511, %vm1512
    %v1514 = vsel %vm1513, %v1506, %v1510
    %v1515 = vand.u32 2147483647, %v1505
    %vm1516 = vcmp.eq.f32.partialorder %v1515, 8.507059e+37
    %v1517 = vand.u32 %v1505, 2147483648
    %v1518 = vor.u32 1.1754944e-38, %v1517
    %v1519 = vsel %vm1516, %v1518, %v1514
    %v1520 = vmul.f32 1.0, %v1519
    %v1521 = vtanh.pop %v1501
    %1523 = vrot.lane.b32.xlu0 %v1386, 32
    %v1524 = vpop.permute.xlu0 %1523
    %v1526 = vmul.f32 %v1520, %v1524
    %1528 = vrot.lane.b32.xlu0 %v1521, 32
    %v1529 = vpop.permute.xlu0 %1528
    %v1531 = vmul.f32 %v1520, %v1529
    %1533 = vrot.lane.b32.xlu0 %v1531, 32
    %v1534 = vpop.permute.xlu0 %1533
    %v1536 = vadd.f32 %v1526, %v1534
    %v1537 = vtanh.pop %v1536
    %1539 = vrot.lane.b32.xlu0 %v1537, 32
    %v1540 = vpop.permute.xlu0 %1539
    %v1542 = vmul.f32 %v1520, %v1540
    %v1543 = vld [vmem:[%s0] sm:$0x3]
    %1545 = vrot.lane.b32.xlu0 %v1378, 64
    %v1546 = vpop.permute.xlu0 %1545
    %v1548 = vsub.f32 %v1542, %v1546
    %1550 = vrot.lane.b32.xlu0 %v1548, 64
    %v1551 = vpop.permute.xlu0 %1550
    %v1553 = vmul.f32 %v1543, %v1551
    %v1554 = vadd.f32 %v1378, %v1553
    %v1555 = vsub.f32 %v1536, %v1524
    %1557 = vrot.lane.b32.xlu0 %v1555, 96
    %v1558 = vpop.permute.xlu0 %1557
    %v1560 = vmul.f32 %v1543, %v1558
    %v1561 = vadd.f32 %v1386, %v1560
    %1563 = vrot.lane.b32.xlu0 %v1542, 96
    %v1564 = vpop.permute.xlu0 %1563
    %1566 = vst.msk [vmem:[#allocation3] sm:$0x3] %vm851, %v1564
    %1567 = vst.msk [vmem:[#allocation3 + $0x10] sm:$0x3] %vm219, %v1469
    %1569 = vrot.lane.b32.xlu0 %v1554, 32
    %v1570 = vpop.permute.xlu0 %1569
    %1572 = vst.msk [vmem:[#allocation3 + $0x10] sm:$0x3] %vm851, %v1570
    %v1573 = vld [vmem:[#allocation3] sm:$0xff]
    %v1574 = vld [vmem:[#allocation3 + $0x8] sm:$0xff]
    %v1575 = vld [vmem:[#allocation3 + $0x10] sm:$0x3]
    %v1576 = vpack.c.bf16 %v1574, %v1573
    %v1577 = vpack.c.bf16 %v1575, %v1575
    %v1578 = vld [vmem:[%s6] sm:$0xf]
    %v1579 = vld [vmem:[%s6 + $0x4] sm:$0xf]
    %v1580 = vld [vmem:[%s6 + $0x8] sm:$0xf]
    %v1581 = vld [vmem:[%s6 + $0xc] sm:$0xf]
    %v1582 = vld [vmem:[%s6 + $0x10] sm:$0xf]
    %v1583 = vld [vmem:[%s6 + $0x14] sm:$0xf]
    %v1584 = vld [vmem:[%s6 + $0x18] sm:$0xf]
    %v1585 = vld [vmem:[%s6 + $0x1c] sm:$0xf]
    %v1594 = vunpack.c.l.b16 %v1578
    %v1595 = vunpack.c.l.b16 %v1579
    %v1596 = vunpack.c.l.b16 %v1580
    %v1597 = vunpack.c.l.b16 %v1581
    %v1598 = vunpack.c.l.b16 %v1582
    %v1599 = vunpack.c.l.b16 %v1583
    %v1600 = vunpack.c.l.b16 %v1584
    %v1601 = vunpack.c.l.b16 %v1585
    %v1602 = vpack.c.b16 %v1595, %v1594
    %v1603 = vpack.c.b16 %v1597, %v1596
    %v1604 = vpack.c.b16 %v1599, %v1598
    %v1605 = vpack.c.b16 %v1601, %v1600
    %vm1610 = vcmask 523264
    %v1612 = vsel %vm1610, %v1576, 0
    %v1615 = vsel %vm1610, %v1577, 0
    %1617 = vmatpush.bf16.msra.mxu0 0
    %1618 = vmatpush.bf16.msra.mxu0 0
    %1619 = vmatpush.bf16.msra.mxu0 0
    %1620 = vmatpush.bf16.msra.mxu0 0
    %1621 = vmatpush.bf16.msra.mxu0 %v1605
    %1622 = vmatpush.bf16.msra.mxu0 %v1604
    %1623 = vmatpush.bf16.msra.mxu0 %v1603
    %1624 = vmatpush.bf16.msra.mxu0 %v1602
    %1625 = vmatmul.bf16.gmra.mxu0 %v1612
    %v1626 = vpop.f32.mrf.mxu0
    %v1627 = vadd.f32 0.0, %v1626
    %v1628 = vpop.f32.mrf.mxu0
    %v1629 = vadd.f32 0.0, %v1628
    %1630 = vmatmul.bf16.gmra.mxu0 %v1615
    %v1631 = vpop.f32.mrf.mxu0
    %v1632 = vadd.f32 0.0, %v1631
    %v1633 = vpop.f32.mrf.mxu0
    %1634 = vdwg.mxu0
    %v1635 = vld [vmem:[%s0] sm:$0xff]
    %v1636 = vld [vmem:[%s0 + $0x8] sm:$0xff]
    %1638 = vset.pattern.permute.xlu0 0
    %1639 = vperm.xlu0 %1638, %v1635
    %v1640 = vpop.permute.xlu0 %1639
    %1643 = vset.pattern.permute.xlu0 0
    %1644 = vperm.xlu0 %1643, %v1636
    %v1645 = vpop.permute.xlu0 %1644
    %v1647 = vmul.f32 %v1627, %v1640
    %v1648 = vmul.f32 %v1629, %v1645
    %v1649 = vpack.c.bf16 %v1647, %v1647
    %v1650 = vpack.c.bf16 %v1648, %v1648
    %vm1651 = vcmask 257024
    %1652 = vst.msk [vmem:[#allocation4] sm:$0xf] %vm1651, %v1649
    %1653 = vst.msk [vmem:[#allocation4 + $0x4] sm:$0xf] %vm1651, %v1650
    %1654 = vst.msk [vmem:[#allocation5] sm:$0x3] %vm219, %v1632
    %v1655 = vpack.c.bf16 %v1477, %v1477
    %v1657 = vperm.slane %v57, 0
    %v1663 = vunpack.c.l.b16 %v53
    %v1664 = vunpack.c.l.b16 %v54
    %v1665 = vunpack.c.l.b16 %v55
    %v1666 = vunpack.c.l.b16 %v56
    %v1667 = vpack.c.b16 %v1664, %v1663
    %v1668 = vpack.c.b16 %v1666, %v1665
    %v1672 = vsel %vm95, %v1655, 0
    %1674 = vmatpush.bf16.msra.mxu0 0
    %1675 = vmatpush.bf16.msra.mxu0 0
    %1676 = vmatpush.bf16.msra.mxu0 0
    %1677 = vmatpush.bf16.msra.mxu0 0
    %1678 = vmatpush.bf16.msra.mxu0 0
    %1679 = vmatpush.bf16.msra.mxu0 0
    %1680 = vmatpush.bf16.msra.mxu0 %v1668
    %1681 = vmatpush.bf16.msra.mxu0 %v1667
    %1682 = vmatmul.bf16.gmra.mxu0 %v1672
    %v1683 = vpop.f32.mrf.mxu0
    %v1684 = vadd.f32 %v1657, %v1683
    %v1685 = vpop.f32.mrf.mxu0
    %1686 = vdwg.mxu0
    %v1687 = vmax.f32 %v1684, 0.0
    %vm1688 = vcmask 123904
    %1689 = vst.msk [vmem:[#allocation7] sm:$0x3] %vm1688, %v1687
    %v1690 = vpack.c.bf16 %v1561, %v1561
    %v1692 = vsel %vm95, %v1690, 0
    %1694 = vmatpush.bf16.msra.mxu0 0
    %1695 = vmatpush.bf16.msra.mxu0 0
    %1696 = vmatpush.bf16.msra.mxu0 0
    %1697 = vmatpush.bf16.msra.mxu0 0
    %1698 = vmatpush.bf16.msra.mxu0 0
    %1699 = vmatpush.bf16.msra.mxu0 0
    %1700 = vmatpush.bf16.msra.mxu0 %v1668
    %1701 = vmatpush.bf16.msra.mxu0 %v1667
    %1702 = vmatmul.bf16.gmra.mxu0 %v1692
    %v1703 = vpop.f32.mrf.mxu0
    %v1704 = vadd.f32 %v1657, %v1703
    %v1705 = vpop.f32.mrf.mxu0
    %1706 = vdwg.mxu0
    %v1707 = vmax.f32 %v1704, 0.0
    %1709 = vrot.lane.b32.xlu0 %v1707, 16
    %v1710 = vpop.permute.xlu0 %1709
    %vm1712 = vcmask 255104
    %1713 = vst.msk [vmem:[#allocation7] sm:$0x3] %vm1712, %v1710
    %v1714 = vld [vmem:[#allocation4] sm:$0xf]
    %v1715 = vld [vmem:[#allocation4 + $0x4] sm:$0xf]
    %v1716 = vld [vmem:[%s7] sm:$0xff]
    %v1717 = vld [vmem:[%s7 + $0x8] sm:$0xff]
    %v1718 = vld [vmem:[%s7 + $0x10] sm:$0xff]
    %v1719 = vld [vmem:[%s7 + $0x18] sm:$0xff]
    %v1720 = vld [vmem:[%s8] sm:$0x3]
    %v1722 = vperm.slane %v1720, 0
    %v1723 = vperm.slane %v1720, 1
    %v1728 = vunpack.c.l.b16 %v1714
    %v1729 = vunpack.c.l.b16 %v1715
    %v1730 = vpack.c.b16 %v1729, %v1728
    %v1735 = vunpack.c.l.b16 %v1716
    %v1736 = vunpack.c.h.b16 %v1716
    %v1737 = vunpack.c.l.b16 %v1717
    %v1738 = vunpack.c.h.b16 %v1717
    %v1739 = vunpack.c.l.b16 %v1718
    %v1740 = vunpack.c.h.b16 %v1718
    %v1741 = vunpack.c.l.b16 %v1719
    %v1742 = vunpack.c.h.b16 %v1719
    %v1743 = vpack.c.b16 %v1737, %v1735
    %v1744 = vpack.c.b16 %v1738, %v1736
    %v1745 = vpack.c.b16 %v1741, %v1739
    %v1746 = vpack.c.b16 %v1742, %v1740
    %v1752 = vsel %vm95, %v1730, 0
    %1754 = vmatpush.bf16.msra.mxu0 0
    %1755 = vmatpush.bf16.msra.mxu0 0
    %1756 = vmatpush.bf16.msra.mxu0 0
    %1757 = vmatpush.bf16.msra.mxu0 0
    %1758 = vmatpush.bf16.msra.mxu0 0
    %1759 = vmatpush.bf16.msra.mxu0 0
    %1760 = vmatpush.bf16.msra.mxu0 %v1745
    %1761 = vmatpush.bf16.msra.mxu0 %v1743
    %1762 = vmatmul.bf16.gmra.mxu0 %v1752
    %v1763 = vpop.f32.mrf.mxu0
    %v1764 = vadd.f32 %v1722, %v1763
    %v1765 = vpop.f32.mrf.mxu0
    %v1766 = vadd.f32 %v1722, %v1765
    %1767 = vdwg.mxu0
    %1768 = vmatpush.bf16.msra.mxu0 0
    %1769 = vmatpush.bf16.msra.mxu0 0
    %1770 = vmatpush.bf16.msra.mxu0 0
    %1771 = vmatpush.bf16.msra.mxu0 0
    %1772 = vmatpush.bf16.msra.mxu0 0
    %1773 = vmatpush.bf16.msra.mxu0 0
    %1774 = vmatpush.bf16.msra.mxu0 %v1746
    %1775 = vmatpush.bf16.msra.mxu0 %v1744
    %1776 = vmatmul.bf16.gmra.mxu0 %v1752
    %v1777 = vpop.f32.mrf.mxu0
    %v1778 = vadd.f32 %v1723, %v1777
    %v1779 = vpop.f32.mrf.mxu0
    %v1780 = vadd.f32 %v1723, %v1779
    %1781 = vdwg.mxu0
    %1782 = vst [vmem:[#allocation2] sm:$0xff] %v1764
    %1783 = vst [vmem:[#allocation2 + $0x8] sm:$0xff] %v1778
    %1784 = vst [vmem:[#allocation2 + $0x10] sm:$0xff] %v1766
    %1785 = vst [vmem:[#allocation2 + $0x18] sm:$0xff] %v1780
    %v1786 = vld [vmem:[%s9] sm:$0xf]
    %v1787 = vld [vmem:[%s9 + $0x4] sm:$0xf]
    %v1788 = vld [vmem:[%s9 + $0x8] sm:$0xf]
    %v1789 = vld [vmem:[%s9 + $0xc] sm:$0xf]
    %v1790 = vld [vmem:[%s10] sm:$0xf]
    %v1791 = vld [vmem:[%s10 + $0x4] sm:$0xf]
    %v1792 = vld [vmem:[%s10 + $0x8] sm:$0xf]
    %v1793 = vld [vmem:[%s10 + $0xc] sm:$0xf]
    %v1794 = vld [vmem:[#allocation2] sm:$0x3]
    %v1799 = vunpack.c.l.b16 %v1786
    %v1800 = vunpack.c.l.b16 %v1787
    %v1801 = vunpack.c.l.b16 %v1788
    %v1802 = vunpack.c.l.b16 %v1789
    %v1803 = vpack.c.b16 %v1800, %v1799
    %v1804 = vpack.c.b16 %v1802, %v1801
    %1807 = vmatpush.bf16.msra.mxu0 0
    %1808 = vmatpush.bf16.msra.mxu0 0
    %1809 = vmatpush.bf16.msra.mxu0 0
    %1810 = vmatpush.bf16.msra.mxu0 0
    %1811 = vmatpush.bf16.msra.mxu0 0
    %1812 = vmatpush.bf16.msra.mxu0 0
    %1813 = vmatpush.bf16.msra.mxu0 %v1804
    %1814 = vmatpush.bf16.msra.mxu0 %v1803
    %1815 = vmatmul.bf16.gmra.mxu0 %v153
    %v1816 = vpop.f32.mrf.mxu0
    %v1817 = vadd.f32 0.0, %v1816
    %v1818 = vpop.f32.mrf.mxu0
    %1819 = vdwg.mxu0
    %v1820 = vadd.f32 %v1794, %v1817
    %v1821 = vxor.u32 %v1820, 2147483648
    %v1822 = vmul.f32 %v1821, 1.442695
    %v1823 = vpow.pop %v1822
    %v1824 = vadd.f32 %v1823, 1.0
    %v1825 = vrcp.pop %v1824
    %v1826 = vmul.f32 %v1824, %v1825
    %v1827 = vsub.f32 1.0, %v1826
    %v1828 = vmul.f32 %v1825, %v1827
    %v1829 = vadd.f32 %v1825, %v1828
    %vm1830 = vweird.f32 %v1824
    %vm1831 = vweird.f32 %v1825
    %vm1832 = vmor %vm1830, %vm1831
    %v1833 = vsel %vm1832, %v1825, %v1829
    %v1834 = vand.u32 2147483647, %v1824
    %vm1835 = vcmp.eq.f32.partialorder %v1834, 8.507059e+37
    %v1836 = vand.u32 %v1824, 2147483648
    %v1837 = vor.u32 1.1754944e-38, %v1836
    %v1838 = vsel %vm1835, %v1837, %v1833
    %v1839 = vmul.f32 1.0, %v1838
    %v1840 = vtanh.pop %v1820
    %v1841 = vmul.f32 %v1839, 0.0
    %1843 = vrot.lane.b32.xlu0 %v1840, 32
    %v1844 = vpop.permute.xlu0 %1843
    %v1846 = vmul.f32 %v1839, %v1844
    %1848 = vrot.lane.b32.xlu0 %v1846, 32
    %v1849 = vpop.permute.xlu0 %1848
    %v1851 = vadd.f32 %v1841, %v1849
    %v1852 = vtanh.pop %v1851
    %1854 = vrot.lane.b32.xlu0 %v1852, 32
    %v1855 = vpop.permute.xlu0 %1854
    %v1857 = vmul.f32 %v1839, %v1855
    %v1858 = vld [vmem:[%s0] sm:$0x3]
    %1860 = vrot.lane.b32.xlu0 %v1857, 64
    %v1861 = vpop.permute.xlu0 %1860
    %v1863 = vmul.f32 %v1858, %v1861
    %v1864 = vadd.f32 %v1863, 0.0
    %1866 = vrot.lane.b32.xlu0 %v1851, 96
    %v1867 = vpop.permute.xlu0 %1866
    %v1869 = vmul.f32 %v1858, %v1867
    %v1870 = vadd.f32 %v1869, 0.0
    %1871 = vst.msk [vmem:[#allocation3] sm:$0x3] %vm219, %v1861
    %v1872 = vld [vmem:[#allocation2 + $0x18] sm:$0xc0]
    %v1877 = vunpack.c.l.b16 %v1790
    %v1878 = vunpack.c.l.b16 %v1791
    %v1879 = vunpack.c.l.b16 %v1792
    %v1880 = vunpack.c.l.b16 %v1793
    %v1881 = vpack.c.b16 %v1878, %v1877
    %v1882 = vpack.c.b16 %v1880, %v1879
    %1885 = vmatpush.bf16.msra.mxu0 0
    %1886 = vmatpush.bf16.msra.mxu0 0
    %1887 = vmatpush.bf16.msra.mxu0 0
    %1888 = vmatpush.bf16.msra.mxu0 0
    %1889 = vmatpush.bf16.msra.mxu0 0
    %1890 = vmatpush.bf16.msra.mxu0 0
    %1891 = vmatpush.bf16.msra.mxu0 %v1882
    %1892 = vmatpush.bf16.msra.mxu0 %v1881
    %1893 = vmatmul.bf16.gmra.mxu0 %v153
    %v1894 = vpop.f32.mrf.mxu0
    %v1895 = vadd.f32 0.0, %v1894
    %v1896 = vpop.f32.mrf.mxu0
    %1897 = vdwg.mxu0
    %v1899 = vrot.slane %v1895, 2
    %v1901 = vadd.f32 %v1872, %v1899
    %v1902 = vxor.u32 %v1901, 2147483648
    %v1903 = vmul.f32 %v1902, 1.442695
    %v1904 = vpow.pop %v1903
    %v1905 = vadd.f32 %v1904, 1.0
    %v1906 = vrcp.pop %v1905
    %v1907 = vmul.f32 %v1905, %v1906
    %v1908 = vsub.f32 1.0, %v1907
    %v1909 = vmul.f32 %v1906, %v1908
    %v1910 = vadd.f32 %v1906, %v1909
    %vm1911 = vweird.f32 %v1905
    %vm1912 = vweird.f32 %v1906
    %vm1913 = vmor %vm1911, %vm1912
    %v1914 = vsel %vm1913, %v1906, %v1910
    %v1915 = vand.u32 2147483647, %v1905
    %vm1916 = vcmp.eq.f32.partialorder %v1915, 8.507059e+37
    %v1917 = vand.u32 %v1905, 2147483648
    %v1918 = vor.u32 1.1754944e-38, %v1917
    %v1919 = vsel %vm1916, %v1918, %v1914
    %v1920 = vmul.f32 1.0, %v1919
    %v1921 = vtanh.pop %v1901
    %v1922 = vmul.f32 %v1920, 0.0
    %1924 = vrot.lane.b32.xlu0 %v1921, 32
    %v1925 = vpop.permute.xlu0 %1924
    %v1927 = vmul.f32 %v1920, %v1925
    %1929 = vrot.lane.b32.xlu0 %v1927, 32
    %v1930 = vpop.permute.xlu0 %1929
    %v1932 = vadd.f32 %v1922, %v1930
    %v1933 = vtanh.pop %v1932
    %1935 = vrot.lane.b32.xlu0 %v1933, 32
    %v1936 = vpop.permute.xlu0 %1935
    %v1938 = vmul.f32 %v1920, %v1936
    %v1939 = vld [vmem:[%s0 + $0xe] sm:$0x3]
    %v1941 = vrot.slane %v1938, 6
    %1942 = vrot.lane.b32.xlu0 %v1941, 64
    %v1943 = vpop.permute.xlu0 %1942
    %v1945 = vmul.f32 %v1939, %v1943
    %v1946 = vadd.f32 %v1945, 0.0
    %v1948 = vrot.slane %v1932, 6
    %1949 = vrot.lane.b32.xlu0 %v1948, 96
    %v1950 = vpop.permute.xlu0 %1949
    %v1952 = vmul.f32 %v1939, %v1950
    %v1953 = vadd.f32 %v1952, 0.0
    %1954 = vrot.lane.b32.xlu0 %v1938, 96
    %v1955 = vpop.permute.xlu0 %1954
    %1957 = vst.msk [vmem:[#allocation3 + $0x8] sm:$0xc0] %vm306, %v1955
    %v1958 = vld [vmem:[#allocation2] sm:$0xc]
    %v1959 = vpack.c.bf16 %v1864, %v1864
    %v1961 = vsel %vm95, %v1959, 0
    %1963 = vmatpush.bf16.msra.mxu0 0
    %1964 = vmatpush.bf16.msra.mxu0 0
    %1965 = vmatpush.bf16.msra.mxu0 0
    %1966 = vmatpush.bf16.msra.mxu0 0
    %1967 = vmatpush.bf16.msra.mxu0 0
    %1968 = vmatpush.bf16.msra.mxu0 0
    %1969 = vmatpush.bf16.msra.mxu0 %v1804
    %1970 = vmatpush.bf16.msra.mxu0 %v1803
    %1971 = vmatmul.bf16.gmra.mxu0 %v1961
    %v1972 = vpop.f32.mrf.mxu0
    %v1973 = vadd.f32 0.0, %v1972
    %v1974 = vpop.f32.mrf.mxu0
    %1975 = vdwg.mxu0
    %v1977 = vrot.slane %v1973, 6
    %v1979 = vadd.f32 %v1958, %v1977
    %v1980 = vxor.u32 %v1979, 2147483648
    %v1981 = vmul.f32 %v1980, 1.442695
    %v1982 = vpow.pop %v1981
    %v1983 = vadd.f32 %v1982, 1.0
    %v1984 = vrcp.pop %v1983
    %v1985 = vmul.f32 %v1983, %v1984
    %v1986 = vsub.f32 1.0, %v1985
    %v1987 = vmul.f32 %v1984, %v1986
    %v1988 = vadd.f32 %v1984, %v1987
    %vm1989 = vweird.f32 %v1983
    %vm1990 = vweird.f32 %v1984
    %vm1991 = vmor %vm1989, %vm1990
    %v1992 = vsel %vm1991, %v1984, %v1988
    %v1993 = vand.u32 2147483647, %v1983
    %vm1994 = vcmp.eq.f32.partialorder %v1993, 8.507059e+37
    %v1995 = vand.u32 %v1983, 2147483648
    %v1996 = vor.u32 1.1754944e-38, %v1995
    %v1997 = vsel %vm1994, %v1996, %v1992
    %v1998 = vmul.f32 1.0, %v1997
    %v1999 = vtanh.pop %v1979
    %v2001 = vrot.slane %v1870, 6
    %2002 = vrot.lane.b32.xlu0 %v2001, 32
    %v2003 = vpop.permute.xlu0 %2002
    %v2005 = vmul.f32 %v1998, %v2003
    %2007 = vrot.lane.b32.xlu0 %v1999, 32
    %v2008 = vpop.permute.xlu0 %2007
    %v2010 = vmul.f32 %v1998, %v2008
    %2012 = vrot.lane.b32.xlu0 %v2010, 32
    %v2013 = vpop.permute.xlu0 %2012
    %v2015 = vadd.f32 %v2005, %v2013
    %v2016 = vtanh.pop %v2015
    %2018 = vrot.lane.b32.xlu0 %v2016, 32
    %v2019 = vpop.permute.xlu0 %2018
    %v2021 = vmul.f32 %v1998, %v2019
    %v2022 = vld [vmem:[%s0 + $0x2] sm:$0x3]
    %v2024 = vrot.slane %v1864, 6
    %2025 = vrot.lane.b32.xlu0 %v2024, 64
    %v2026 = vpop.permute.xlu0 %2025
    %v2028 = vsub.f32 %v2021, %v2026
    %v2030 = vrot.slane %v2028, 2
    %2031 = vrot.lane.b32.xlu0 %v2030, 64
    %v2032 = vpop.permute.xlu0 %2031
    %v2034 = vmul.f32 %v2022, %v2032
    %v2035 = vadd.f32 %v1864, %v2034
    %v2036 = vsub.f32 %v2015, %v2003
    %v2038 = vrot.slane %v2036, 2
    %2039 = vrot.lane.b32.xlu0 %v2038, 96
    %v2040 = vpop.permute.xlu0 %2039
    %v2042 = vmul.f32 %v2022, %v2040
    %v2043 = vadd.f32 %v1870, %v2042
    %2045 = vrot.lane.b32.xlu0 %v2021, 64
    %v2046 = vpop.permute.xlu0 %2045
    %2048 = vst.msk [vmem:[#allocation3] sm:$0xc] %vm398, %v2046
    %v2049 = vld [vmem:[#allocation2 + $0x18] sm:$0x30]
    %v2050 = vpack.c.bf16 %v1946, %v1946
    %v2052 = vsel %vm95, %v2050, 0
    %2054 = vmatpush.bf16.msra.mxu0 0
    %2055 = vmatpush.bf16.msra.mxu0 0
    %2056 = vmatpush.bf16.msra.mxu0 0
    %2057 = vmatpush.bf16.msra.mxu0 0
    %2058 = vmatpush.bf16.msra.mxu0 0
    %2059 = vmatpush.bf16.msra.mxu0 0
    %2060 = vmatpush.bf16.msra.mxu0 %v1882
    %2061 = vmatpush.bf16.msra.mxu0 %v1881
    %2062 = vmatmul.bf16.gmra.mxu0 %v2052
    %v2063 = vpop.f32.mrf.mxu0
    %v2064 = vadd.f32 0.0, %v2063
    %v2065 = vpop.f32.mrf.mxu0
    %2066 = vdwg.mxu0
    %v2068 = vrot.slane %v2064, 4
    %v2070 = vadd.f32 %v2049, %v2068
    %v2071 = vxor.u32 %v2070, 2147483648
    %v2072 = vmul.f32 %v2071, 1.442695
    %v2073 = vpow.pop %v2072
    %v2074 = vadd.f32 %v2073, 1.0
    %v2075 = vrcp.pop %v2074
    %v2076 = vmul.f32 %v2074, %v2075
    %v2077 = vsub.f32 1.0, %v2076
    %v2078 = vmul.f32 %v2075, %v2077
    %v2079 = vadd.f32 %v2075, %v2078
    %vm2080 = vweird.f32 %v2074
    %vm2081 = vweird.f32 %v2075
    %vm2082 = vmor %vm2080, %vm2081
    %v2083 = vsel %vm2082, %v2075, %v2079
    %v2084 = vand.u32 2147483647, %v2074
    %vm2085 = vcmp.eq.f32.partialorder %v2084, 8.507059e+37
    %v2086 = vand.u32 %v2074, 2147483648
    %v2087 = vor.u32 1.1754944e-38, %v2086
    %v2088 = vsel %vm2085, %v2087, %v2083
    %v2089 = vmul.f32 1.0, %v2088
    %v2090 = vtanh.pop %v2070
    %v2092 = vrot.slane %v1953, 4
    %2093 = vrot.lane.b32.xlu0 %v2092, 32
    %v2094 = vpop.permute.xlu0 %2093
    %v2096 = vmul.f32 %v2089, %v2094
    %2098 = vrot.lane.b32.xlu0 %v2090, 32
    %v2099 = vpop.permute.xlu0 %2098
    %v2101 = vmul.f32 %v2089, %v2099
    %2103 = vrot.lane.b32.xlu0 %v2101, 32
    %v2104 = vpop.permute.xlu0 %2103
    %v2106 = vadd.f32 %v2096, %v2104
    %v2107 = vtanh.pop %v2106
    %2109 = vrot.lane.b32.xlu0 %v2107, 32
    %v2110 = vpop.permute.xlu0 %2109
    %v2112 = vmul.f32 %v2089, %v2110
    %v2113 = vld [vmem:[%s0 + $0xc] sm:$0x3]
    %v2115 = vrot.slane %v1946, 4
    %2116 = vrot.lane.b32.xlu0 %v2115, 64
    %v2117 = vpop.permute.xlu0 %2116
    %v2119 = vsub.f32 %v2112, %v2117
    %v2121 = vrot.slane %v2119, 4
    %2122 = vrot.lane.b32.xlu0 %v2121, 64
    %v2123 = vpop.permute.xlu0 %2122
    %v2125 = vmul.f32 %v2113, %v2123
    %v2126 = vadd.f32 %v1946, %v2125
    %v2127 = vsub.f32 %v2106, %v2094
    %v2129 = vrot.slane %v2127, 4
    %2130 = vrot.lane.b32.xlu0 %v2129, 96
    %v2131 = vpop.permute.xlu0 %2130
    %v2133 = vmul.f32 %v2113, %v2131
    %v2134 = vadd.f32 %v1953, %v2133
    %2136 = vrot.lane.b32.xlu0 %v2112, 96
    %v2137 = vpop.permute.xlu0 %2136
    %2139 = vst.msk [vmem:[#allocation3 + $0x8] sm:$0x30] %vm490, %v2137
    %v2140 = vld [vmem:[#allocation2] sm:$0x30]
    %v2141 = vpack.c.bf16 %v2035, %v2035
    %v2143 = vsel %vm95, %v2141, 0
    %2145 = vmatpush.bf16.msra.mxu0 0
    %2146 = vmatpush.bf16.msra.mxu0 0
    %2147 = vmatpush.bf16.msra.mxu0 0
    %2148 = vmatpush.bf16.msra.mxu0 0
    %2149 = vmatpush.bf16.msra.mxu0 0
    %2150 = vmatpush.bf16.msra.mxu0 0
    %2151 = vmatpush.bf16.msra.mxu0 %v1804
    %2152 = vmatpush.bf16.msra.mxu0 %v1803
    %2153 = vmatmul.bf16.gmra.mxu0 %v2143
    %v2154 = vpop.f32.mrf.mxu0
    %v2155 = vadd.f32 0.0, %v2154
    %v2156 = vpop.f32.mrf.mxu0
    %2157 = vdwg.mxu0
    %v2159 = vrot.slane %v2155, 4
    %v2161 = vadd.f32 %v2140, %v2159
    %v2162 = vxor.u32 %v2161, 2147483648
    %v2163 = vmul.f32 %v2162, 1.442695
    %v2164 = vpow.pop %v2163
    %v2165 = vadd.f32 %v2164, 1.0
    %v2166 = vrcp.pop %v2165
    %v2167 = vmul.f32 %v2165, %v2166
    %v2168 = vsub.f32 1.0, %v2167
    %v2169 = vmul.f32 %v2166, %v2168
    %v2170 = vadd.f32 %v2166, %v2169
    %vm2171 = vweird.f32 %v2165
    %vm2172 = vweird.f32 %v2166
    %vm2173 = vmor %vm2171, %vm2172
    %v2174 = vsel %vm2173, %v2166, %v2170
    %v2175 = vand.u32 2147483647, %v2165
    %vm2176 = vcmp.eq.f32.partialorder %v2175, 8.507059e+37
    %v2177 = vand.u32 %v2165, 2147483648
    %v2178 = vor.u32 1.1754944e-38, %v2177
    %v2179 = vsel %vm2176, %v2178, %v2174
    %v2180 = vmul.f32 1.0, %v2179
    %v2181 = vtanh.pop %v2161
    %v2183 = vrot.slane %v2043, 4
    %2184 = vrot.lane.b32.xlu0 %v2183, 32
    %v2185 = vpop.permute.xlu0 %2184
    %v2187 = vmul.f32 %v2180, %v2185
    %2189 = vrot.lane.b32.xlu0 %v2181, 32
    %v2190 = vpop.permute.xlu0 %2189
    %v2192 = vmul.f32 %v2180, %v2190
    %2194 = vrot.lane.b32.xlu0 %v2192, 32
    %v2195 = vpop.permute.xlu0 %2194
    %v2197 = vadd.f32 %v2187, %v2195
    %v2198 = vtanh.pop %v2197
    %2200 = vrot.lane.b32.xlu0 %v2198, 32
    %v2201 = vpop.permute.xlu0 %2200
    %v2203 = vmul.f32 %v2180, %v2201
    %v2204 = vld [vmem:[%s0 + $0x4] sm:$0x3]
    %v2206 = vrot.slane %v2035, 4
    %2207 = vrot.lane.b32.xlu0 %v2206, 64
    %v2208 = vpop.permute.xlu0 %2207
    %v2210 = vsub.f32 %v2203, %v2208
    %v2212 = vrot.slane %v2210, 4
    %2213 = vrot.lane.b32.xlu0 %v2212, 64
    %v2214 = vpop.permute.xlu0 %2213
    %v2216 = vmul.f32 %v2204, %v2214
    %v2217 = vadd.f32 %v2035, %v2216
    %v2218 = vsub.f32 %v2197, %v2185
    %v2220 = vrot.slane %v2218, 4
    %2221 = vrot.lane.b32.xlu0 %v2220, 96
    %v2222 = vpop.permute.xlu0 %2221
    %v2224 = vmul.f32 %v2204, %v2222
    %v2225 = vadd.f32 %v2043, %v2224
    %2227 = vrot.lane.b32.xlu0 %v2203, 64
    %v2228 = vpop.permute.xlu0 %2227
    %2230 = vst.msk [vmem:[#allocation3] sm:$0x30] %vm582, %v2228
    %v2231 = vld [vmem:[#allocation2 + $0x18] sm:$0xc]
    %v2232 = vpack.c.bf16 %v2126, %v2126
    %v2234 = vsel %vm95, %v2232, 0
    %2236 = vmatpush.bf16.msra.mxu0 0
    %2237 = vmatpush.bf16.msra.mxu0 0
    %2238 = vmatpush.bf16.msra.mxu0 0
    %2239 = vmatpush.bf16.msra.mxu0 0
    %2240 = vmatpush.bf16.msra.mxu0 0
    %2241 = vmatpush.bf16.msra.mxu0 0
    %2242 = vmatpush.bf16.msra.mxu0 %v1882
    %2243 = vmatpush.bf16.msra.mxu0 %v1881
    %2244 = vmatmul.bf16.gmra.mxu0 %v2234
    %v2245 = vpop.f32.mrf.mxu0
    %v2246 = vadd.f32 0.0, %v2245
    %v2247 = vpop.f32.mrf.mxu0
    %2248 = vdwg.mxu0
    %v2250 = vrot.slane %v2246, 6
    %v2252 = vadd.f32 %v2231, %v2250
    %v2253 = vxor.u32 %v2252, 2147483648
    %v2254 = vmul.f32 %v2253, 1.442695
    %v2255 = vpow.pop %v2254
    %v2256 = vadd.f32 %v2255, 1.0
    %v2257 = vrcp.pop %v2256
    %v2258 = vmul.f32 %v2256, %v2257
    %v2259 = vsub.f32 1.0, %v2258
    %v2260 = vmul.f32 %v2257, %v2259
    %v2261 = vadd.f32 %v2257, %v2260
    %vm2262 = vweird.f32 %v2256
    %vm2263 = vweird.f32 %v2257
    %vm2264 = vmor %vm2262, %vm2263
    %v2265 = vsel %vm2264, %v2257, %v2261
    %v2266 = vand.u32 2147483647, %v2256
    %vm2267 = vcmp.eq.f32.partialorder %v2266, 8.507059e+37
    %v2268 = vand.u32 %v2256, 2147483648
    %v2269 = vor.u32 1.1754944e-38, %v2268
    %v2270 = vsel %vm2267, %v2269, %v2265
    %v2271 = vmul.f32 1.0, %v2270
    %v2272 = vtanh.pop %v2252
    %v2274 = vrot.slane %v2134, 6
    %2275 = vrot.lane.b32.xlu0 %v2274, 32
    %v2276 = vpop.permute.xlu0 %2275
    %v2278 = vmul.f32 %v2271, %v2276
    %2280 = vrot.lane.b32.xlu0 %v2272, 32
    %v2281 = vpop.permute.xlu0 %2280
    %v2283 = vmul.f32 %v2271, %v2281
    %2285 = vrot.lane.b32.xlu0 %v2283, 32
    %v2286 = vpop.permute.xlu0 %2285
    %v2288 = vadd.f32 %v2278, %v2286
    %v2289 = vtanh.pop %v2288
    %2291 = vrot.lane.b32.xlu0 %v2289, 32
    %v2292 = vpop.permute.xlu0 %2291
    %v2294 = vmul.f32 %v2271, %v2292
    %v2295 = vld [vmem:[%s0 + $0xa] sm:$0x3]
    %v2297 = vrot.slane %v2126, 6
    %2298 = vrot.lane.b32.xlu0 %v2297, 64
    %v2299 = vpop.permute.xlu0 %2298
    %v2301 = vsub.f32 %v2294, %v2299
    %v2303 = vrot.slane %v2301, 2
    %2304 = vrot.lane.b32.xlu0 %v2303, 64
    %v2305 = vpop.permute.xlu0 %2304
    %v2307 = vmul.f32 %v2295, %v2305
    %v2308 = vadd.f32 %v2126, %v2307
    %v2309 = vsub.f32 %v2288, %v2276
    %v2311 = vrot.slane %v2309, 2
    %2312 = vrot.lane.b32.xlu0 %v2311, 96
    %v2313 = vpop.permute.xlu0 %2312
    %v2315 = vmul.f32 %v2295, %v2313
    %v2316 = vadd.f32 %v2134, %v2315
    %2318 = vrot.lane.b32.xlu0 %v2294, 96
    %v2319 = vpop.permute.xlu0 %2318
    %2321 = vst.msk [vmem:[#allocation3 + $0x8] sm:$0xc] %vm674, %v2319
    %v2322 = vld [vmem:[#allocation2] sm:$0xc0]
    %v2323 = vpack.c.bf16 %v2217, %v2217
    %v2325 = vsel %vm95, %v2323, 0
    %2327 = vmatpush.bf16.msra.mxu0 0
    %2328 = vmatpush.bf16.msra.mxu0 0
    %2329 = vmatpush.bf16.msra.mxu0 0
    %2330 = vmatpush.bf16.msra.mxu0 0
    %2331 = vmatpush.bf16.msra.mxu0 0
    %2332 = vmatpush.bf16.msra.mxu0 0
    %2333 = vmatpush.bf16.msra.mxu0 %v1804
    %2334 = vmatpush.bf16.msra.mxu0 %v1803
    %2335 = vmatmul.bf16.gmra.mxu0 %v2325
    %v2336 = vpop.f32.mrf.mxu0
    %v2337 = vadd.f32 0.0, %v2336
    %v2338 = vpop.f32.mrf.mxu0
    %2339 = vdwg.mxu0
    %v2341 = vrot.slane %v2337, 2
    %v2343 = vadd.f32 %v2322, %v2341
    %v2344 = vxor.u32 %v2343, 2147483648
    %v2345 = vmul.f32 %v2344, 1.442695
    %v2346 = vpow.pop %v2345
    %v2347 = vadd.f32 %v2346, 1.0
    %v2348 = vrcp.pop %v2347
    %v2349 = vmul.f32 %v2347, %v2348
    %v2350 = vsub.f32 1.0, %v2349
    %v2351 = vmul.f32 %v2348, %v2350
    %v2352 = vadd.f32 %v2348, %v2351
    %vm2353 = vweird.f32 %v2347
    %vm2354 = vweird.f32 %v2348
    %vm2355 = vmor %vm2353, %vm2354
    %v2356 = vsel %vm2355, %v2348, %v2352
    %v2357 = vand.u32 2147483647, %v2347
    %vm2358 = vcmp.eq.f32.partialorder %v2357, 8.507059e+37
    %v2359 = vand.u32 %v2347, 2147483648
    %v2360 = vor.u32 1.1754944e-38, %v2359
    %v2361 = vsel %vm2358, %v2360, %v2356
    %v2362 = vmul.f32 1.0, %v2361
    %v2363 = vtanh.pop %v2343
    %v2365 = vrot.slane %v2225, 2
    %2366 = vrot.lane.b32.xlu0 %v2365, 32
    %v2367 = vpop.permute.xlu0 %2366
    %v2369 = vmul.f32 %v2362, %v2367
    %2371 = vrot.lane.b32.xlu0 %v2363, 32
    %v2372 = vpop.permute.xlu0 %2371
    %v2374 = vmul.f32 %v2362, %v2372
    %2376 = vrot.lane.b32.xlu0 %v2374, 32
    %v2377 = vpop.permute.xlu0 %2376
    %v2379 = vadd.f32 %v2369, %v2377
    %v2380 = vtanh.pop %v2379
    %2382 = vrot.lane.b32.xlu0 %v2380, 32
    %v2383 = vpop.permute.xlu0 %2382
    %v2385 = vmul.f32 %v2362, %v2383
    %v2386 = vld [vmem:[%s0 + $0x6] sm:$0x3]
    %v2388 = vrot.slane %v2217, 2
    %2389 = vrot.lane.b32.xlu0 %v2388, 64
    %v2390 = vpop.permute.xlu0 %2389
    %v2392 = vsub.f32 %v2385, %v2390
    %v2394 = vrot.slane %v2392, 6
    %2395 = vrot.lane.b32.xlu0 %v2394, 64
    %v2396 = vpop.permute.xlu0 %2395
    %v2398 = vmul.f32 %v2386, %v2396
    %v2399 = vadd.f32 %v2217, %v2398
    %v2400 = vsub.f32 %v2379, %v2367
    %v2402 = vrot.slane %v2400, 6
    %2403 = vrot.lane.b32.xlu0 %v2402, 96
    %v2404 = vpop.permute.xlu0 %2403
    %v2406 = vmul.f32 %v2386, %v2404
    %v2407 = vadd.f32 %v2225, %v2406
    %2409 = vrot.lane.b32.xlu0 %v2385, 64
    %v2410 = vpop.permute.xlu0 %2409
    %2412 = vst.msk [vmem:[#allocation3] sm:$0xc0] %vm766, %v2410
    %v2413 = vld [vmem:[#allocation2 + $0x18] sm:$0x3]
    %v2414 = vpack.c.bf16 %v2308, %v2308
    %v2416 = vsel %vm95, %v2414, 0
    %2418 = vmatpush.bf16.msra.mxu0 0
    %2419 = vmatpush.bf16.msra.mxu0 0
    %2420 = vmatpush.bf16.msra.mxu0 0
    %2421 = vmatpush.bf16.msra.mxu0 0
    %2422 = vmatpush.bf16.msra.mxu0 0
    %2423 = vmatpush.bf16.msra.mxu0 0
    %2424 = vmatpush.bf16.msra.mxu0 %v1882
    %2425 = vmatpush.bf16.msra.mxu0 %v1881
    %2426 = vmatmul.bf16.gmra.mxu0 %v2416
    %v2427 = vpop.f32.mrf.mxu0
    %v2428 = vadd.f32 0.0, %v2427
    %v2429 = vpop.f32.mrf.mxu0
    %2430 = vdwg.mxu0
    %v2431 = vadd.f32 %v2413, %v2428
    %v2432 = vxor.u32 %v2431, 2147483648
    %v2433 = vmul.f32 %v2432, 1.442695
    %v2434 = vpow.pop %v2433
    %v2435 = vadd.f32 %v2434, 1.0
    %v2436 = vrcp.pop %v2435
    %v2437 = vmul.f32 %v2435, %v2436
    %v2438 = vsub.f32 1.0, %v2437
    %v2439 = vmul.f32 %v2436, %v2438
    %v2440 = vadd.f32 %v2436, %v2439
    %vm2441 = vweird.f32 %v2435
    %vm2442 = vweird.f32 %v2436
    %vm2443 = vmor %vm2441, %vm2442
    %v2444 = vsel %vm2443, %v2436, %v2440
    %v2445 = vand.u32 2147483647, %v2435
    %vm2446 = vcmp.eq.f32.partialorder %v2445, 8.507059e+37
    %v2447 = vand.u32 %v2435, 2147483648
    %v2448 = vor.u32 1.1754944e-38, %v2447
    %v2449 = vsel %vm2446, %v2448, %v2444
    %v2450 = vmul.f32 1.0, %v2449
    %v2451 = vtanh.pop %v2431
    %2453 = vrot.lane.b32.xlu0 %v2316, 32
    %v2454 = vpop.permute.xlu0 %2453
    %v2456 = vmul.f32 %v2450, %v2454
    %2458 = vrot.lane.b32.xlu0 %v2451, 32
    %v2459 = vpop.permute.xlu0 %2458
    %v2461 = vmul.f32 %v2450, %v2459
    %2463 = vrot.lane.b32.xlu0 %v2461, 32
    %v2464 = vpop.permute.xlu0 %2463
    %v2466 = vadd.f32 %v2456, %v2464
    %v2467 = vtanh.pop %v2466
    %2469 = vrot.lane.b32.xlu0 %v2467, 32
    %v2470 = vpop.permute.xlu0 %2469
    %v2472 = vmul.f32 %v2450, %v2470
    %v2473 = vld [vmem:[%s0 + $0x8] sm:$0x3]
    %2475 = vrot.lane.b32.xlu0 %v2308, 64
    %v2476 = vpop.permute.xlu0 %2475
    %v2478 = vsub.f32 %v2472, %v2476
    %2480 = vrot.lane.b32.xlu0 %v2478, 64
    %v2481 = vpop.permute.xlu0 %2480
    %v2483 = vmul.f32 %v2473, %v2481
    %v2484 = vadd.f32 %v2308, %v2483
    %v2485 = vsub.f32 %v2466, %v2454
    %2487 = vrot.lane.b32.xlu0 %v2485, 96
    %v2488 = vpop.permute.xlu0 %2487
    %v2490 = vmul.f32 %v2473, %v2488
    %v2491 = vadd.f32 %v2316, %v2490
    %2493 = vrot.lane.b32.xlu0 %v2472, 96
    %v2494 = vpop.permute.xlu0 %2493
    %2496 = vst.msk [vmem:[#allocation3 + $0x8] sm:$0x3] %vm851, %v2494
    %v2497 = vld [vmem:[#allocation2 + $0x10] sm:$0x3]
    %v2498 = vpack.c.bf16 %v2399, %v2399
    %v2500 = vsel %vm95, %v2498, 0
    %2502 = vmatpush.bf16.msra.mxu0 0
    %2503 = vmatpush.bf16.msra.mxu0 0
    %2504 = vmatpush.bf16.msra.mxu0 0
    %2505 = vmatpush.bf16.msra.mxu0 0
    %2506 = vmatpush.bf16.msra.mxu0 0
    %2507 = vmatpush.bf16.msra.mxu0 0
    %2508 = vmatpush.bf16.msra.mxu0 %v1804
    %2509 = vmatpush.bf16.msra.mxu0 %v1803
    %2510 = vmatmul.bf16.gmra.mxu0 %v2500
    %v2511 = vpop.f32.mrf.mxu0
    %v2512 = vadd.f32 0.0, %v2511
    %v2513 = vpop.f32.mrf.mxu0
    %2514 = vdwg.mxu0
    %v2515 = vadd.f32 %v2497, %v2512
    %v2516 = vxor.u32 %v2515, 2147483648
    %v2517 = vmul.f32 %v2516, 1.442695
    %v2518 = vpow.pop %v2517
    %v2519 = vadd.f32 %v2518, 1.0
    %v2520 = vrcp.pop %v2519
    %v2521 = vmul.f32 %v2519, %v2520
    %v2522 = vsub.f32 1.0, %v2521
    %v2523 = vmul.f32 %v2520, %v2522
    %v2524 = vadd.f32 %v2520, %v2523
    %vm2525 = vweird.f32 %v2519
    %vm2526 = vweird.f32 %v2520
    %vm2527 = vmor %vm2525, %vm2526
    %v2528 = vsel %vm2527, %v2520, %v2524
    %v2529 = vand.u32 2147483647, %v2519
    %vm2530 = vcmp.eq.f32.partialorder %v2529, 8.507059e+37
    %v2531 = vand.u32 %v2519, 2147483648
    %v2532 = vor.u32 1.1754944e-38, %v2531
    %v2533 = vsel %vm2530, %v2532, %v2528
    %v2534 = vmul.f32 1.0, %v2533
    %v2535 = vtanh.pop %v2515
    %2537 = vrot.lane.b32.xlu0 %v2407, 32
    %v2538 = vpop.permute.xlu0 %2537
    %v2540 = vmul.f32 %v2534, %v2538
    %2542 = vrot.lane.b32.xlu0 %v2535, 32
    %v2543 = vpop.permute.xlu0 %2542
    %v2545 = vmul.f32 %v2534, %v2543
    %2547 = vrot.lane.b32.xlu0 %v2545, 32
    %v2548 = vpop.permute.xlu0 %2547
    %v2550 = vadd.f32 %v2540, %v2548
    %v2551 = vtanh.pop %v2550
    %2553 = vrot.lane.b32.xlu0 %v2551, 32
    %v2554 = vpop.permute.xlu0 %2553
    %v2556 = vmul.f32 %v2534, %v2554
    %v2557 = vld [vmem:[%s0 + $0x8] sm:$0x3]
    %2559 = vrot.lane.b32.xlu0 %v2399, 64
    %v2560 = vpop.permute.xlu0 %2559
    %v2562 = vsub.f32 %v2556, %v2560
    %2564 = vrot.lane.b32.xlu0 %v2562, 64
    %v2565 = vpop.permute.xlu0 %2564
    %v2567 = vmul.f32 %v2557, %v2565
    %v2568 = vadd.f32 %v2399, %v2567
    %v2569 = vsub.f32 %v2550, %v2538
    %2571 = vrot.lane.b32.xlu0 %v2569, 96
    %v2572 = vpop.permute.xlu0 %2571
    %v2574 = vmul.f32 %v2557, %v2572
    %v2575 = vadd.f32 %v2407, %v2574
    %2577 = vrot.lane.b32.xlu0 %v2556, 64
    %v2578 = vpop.permute.xlu0 %2577
    %2580 = vst.msk [vmem:[#allocation3 + $0x8] sm:$0x3] %vm219, %v2578
    %v2581 = vld [vmem:[#allocation2 + $0x8] sm:$0xc0]
    %v2582 = vpack.c.bf16 %v2484, %v2484
    %v2584 = vsel %vm95, %v2582, 0
    %2586 = vmatpush.bf16.msra.mxu0 0
    %2587 = vmatpush.bf16.msra.mxu0 0
    %2588 = vmatpush.bf16.msra.mxu0 0
    %2589 = vmatpush.bf16.msra.mxu0 0
    %2590 = vmatpush.bf16.msra.mxu0 0
    %2591 = vmatpush.bf16.msra.mxu0 0
    %2592 = vmatpush.bf16.msra.mxu0 %v1882
    %2593 = vmatpush.bf16.msra.mxu0 %v1881
    %2594 = vmatmul.bf16.gmra.mxu0 %v2584
    %v2595 = vpop.f32.mrf.mxu0
    %v2596 = vadd.f32 0.0, %v2595
    %v2597 = vpop.f32.mrf.mxu0
    %2598 = vdwg.mxu0
    %v2600 = vrot.slane %v2596, 2
    %v2602 = vadd.f32 %v2581, %v2600
    %v2603 = vxor.u32 %v2602, 2147483648
    %v2604 = vmul.f32 %v2603, 1.442695
    %v2605 = vpow.pop %v2604
    %v2606 = vadd.f32 %v2605, 1.0
    %v2607 = vrcp.pop %v2606
    %v2608 = vmul.f32 %v2606, %v2607
    %v2609 = vsub.f32 1.0, %v2608
    %v2610 = vmul.f32 %v2607, %v2609
    %v2611 = vadd.f32 %v2607, %v2610
    %vm2612 = vweird.f32 %v2606
    %vm2613 = vweird.f32 %v2607
    %vm2614 = vmor %vm2612, %vm2613
    %v2615 = vsel %vm2614, %v2607, %v2611
    %v2616 = vand.u32 2147483647, %v2606
    %vm2617 = vcmp.eq.f32.partialorder %v2616, 8.507059e+37
    %v2618 = vand.u32 %v2606, 2147483648
    %v2619 = vor.u32 1.1754944e-38, %v2618
    %v2620 = vsel %vm2617, %v2619, %v2615
    %v2621 = vmul.f32 1.0, %v2620
    %v2622 = vtanh.pop %v2602
    %v2624 = vrot.slane %v2491, 2
    %2625 = vrot.lane.b32.xlu0 %v2624, 32
    %v2626 = vpop.permute.xlu0 %2625
    %v2628 = vmul.f32 %v2621, %v2626
    %2630 = vrot.lane.b32.xlu0 %v2622, 32
    %v2631 = vpop.permute.xlu0 %2630
    %v2633 = vmul.f32 %v2621, %v2631
    %2635 = vrot.lane.b32.xlu0 %v2633, 32
    %v2636 = vpop.permute.xlu0 %2635
    %v2638 = vadd.f32 %v2628, %v2636
    %v2639 = vtanh.pop %v2638
    %2641 = vrot.lane.b32.xlu0 %v2639, 32
    %v2642 = vpop.permute.xlu0 %2641
    %v2644 = vmul.f32 %v2621, %v2642
    %v2645 = vld [vmem:[%s0 + $0x6] sm:$0x3]
    %v2647 = vrot.slane %v2484, 2
    %2648 = vrot.lane.b32.xlu0 %v2647, 64
    %v2649 = vpop.permute.xlu0 %2648
    %v2651 = vsub.f32 %v2644, %v2649
    %v2653 = vrot.slane %v2651, 6
    %2654 = vrot.lane.b32.xlu0 %v2653, 64
    %v2655 = vpop.permute.xlu0 %2654
    %v2657 = vmul.f32 %v2645, %v2655
    %v2658 = vadd.f32 %v2484, %v2657
    %v2659 = vsub.f32 %v2638, %v2626
    %v2661 = vrot.slane %v2659, 6
    %2662 = vrot.lane.b32.xlu0 %v2661, 96
    %v2663 = vpop.permute.xlu0 %2662
    %v2665 = vmul.f32 %v2645, %v2663
    %v2666 = vadd.f32 %v2491, %v2665
    %2668 = vrot.lane.b32.xlu0 %v2644, 96
    %v2669 = vpop.permute.xlu0 %2668
    %2671 = vst.msk [vmem:[#allocation3] sm:$0xc0] %vm306, %v2669
    %v2672 = vld [vmem:[#allocation2 + $0x10] sm:$0xc]
    %v2673 = vpack.c.bf16 %v2568, %v2568
    %v2675 = vsel %vm95, %v2673, 0
    %2677 = vmatpush.bf16.msra.mxu0 0
    %2678 = vmatpush.bf16.msra.mxu0 0
    %2679 = vmatpush.bf16.msra.mxu0 0
    %2680 = vmatpush.bf16.msra.mxu0 0
    %2681 = vmatpush.bf16.msra.mxu0 0
    %2682 = vmatpush.bf16.msra.mxu0 0
    %2683 = vmatpush.bf16.msra.mxu0 %v1804
    %2684 = vmatpush.bf16.msra.mxu0 %v1803
    %2685 = vmatmul.bf16.gmra.mxu0 %v2675
    %v2686 = vpop.f32.mrf.mxu0
    %v2687 = vadd.f32 0.0, %v2686
    %v2688 = vpop.f32.mrf.mxu0
    %2689 = vdwg.mxu0
    %v2691 = vrot.slane %v2687, 6
    %v2693 = vadd.f32 %v2672, %v2691
    %v2694 = vxor.u32 %v2693, 2147483648
    %v2695 = vmul.f32 %v2694, 1.442695
    %v2696 = vpow.pop %v2695
    %v2697 = vadd.f32 %v2696, 1.0
    %v2698 = vrcp.pop %v2697
    %v2699 = vmul.f32 %v2697, %v2698
    %v2700 = vsub.f32 1.0, %v2699
    %v2701 = vmul.f32 %v2698, %v2700
    %v2702 = vadd.f32 %v2698, %v2701
    %vm2703 = vweird.f32 %v2697
    %vm2704 = vweird.f32 %v2698
    %vm2705 = vmor %vm2703, %vm2704
    %v2706 = vsel %vm2705, %v2698, %v2702
    %v2707 = vand.u32 2147483647, %v2697
    %vm2708 = vcmp.eq.f32.partialorder %v2707, 8.507059e+37
    %v2709 = vand.u32 %v2697, 2147483648
    %v2710 = vor.u32 1.1754944e-38, %v2709
    %v2711 = vsel %vm2708, %v2710, %v2706
    %v2712 = vmul.f32 1.0, %v2711
    %v2713 = vtanh.pop %v2693
    %v2715 = vrot.slane %v2575, 6
    %2716 = vrot.lane.b32.xlu0 %v2715, 32
    %v2717 = vpop.permute.xlu0 %2716
    %v2719 = vmul.f32 %v2712, %v2717
    %2721 = vrot.lane.b32.xlu0 %v2713, 32
    %v2722 = vpop.permute.xlu0 %2721
    %v2724 = vmul.f32 %v2712, %v2722
    %2726 = vrot.lane.b32.xlu0 %v2724, 32
    %v2727 = vpop.permute.xlu0 %2726
    %v2729 = vadd.f32 %v2719, %v2727
    %v2730 = vtanh.pop %v2729
    %2732 = vrot.lane.b32.xlu0 %v2730, 32
    %v2733 = vpop.permute.xlu0 %2732
    %v2735 = vmul.f32 %v2712, %v2733
    %v2736 = vld [vmem:[%s0 + $0xa] sm:$0x3]
    %v2738 = vrot.slane %v2568, 6
    %2739 = vrot.lane.b32.xlu0 %v2738, 64
    %v2740 = vpop.permute.xlu0 %2739
    %v2742 = vsub.f32 %v2735, %v2740
    %v2744 = vrot.slane %v2742, 2
    %2745 = vrot.lane.b32.xlu0 %v2744, 64
    %v2746 = vpop.permute.xlu0 %2745
    %v2748 = vmul.f32 %v2736, %v2746
    %v2749 = vadd.f32 %v2568, %v2748
    %v2750 = vsub.f32 %v2729, %v2717
    %v2752 = vrot.slane %v2750, 2
    %2753 = vrot.lane.b32.xlu0 %v2752, 96
    %v2754 = vpop.permute.xlu0 %2753
    %v2756 = vmul.f32 %v2736, %v2754
    %v2757 = vadd.f32 %v2575, %v2756
    %2759 = vrot.lane.b32.xlu0 %v2735, 64
    %v2760 = vpop.permute.xlu0 %2759
    %2762 = vst.msk [vmem:[#allocation3 + $0x8] sm:$0xc] %vm398, %v2760
    %v2763 = vld [vmem:[#allocation2 + $0x8] sm:$0x30]
    %v2764 = vpack.c.bf16 %v2658, %v2658
    %v2766 = vsel %vm95, %v2764, 0
    %2768 = vmatpush.bf16.msra.mxu0 0
    %2769 = vmatpush.bf16.msra.mxu0 0
    %2770 = vmatpush.bf16.msra.mxu0 0
    %2771 = vmatpush.bf16.msra.mxu0 0
    %2772 = vmatpush.bf16.msra.mxu0 0
    %2773 = vmatpush.bf16.msra.mxu0 0
    %2774 = vmatpush.bf16.msra.mxu0 %v1882
    %2775 = vmatpush.bf16.msra.mxu0 %v1881
    %2776 = vmatmul.bf16.gmra.mxu0 %v2766
    %v2777 = vpop.f32.mrf.mxu0
    %v2778 = vadd.f32 0.0, %v2777
    %v2779 = vpop.f32.mrf.mxu0
    %2780 = vdwg.mxu0
    %v2782 = vrot.slane %v2778, 4
    %v2784 = vadd.f32 %v2763, %v2782
    %v2785 = vxor.u32 %v2784, 2147483648
    %v2786 = vmul.f32 %v2785, 1.442695
    %v2787 = vpow.pop %v2786
    %v2788 = vadd.f32 %v2787, 1.0
    %v2789 = vrcp.pop %v2788
    %v2790 = vmul.f32 %v2788, %v2789
    %v2791 = vsub.f32 1.0, %v2790
    %v2792 = vmul.f32 %v2789, %v2791
    %v2793 = vadd.f32 %v2789, %v2792
    %vm2794 = vweird.f32 %v2788
    %vm2795 = vweird.f32 %v2789
    %vm2796 = vmor %vm2794, %vm2795
    %v2797 = vsel %vm2796, %v2789, %v2793
    %v2798 = vand.u32 2147483647, %v2788
    %vm2799 = vcmp.eq.f32.partialorder %v2798, 8.507059e+37
    %v2800 = vand.u32 %v2788, 2147483648
    %v2801 = vor.u32 1.1754944e-38, %v2800
    %v2802 = vsel %vm2799, %v2801, %v2797
    %v2803 = vmul.f32 1.0, %v2802
    %v2804 = vtanh.pop %v2784
    %v2806 = vrot.slane %v2666, 4
    %2807 = vrot.lane.b32.xlu0 %v2806, 32
    %v2808 = vpop.permute.xlu0 %2807
    %v2810 = vmul.f32 %v2803, %v2808
    %2812 = vrot.lane.b32.xlu0 %v2804, 32
    %v2813 = vpop.permute.xlu0 %2812
    %v2815 = vmul.f32 %v2803, %v2813
    %2817 = vrot.lane.b32.xlu0 %v2815, 32
    %v2818 = vpop.permute.xlu0 %2817
    %v2820 = vadd.f32 %v2810, %v2818
    %v2821 = vtanh.pop %v2820
    %2823 = vrot.lane.b32.xlu0 %v2821, 32
    %v2824 = vpop.permute.xlu0 %2823
    %v2826 = vmul.f32 %v2803, %v2824
    %v2827 = vld [vmem:[%s0 + $0x4] sm:$0x3]
    %v2829 = vrot.slane %v2658, 4
    %2830 = vrot.lane.b32.xlu0 %v2829, 64
    %v2831 = vpop.permute.xlu0 %2830
    %v2833 = vsub.f32 %v2826, %v2831
    %v2835 = vrot.slane %v2833, 4
    %2836 = vrot.lane.b32.xlu0 %v2835, 64
    %v2837 = vpop.permute.xlu0 %2836
    %v2839 = vmul.f32 %v2827, %v2837
    %v2840 = vadd.f32 %v2658, %v2839
    %v2841 = vsub.f32 %v2820, %v2808
    %v2843 = vrot.slane %v2841, 4
    %2844 = vrot.lane.b32.xlu0 %v2843, 96
    %v2845 = vpop.permute.xlu0 %2844
    %v2847 = vmul.f32 %v2827, %v2845
    %v2848 = vadd.f32 %v2666, %v2847
    %2850 = vrot.lane.b32.xlu0 %v2826, 96
    %v2851 = vpop.permute.xlu0 %2850
    %2853 = vst.msk [vmem:[#allocation3] sm:$0x30] %vm490, %v2851
    %v2854 = vld [vmem:[#allocation2 + $0x10] sm:$0x30]
    %v2855 = vpack.c.bf16 %v2749, %v2749
    %v2857 = vsel %vm95, %v2855, 0
    %2859 = vmatpush.bf16.msra.mxu0 0
    %2860 = vmatpush.bf16.msra.mxu0 0
    %2861 = vmatpush.bf16.msra.mxu0 0
    %2862 = vmatpush.bf16.msra.mxu0 0
    %2863 = vmatpush.bf16.msra.mxu0 0
    %2864 = vmatpush.bf16.msra.mxu0 0
    %2865 = vmatpush.bf16.msra.mxu0 %v1804
    %2866 = vmatpush.bf16.msra.mxu0 %v1803
    %2867 = vmatmul.bf16.gmra.mxu0 %v2857
    %v2868 = vpop.f32.mrf.mxu0
    %v2869 = vadd.f32 0.0, %v2868
    %v2870 = vpop.f32.mrf.mxu0
    %2871 = vdwg.mxu0
    %v2873 = vrot.slane %v2869, 4
    %v2875 = vadd.f32 %v2854, %v2873
    %v2876 = vxor.u32 %v2875, 2147483648
    %v2877 = vmul.f32 %v2876, 1.442695
    %v2878 = vpow.pop %v2877
    %v2879 = vadd.f32 %v2878, 1.0
    %v2880 = vrcp.pop %v2879
    %v2881 = vmul.f32 %v2879, %v2880
    %v2882 = vsub.f32 1.0, %v2881
    %v2883 = vmul.f32 %v2880, %v2882
    %v2884 = vadd.f32 %v2880, %v2883
    %vm2885 = vweird.f32 %v2879
    %vm2886 = vweird.f32 %v2880
    %vm2887 = vmor %vm2885, %vm2886
    %v2888 = vsel %vm2887, %v2880, %v2884
    %v2889 = vand.u32 2147483647, %v2879
    %vm2890 = vcmp.eq.f32.partialorder %v2889, 8.507059e+37
    %v2891 = vand.u32 %v2879, 2147483648
    %v2892 = vor.u32 1.1754944e-38, %v2891
    %v2893 = vsel %vm2890, %v2892, %v2888
    %v2894 = vmul.f32 1.0, %v2893
    %v2895 = vtanh.pop %v2875
    %v2897 = vrot.slane %v2757, 4
    %2898 = vrot.lane.b32.xlu0 %v2897, 32
    %v2899 = vpop.permute.xlu0 %2898
    %v2901 = vmul.f32 %v2894, %v2899
    %2903 = vrot.lane.b32.xlu0 %v2895, 32
    %v2904 = vpop.permute.xlu0 %2903
    %v2906 = vmul.f32 %v2894, %v2904
    %2908 = vrot.lane.b32.xlu0 %v2906, 32
    %v2909 = vpop.permute.xlu0 %2908
    %v2911 = vadd.f32 %v2901, %v2909
    %v2912 = vtanh.pop %v2911
    %2914 = vrot.lane.b32.xlu0 %v2912, 32
    %v2915 = vpop.permute.xlu0 %2914
    %v2917 = vmul.f32 %v2894, %v2915
    %v2918 = vld [vmem:[%s0 + $0xc] sm:$0x3]
    %v2920 = vrot.slane %v2749, 4
    %2921 = vrot.lane.b32.xlu0 %v2920, 64
    %v2922 = vpop.permute.xlu0 %2921
    %v2924 = vsub.f32 %v2917, %v2922
    %v2926 = vrot.slane %v2924, 4
    %2927 = vrot.lane.b32.xlu0 %v2926, 64
    %v2928 = vpop.permute.xlu0 %2927
    %v2930 = vmul.f32 %v2918, %v2928
    %v2931 = vadd.f32 %v2749, %v2930
    %v2932 = vsub.f32 %v2911, %v2899
    %v2934 = vrot.slane %v2932, 4
    %2935 = vrot.lane.b32.xlu0 %v2934, 96
    %v2936 = vpop.permute.xlu0 %2935
    %v2938 = vmul.f32 %v2918, %v2936
    %v2939 = vadd.f32 %v2757, %v2938
    %2941 = vrot.lane.b32.xlu0 %v2917, 64
    %v2942 = vpop.permute.xlu0 %2941
    %2944 = vst.msk [vmem:[#allocation3 + $0x8] sm:$0x30] %vm582, %v2942
    %v2945 = vld [vmem:[#allocation2 + $0x8] sm:$0xc]
    %v2946 = vpack.c.bf16 %v2840, %v2840
    %v2948 = vsel %vm95, %v2946, 0
    %2950 = vmatpush.bf16.msra.mxu0 0
    %2951 = vmatpush.bf16.msra.mxu0 0
    %2952 = vmatpush.bf16.msra.mxu0 0
    %2953 = vmatpush.bf16.msra.mxu0 0
    %2954 = vmatpush.bf16.msra.mxu0 0
    %2955 = vmatpush.bf16.msra.mxu0 0
    %2956 = vmatpush.bf16.msra.mxu0 %v1882
    %2957 = vmatpush.bf16.msra.mxu0 %v1881
    %2958 = vmatmul.bf16.gmra.mxu0 %v2948
    %v2959 = vpop.f32.mrf.mxu0
    %v2960 = vadd.f32 0.0, %v2959
    %v2961 = vpop.f32.mrf.mxu0
    %2962 = vdwg.mxu0
    %v2964 = vrot.slane %v2960, 6
    %v2966 = vadd.f32 %v2945, %v2964
    %v2967 = vxor.u32 %v2966, 2147483648
    %v2968 = vmul.f32 %v2967, 1.442695
    %v2969 = vpow.pop %v2968
    %v2970 = vadd.f32 %v2969, 1.0
    %v2971 = vrcp.pop %v2970
    %v2972 = vmul.f32 %v2970, %v2971
    %v2973 = vsub.f32 1.0, %v2972
    %v2974 = vmul.f32 %v2971, %v2973
    %v2975 = vadd.f32 %v2971, %v2974
    %vm2976 = vweird.f32 %v2970
    %vm2977 = vweird.f32 %v2971
    %vm2978 = vmor %vm2976, %vm2977
    %v2979 = vsel %vm2978, %v2971, %v2975
    %v2980 = vand.u32 2147483647, %v2970
    %vm2981 = vcmp.eq.f32.partialorder %v2980, 8.507059e+37
    %v2982 = vand.u32 %v2970, 2147483648
    %v2983 = vor.u32 1.1754944e-38, %v2982
    %v2984 = vsel %vm2981, %v2983, %v2979
    %v2985 = vmul.f32 1.0, %v2984
    %v2986 = vtanh.pop %v2966
    %v2988 = vrot.slane %v2848, 6
    %2989 = vrot.lane.b32.xlu0 %v2988, 32
    %v2990 = vpop.permute.xlu0 %2989
    %v2992 = vmul.f32 %v2985, %v2990
    %2994 = vrot.lane.b32.xlu0 %v2986, 32
    %v2995 = vpop.permute.xlu0 %2994
    %v2997 = vmul.f32 %v2985, %v2995
    %2999 = vrot.lane.b32.xlu0 %v2997, 32
    %v3000 = vpop.permute.xlu0 %2999
    %v3002 = vadd.f32 %v2992, %v3000
    %v3003 = vtanh.pop %v3002
    %3005 = vrot.lane.b32.xlu0 %v3003, 32
    %v3006 = vpop.permute.xlu0 %3005
    %v3008 = vmul.f32 %v2985, %v3006
    %v3009 = vld [vmem:[%s0 + $0x2] sm:$0x3]
    %v3011 = vrot.slane %v2840, 6
    %3012 = vrot.lane.b32.xlu0 %v3011, 64
    %v3013 = vpop.permute.xlu0 %3012
    %v3015 = vsub.f32 %v3008, %v3013
    %v3017 = vrot.slane %v3015, 2
    %3018 = vrot.lane.b32.xlu0 %v3017, 64
    %v3019 = vpop.permute.xlu0 %3018
    %v3021 = vmul.f32 %v3009, %v3019
    %v3022 = vadd.f32 %v2840, %v3021
    %v3023 = vsub.f32 %v3002, %v2990
    %v3025 = vrot.slane %v3023, 2
    %3026 = vrot.lane.b32.xlu0 %v3025, 96
    %v3027 = vpop.permute.xlu0 %3026
    %v3029 = vmul.f32 %v3009, %v3027
    %v3030 = vadd.f32 %v2848, %v3029
    %3032 = vrot.lane.b32.xlu0 %v3008, 96
    %v3033 = vpop.permute.xlu0 %3032
    %3035 = vst.msk [vmem:[#allocation3] sm:$0xc] %vm674, %v3033
    %v3036 = vld [vmem:[#allocation2 + $0x10] sm:$0xc0]
    %v3037 = vpack.c.bf16 %v2931, %v2931
    %v3039 = vsel %vm95, %v3037, 0
    %3041 = vmatpush.bf16.msra.mxu0 0
    %3042 = vmatpush.bf16.msra.mxu0 0
    %3043 = vmatpush.bf16.msra.mxu0 0
    %3044 = vmatpush.bf16.msra.mxu0 0
    %3045 = vmatpush.bf16.msra.mxu0 0
    %3046 = vmatpush.bf16.msra.mxu0 0
    %3047 = vmatpush.bf16.msra.mxu0 %v1804
    %3048 = vmatpush.bf16.msra.mxu0 %v1803
    %3049 = vmatmul.bf16.gmra.mxu0 %v3039
    %v3050 = vpop.f32.mrf.mxu0
    %v3051 = vadd.f32 0.0, %v3050
    %v3052 = vpop.f32.mrf.mxu0
    %3053 = vdwg.mxu0
    %v3055 = vrot.slane %v3051, 2
    %v3057 = vadd.f32 %v3036, %v3055
    %v3058 = vxor.u32 %v3057, 2147483648
    %v3059 = vmul.f32 %v3058, 1.442695
    %v3060 = vpow.pop %v3059
    %v3061 = vadd.f32 %v3060, 1.0
    %v3062 = vrcp.pop %v3061
    %v3063 = vmul.f32 %v3061, %v3062
    %v3064 = vsub.f32 1.0, %v3063
    %v3065 = vmul.f32 %v3062, %v3064
    %v3066 = vadd.f32 %v3062, %v3065
    %vm3067 = vweird.f32 %v3061
    %vm3068 = vweird.f32 %v3062
    %vm3069 = vmor %vm3067, %vm3068
    %v3070 = vsel %vm3069, %v3062, %v3066
    %v3071 = vand.u32 2147483647, %v3061
    %vm3072 = vcmp.eq.f32.partialorder %v3071, 8.507059e+37
    %v3073 = vand.u32 %v3061, 2147483648
    %v3074 = vor.u32 1.1754944e-38, %v3073
    %v3075 = vsel %vm3072, %v3074, %v3070
    %v3076 = vmul.f32 1.0, %v3075
    %v3077 = vtanh.pop %v3057
    %v3079 = vrot.slane %v2939, 2
    %3080 = vrot.lane.b32.xlu0 %v3079, 32
    %v3081 = vpop.permute.xlu0 %3080
    %v3083 = vmul.f32 %v3076, %v3081
    %3085 = vrot.lane.b32.xlu0 %v3077, 32
    %v3086 = vpop.permute.xlu0 %3085
    %v3088 = vmul.f32 %v3076, %v3086
    %3090 = vrot.lane.b32.xlu0 %v3088, 32
    %v3091 = vpop.permute.xlu0 %3090
    %v3093 = vadd.f32 %v3083, %v3091
    %v3094 = vtanh.pop %v3093
    %3096 = vrot.lane.b32.xlu0 %v3094, 32
    %v3097 = vpop.permute.xlu0 %3096
    %v3099 = vmul.f32 %v3076, %v3097
    %v3100 = vld [vmem:[%s0 + $0xe] sm:$0x3]
    %v3102 = vrot.slane %v2931, 2
    %3103 = vrot.lane.b32.xlu0 %v3102, 64
    %v3104 = vpop.permute.xlu0 %3103
    %v3106 = vsub.f32 %v3099, %v3104
    %v3108 = vrot.slane %v3106, 6
    %3109 = vrot.lane.b32.xlu0 %v3108, 64
    %v3110 = vpop.permute.xlu0 %3109
    %v3112 = vmul.f32 %v3100, %v3110
    %v3113 = vadd.f32 %v2931, %v3112
    %v3114 = vsub.f32 %v3093, %v3081
    %v3116 = vrot.slane %v3114, 6
    %3117 = vrot.lane.b32.xlu0 %v3116, 96
    %v3118 = vpop.permute.xlu0 %3117
    %v3120 = vmul.f32 %v3100, %v3118
    %v3121 = vadd.f32 %v2939, %v3120
    %3123 = vrot.lane.b32.xlu0 %v3099, 64
    %v3124 = vpop.permute.xlu0 %3123
    %3126 = vst.msk [vmem:[#allocation3 + $0x8] sm:$0xc0] %vm766, %v3124
    %v3127 = vld [vmem:[#allocation2 + $0x8] sm:$0x3]
    %v3128 = vpack.c.bf16 %v3022, %v3022
    %v3130 = vsel %vm95, %v3128, 0
    %3132 = vmatpush.bf16.msra.mxu0 0
    %3133 = vmatpush.bf16.msra.mxu0 0
    %3134 = vmatpush.bf16.msra.mxu0 0
    %3135 = vmatpush.bf16.msra.mxu0 0
    %3136 = vmatpush.bf16.msra.mxu0 0
    %3137 = vmatpush.bf16.msra.mxu0 0
    %3138 = vmatpush.bf16.msra.mxu0 %v1882
    %3139 = vmatpush.bf16.msra.mxu0 %v1881
    %3140 = vmatmul.bf16.gmra.mxu0 %v3130
    %v3141 = vpop.f32.mrf.mxu0
    %v3142 = vadd.f32 0.0, %v3141
    %v3143 = vpop.f32.mrf.mxu0
    %3144 = vdwg.mxu0
    %v3145 = vadd.f32 %v3127, %v3142
    %v3146 = vxor.u32 %v3145, 2147483648
    %v3147 = vmul.f32 %v3146, 1.442695
    %v3148 = vpow.pop %v3147
    %v3149 = vadd.f32 %v3148, 1.0
    %v3150 = vrcp.pop %v3149
    %v3151 = vmul.f32 %v3149, %v3150
    %v3152 = vsub.f32 1.0, %v3151
    %v3153 = vmul.f32 %v3150, %v3152
    %v3154 = vadd.f32 %v3150, %v3153
    %vm3155 = vweird.f32 %v3149
    %vm3156 = vweird.f32 %v3150
    %vm3157 = vmor %vm3155, %vm3156
    %v3158 = vsel %vm3157, %v3150, %v3154
    %v3159 = vand.u32 2147483647, %v3149
    %vm3160 = vcmp.eq.f32.partialorder %v3159, 8.507059e+37
    %v3161 = vand.u32 %v3149, 2147483648
    %v3162 = vor.u32 1.1754944e-38, %v3161
    %v3163 = vsel %vm3160, %v3162, %v3158
    %v3164 = vmul.f32 1.0, %v3163
    %v3165 = vtanh.pop %v3145
    %3167 = vrot.lane.b32.xlu0 %v3030, 32
    %v3168 = vpop.permute.xlu0 %3167
    %v3170 = vmul.f32 %v3164, %v3168
    %3172 = vrot.lane.b32.xlu0 %v3165, 32
    %v3173 = vpop.permute.xlu0 %3172
    %v3175 = vmul.f32 %v3164, %v3173
    %3177 = vrot.lane.b32.xlu0 %v3175, 32
    %v3178 = vpop.permute.xlu0 %3177
    %v3180 = vadd.f32 %v3170, %v3178
    %v3181 = vtanh.pop %v3180
    %3183 = vrot.lane.b32.xlu0 %v3181, 32
    %v3184 = vpop.permute.xlu0 %3183
    %v3186 = vmul.f32 %v3164, %v3184
    %v3187 = vld [vmem:[%s0] sm:$0x3]
    %3189 = vrot.lane.b32.xlu0 %v3022, 64
    %v3190 = vpop.permute.xlu0 %3189
    %v3192 = vsub.f32 %v3186, %v3190
    %3194 = vrot.lane.b32.xlu0 %v3192, 64
    %v3195 = vpop.permute.xlu0 %3194
    %v3197 = vmul.f32 %v3187, %v3195
    %v3198 = vadd.f32 %v3022, %v3197
    %v3199 = vsub.f32 %v3180, %v3168
    %3201 = vrot.lane.b32.xlu0 %v3199, 96
    %v3202 = vpop.permute.xlu0 %3201
    %v3204 = vmul.f32 %v3187, %v3202
    %v3205 = vadd.f32 %v3030, %v3204
    %3207 = vrot.lane.b32.xlu0 %v3186, 96
    %v3208 = vpop.permute.xlu0 %3207
    %3210 = vst.msk [vmem:[#allocation3] sm:$0x3] %vm851, %v3208
    %3211 = vst.msk [vmem:[#allocation3 + $0x10] sm:$0x3] %vm219, %v3113
    %3213 = vrot.lane.b32.xlu0 %v3198, 32
    %v3214 = vpop.permute.xlu0 %3213
    %3216 = vst.msk [vmem:[#allocation3 + $0x10] sm:$0x3] %vm851, %v3214
    %v3217 = vld [vmem:[#allocation3] sm:$0xff]
    %v3218 = vld [vmem:[#allocation3 + $0x8] sm:$0xff]
    %v3219 = vld [vmem:[#allocation3 + $0x10] sm:$0x3]
    %v3220 = vpack.c.bf16 %v3218, %v3217
    %v3221 = vpack.c.bf16 %v3219, %v3219
    %v3222 = vld [vmem:[%s11] sm:$0xf]
    %v3223 = vld [vmem:[%s11 + $0x4] sm:$0xf]
    %v3224 = vld [vmem:[%s11 + $0x8] sm:$0xf]
    %v3225 = vld [vmem:[%s11 + $0xc] sm:$0xf]
    %v3226 = vld [vmem:[%s11 + $0x10] sm:$0xf]
    %v3227 = vld [vmem:[%s11 + $0x14] sm:$0xf]
    %v3228 = vld [vmem:[%s11 + $0x18] sm:$0xf]
    %v3229 = vld [vmem:[%s11 + $0x1c] sm:$0xf]
    %v3238 = vunpack.c.l.b16 %v3222
    %v3239 = vunpack.c.l.b16 %v3223
    %v3240 = vunpack.c.l.b16 %v3224
    %v3241 = vunpack.c.l.b16 %v3225
    %v3242 = vunpack.c.l.b16 %v3226
    %v3243 = vunpack.c.l.b16 %v3227
    %v3244 = vunpack.c.l.b16 %v3228
    %v3245 = vunpack.c.l.b16 %v3229
    %v3246 = vpack.c.b16 %v3239, %v3238
    %v3247 = vpack.c.b16 %v3241, %v3240
    %v3248 = vpack.c.b16 %v3243, %v3242
    %v3249 = vpack.c.b16 %v3245, %v3244
    %v3255 = vsel %vm1610, %v3220, 0
    %v3258 = vsel %vm1610, %v3221, 0
    %3260 = vmatpush.bf16.msra.mxu0 0
    %3261 = vmatpush.bf16.msra.mxu0 0
    %3262 = vmatpush.bf16.msra.mxu0 0
    %3263 = vmatpush.bf16.msra.mxu0 0
    %3264 = vmatpush.bf16.msra.mxu0 %v3249
    %3265 = vmatpush.bf16.msra.mxu0 %v3248
    %3266 = vmatpush.bf16.msra.mxu0 %v3247
    %3267 = vmatpush.bf16.msra.mxu0 %v3246
    %3268 = vmatmul.bf16.gmra.mxu0 %v3255
    %v3269 = vpop.f32.mrf.mxu0
    %v3270 = vadd.f32 0.0, %v3269
    %v3271 = vpop.f32.mrf.mxu0
    %v3272 = vadd.f32 0.0, %v3271
    %3273 = vmatmul.bf16.gmra.mxu0 %v3258
    %v3274 = vpop.f32.mrf.mxu0
    %v3275 = vadd.f32 0.0, %v3274
    %v3276 = vpop.f32.mrf.mxu0
    %3277 = vdwg.mxu0
    %v3278 = vld [vmem:[%s0] sm:$0xff]
    %v3279 = vld [vmem:[%s0 + $0x8] sm:$0xff]
    %3281 = vset.pattern.permute.xlu0 0
    %3282 = vperm.xlu0 %3281, %v3278
    %v3283 = vpop.permute.xlu0 %3282
    %3286 = vset.pattern.permute.xlu0 0
    %3287 = vperm.xlu0 %3286, %v3279
    %v3288 = vpop.permute.xlu0 %3287
    %v3290 = vmul.f32 %v3270, %v3283
    %v3291 = vmul.f32 %v3272, %v3288
    %3292 = vst.msk [vmem:[%s14] sm:$0xff] %vm95, %v3290
    %3293 = vst.msk [vmem:[%s14 + $0x8] sm:$0xff] %vm95, %v3291
    %s3294 = scalar_lea.vmem [#allocation5], 2
    %3295 = vst.msk [vmem:[%s3294] sm:$0x3] %vm219, %v3275
    %v3296 = vpack.c.bf16 %v3121, %v3121
    %v3298 = vsel %vm95, %v3296, 0
    %3300 = vmatpush.bf16.msra.mxu0 0
    %3301 = vmatpush.bf16.msra.mxu0 0
    %3302 = vmatpush.bf16.msra.mxu0 0
    %3303 = vmatpush.bf16.msra.mxu0 0
    %3304 = vmatpush.bf16.msra.mxu0 0
    %3305 = vmatpush.bf16.msra.mxu0 0
    %3306 = vmatpush.bf16.msra.mxu0 %v1668
    %3307 = vmatpush.bf16.msra.mxu0 %v1667
    %3308 = vmatmul.bf16.gmra.mxu0 %v3298
    %v3309 = vpop.f32.mrf.mxu0
    %v3310 = vadd.f32 %v1657, %v3309
    %v3311 = vpop.f32.mrf.mxu0
    %3312 = vdwg.mxu0
    %v3313 = vmax.f32 %v3310, 0.0
    %s3314 = scalar_lea.vmem [#allocation7], 2
    %3315 = vst.msk [vmem:[%s3314] sm:$0x3] %vm1688, %v3313
    %v3316 = vpack.c.bf16 %v3205, %v3205
    %v3318 = vsel %vm95, %v3316, 0
    %3320 = vmatpush.bf16.msra.mxu0 0
    %3321 = vmatpush.bf16.msra.mxu0 0
    %3322 = vmatpush.bf16.msra.mxu0 0
    %3323 = vmatpush.bf16.msra.mxu0 0
    %3324 = vmatpush.bf16.msra.mxu0 0
    %3325 = vmatpush.bf16.msra.mxu0 0
    %3326 = vmatpush.bf16.msra.mxu0 %v1668
    %3327 = vmatpush.bf16.msra.mxu0 %v1667
    %3328 = vmatmul.bf16.gmra.mxu0 %v3318
    %v3329 = vpop.f32.mrf.mxu0
    %v3330 = vadd.f32 %v1657, %v3329
    %v3331 = vpop.f32.mrf.mxu0
    %3332 = vdwg.mxu0
    %v3333 = vmax.f32 %v3330, 0.0
    %3335 = vrot.lane.b32.xlu0 %v3333, 16
    %v3336 = vpop.permute.xlu0 %3335
    %3338 = vst.msk [vmem:[%s3314] sm:$0x3] %vm1712, %v3336
    // Predicated region
    $region58: #{encoder1_forward.1} parent=1 // pred_check
      _
    $region59: #{encoder1_forward.1} parent=1 // pred_check_branch
      %3340 = sbr.rel (0) target = $region61
    $region60: #{encoder1_forward.1} parent=1 // pred_region
      _
    $region61: #{encoder1_forward.1} parent=1 // pred_fallthru
      _
    // Predicated region
    $region62: #{encoder1_forward.1} parent=1 // pred_check
      _
    $region63: #{encoder1_forward.1} parent=1 // pred_check_branch
      %3342 = sbr.rel (0) target = $region65
    $region64: #{encoder1_forward.1} parent=1 // pred_region
      %3344 = vsyncadd [#allocation6], 0
      %s3345 = sshll.u32 [#allocation5], 4
      %s3346 = int_to_ptr.vmem [resolvable:$true] %s3345
      %s3347 = sshll.u32 %s15, 4
      %s3348 = int_to_ptr.hbm [resolvable:$true] %s3347
      %3353 = dma.vmem_to_hbm [thread:$0]  %s3346, 64, %s3348, [#allocation6], 32, 32, 2
    $region65: #{encoder1_forward.1} parent=1 // pred_fallthru
      _
    // Predicated region
    $region66: #{encoder1_forward.1} parent=1 // pred_check
      _
    $region67: #{encoder1_forward.1} parent=1 // pred_check_branch
      %3355 = sbr.rel (0) target = $region69
    $region68: #{encoder1_forward.1} parent=1 // pred_region
      %3357 = vsyncadd [#allocation8], 0
      %s3358 = sshll.u32 [#allocation7], 4
      %s3359 = int_to_ptr.vmem [resolvable:$true] %s3358
      %s3360 = sshll.u32 %s16, 4
      %s3361 = int_to_ptr.hbm [resolvable:$true] %s3360
      %3366 = dma.vmem_to_hbm [thread:$0]  %s3359, 64, %s3361, [#allocation8], 32, 32, 2
    $region69: #{encoder1_forward.1} parent=1 // pred_fallthru
      _
    // Predicated region
    $region70: #{encoder1_forward.1} parent=1 // pred_check
      _
    $region71: #{encoder1_forward.1} parent=1 // pred_check_branch
      %3368 = sbr.rel (0) target = $region73
    $region72: #{encoder1_forward.1} parent=1 // pred_region
      _
    $region73: #{encoder1_forward.1} parent=1 // pred_fallthru
      _
    // Predicated region
    $region74: #{encoder1_forward.1} parent=1 // pred_check
      _
    $region75: #{encoder1_forward.1} parent=1 // pred_check_branch
      %3370 = sbr.rel (0) target = $region77
    $region76: #{encoder1_forward.1} parent=1 // pred_region
      %3372 = dma.done [#allocation6], 64
    $region77: #{encoder1_forward.1} parent=1 // pred_fallthru
      _
    // Predicated region
    $region78: #{encoder1_forward.1} parent=1 // pred_check
      _
    $region79: #{encoder1_forward.1} parent=1 // pred_check_branch
      %3374 = sbr.rel (0) target = $region81
    $region80: #{encoder1_forward.1} parent=1 // pred_region
      %3376 = dma.done [#allocation8], 64
    $region81: #{encoder1_forward.1} parent=1 // pred_fallthru
      _
    %3377 = vsyncpa [#allocation6], 1
    %3378 = vsyncpa [#allocation8], 1

</llo_original>
